<compile_context>
chip_gen: v7x
topology: tpu7x:2x2x1
jax: 0.10.0
libtpu: 0.0.40
codegen_flags: <defaults>
</compile_context>

<pallas_src>
import functools

import jax
import jax.numpy as jnp
from jax import lax
from jax.experimental import pallas as pl
from jax.experimental.pallas import tpu as pltpu

TB = 256                      # batch tile (lane axis); sweep 128-512, 128-256 on v5e
MAX_RESIDENT_ENTITIES = 4096  # past this the one-hot gather is VALU/vreg bound


# ----------------------------------------------------------------------------
# Kernel
# ----------------------------------------------------------------------------
def linear_cf_kernel(idx_ref,    # VMEM (2, TB)    int32  row0=user ids, row1=item ids
                     uembT_ref,  # VMEM (K+1, U)   f32    user table^T, row K = w_u . u
                     iembT_ref,  # VMEM (K+1, I)   f32    item table^T, row K = w_i . i
                     b_ref,      # VMEM (1, 1)     f32    linear bias
                     out_ref,    # VMEM (1, TB)    f32    lane-dense score row
                     ueT_ref,    # VMEM (K, TB)    f32    gathered user embeds (T)
                     ieT_ref,    # VMEM (K, TB)    f32    gathered item embeds (T)
                     *, precision):
    K = ueT_ref.shape[0]
    U = uembT_ref.shape[1]
    I = iembT_ref.shape[1]
    tb = idx_ref.shape[1]

    uid = idx_ref[0:1, :]   # (1, TB) int32, lane layout
    iid = idx_ref[1:2, :]   # (1, TB) int32

    # One-hot selection matrices, built on the VPU (no cross-lane ops).
    oh_u = (lax.broadcasted_iota(jnp.int32, (U, tb), 0) == uid).astype(jnp.float32)
    oh_i = (lax.broadcasted_iota(jnp.int32, (I, tb), 0) == iid).astype(jnp.float32)

    # Gather + fused linear on the MXU: (K+1, U) @ (U, TB) -> (K+1, TB).
    # Rows 0..K-1 are the gathered embeddings, row K is this half's score.
    gu = jnp.dot(uembT_ref[...], oh_u,
                 preferred_element_type=jnp.float32, precision=precision)
    gi = jnp.dot(iembT_ref[...], oh_i,
                 preferred_element_type=jnp.float32, precision=precision)

    ueT_ref[...] = gu[:K, :]
    ieT_ref[...] = gi[:K, :]
    out_ref[...] = gu[K:K + 1, :] + gi[K:K + 1, :] + b_ref[...]


# ----------------------------------------------------------------------------
# pallas_call construction
# ----------------------------------------------------------------------------
def _build_linear_cf_call(nt, tb, K, U, I, vmem_limit, *,
                          single_buffer_tables, precision):
    Bp = nt * tb
    table_mode = ({"pipeline_mode": pl.Buffered(buffer_count=1)}
                  if single_buffer_tables else {})
    kernel = functools.partial(linear_cf_kernel, precision=precision)
    return pl.pallas_call(
        kernel,
        out_shape=(jax.ShapeDtypeStruct((1, Bp), jnp.float32),   # scores (lane-blocked)
                   jax.ShapeDtypeStruct((K, Bp), jnp.float32),   # user embeds^T
                   jax.ShapeDtypeStruct((K, Bp), jnp.float32)),  # item embeds^T
        grid=(nt,),
        in_specs=[
            pl.BlockSpec((2, tb), lambda i: (0, i)),                     # ids, per tile
            pl.BlockSpec((K + 1, U), lambda i: (0, 0), **table_mode),    # user table (resident)
            pl.BlockSpec((K + 1, I), lambda i: (0, 0), **table_mode),    # item table (resident)
            pl.BlockSpec((1, 1), lambda i: (0, 0)),                      # bias
        ],
        out_specs=[
            pl.BlockSpec((1, tb), lambda i: (0, i)),   # lane-dense score chunk
            pl.BlockSpec((K, tb), lambda i: (0, i)),   # user embeds (transposed)
            pl.BlockSpec((K, tb), lambda i: (0, i)),   # item embeds (transposed)
        ],
        # Independent batch tiles: "parallel" lets megacore chips (v7x) split the
        # grid across TensorCores (pltpu.CORE_PARALLEL is an alternative there).
        compiler_params=pltpu.CompilerParams(
            dimension_semantics=("parallel",),
            vmem_limit_bytes=vmem_limit),
    )


# Preferred -> fallback feature configurations (first one that this JAX/Mosaic
# build accepts is cached and reused).
_CONFIGS = (
    dict(single_buffer_tables=True, precision=lax.Precision.HIGHEST),
    dict(single_buffer_tables=False, precision=lax.Precision.HIGHEST),
    dict(single_buffer_tables=False, precision=None),
)
_active_config = None


def _vmem_capacity_bytes():
    try:
        return int(getattr(pltpu.get_tpu_info(), "vmem_capacity_bytes", 64 << 20))
    except Exception:
        return 64 << 20   # conservative: v7x per-TC


# ----------------------------------------------------------------------------
# Parameter preparation (hoisted out of the per-call forward path)
# ----------------------------------------------------------------------------
def prepare_linear_cf_params(user_emb, item_emb, weight, bias):
    """One-time layout work: transposed tables with the fused score row appended."""
    U, K = user_emb.shape
    I = item_emb.shape[0]
    ue = user_emb.astype(jnp.float32)
    ie = item_emb.astype(jnp.float32)
    w = weight.astype(jnp.float32).reshape(2 * K)
    wu, wi = w[:K], w[K:]
    # Per-entity score contribution (elementwise f32 -> not silently bf16).
    s_u = jnp.sum(ue * wu[None, :], axis=1)            # (U,)
    s_i = jnp.sum(ie * wi[None, :], axis=1)            # (I,)
    uembT_aug = jnp.concatenate([ue.T, s_u[None, :]], axis=0)   # (K+1, U)
    iembT_aug = jnp.concatenate([ie.T, s_i[None, :]], axis=0)   # (K+1, I)
    b2 = bias.astype(jnp.float32).reshape(1, 1)
    return {"uembT_aug": uembT_aug, "iembT_aug": iembT_aug, "bias": b2,
            "embedding_k": K, "num_users": U, "num_items": I}


# ----------------------------------------------------------------------------
# Forward
# ----------------------------------------------------------------------------
def linear_cf_forward(x_idx, params, *, tb=TB, transpose_outputs=True):
    """Pallas implementation of LinearCF.forward.

    x_idx: (B, 2) int [user_idx, item_idx]; params from prepare_linear_cf_params.
    Returns (out (B,1), user_embed, item_embed); embeddings are (B,K) when
    transpose_outputs=True, else (K,B) (saves one XLA relayout per table).
    """
    global _active_config
    uembT_aug = params["uembT_aug"]
    iembT_aug = params["iembT_aug"]
    b2 = params["bias"]
    K = params["embedding_k"]
    U = params["num_users"]
    I = params["num_items"]

    B = x_idx.shape[0]
    nt = pl.cdiv(B, tb)
    Bp = nt * tb

    # Lane-major (2, Bp) indices; padded columns index table row 0, sliced off below.
    idx = jnp.pad(x_idx.astype(jnp.int32).T, ((0, 0), (0, Bp - B)))

    # --- generation-aware residency / size guard --------------------------------
    budget = _vmem_capacity_bytes()
    table_bytes = 4 * (uembT_aug.size + iembT_aug.size)
    if max(U, I) > MAX_RESIDENT_ENTITIES or 2 * table_bytes > budget // 2:
        # TODO(synk): implement memory_space=pl.ANY tables + pltpu.make_async_copy
        # per-row DMA gather for tables too large for resident one-hot gather.
        raise NotImplementedError("LinearCF tables too large for resident one-hot gather")

    # Footprint estimate (worst case: tables double-buffered) -> only raise the
    # scoped-VMEM limit when actually needed, capped below physical capacity.
    est = 2 * table_bytes + 2 * (2 * tb * 4) + 2 * ((1 + 2 * K) * tb * 4) + 2 * 4
    vmem_limit = None
    if est > (12 << 20):
        vmem_limit = min(est + (8 << 20), (3 * budget) // 4)

    # --- run, with graceful fallback for optional Mosaic features ----------------
    configs = (_active_config,) if _active_config is not None else _CONFIGS
    last_err = None
    result = None
    for cfg in configs:
        try:
            call = _build_linear_cf_call(nt, tb, K, U, I, vmem_limit, **cfg)
            result = call(idx, uembT_aug, iembT_aug, b2)
            _active_config = cfg
            break
        except Exception as e:   # unsupported Buffered(1)/precision on this build
            last_err = e
    if result is None:
        raise last_err

    out_row, ueT, ieT = result
    out = out_row.reshape(Bp, 1)[:B]
    if transpose_outputs:
        return out, ueT[:, :B].T, ieT[:, :B].T
    return out, ueT[:, :B], ieT[:, :B]


# ----------------------------------------------------------------------------
# Demo / self-test
# ----------------------------------------------------------------------------
if __name__ == "__main__":
    num_users, num_items, embedding_k = 32, 48, 8

    key = jax.random.PRNGKey(0)
    k_u, k_i, k_w, k_b = jax.random.split(key, 4)

    # nn.Embedding init: N(0, 1); nn.Linear init: U(-1/sqrt(fan_in), +)
    user_emb = jax.random.normal(k_u, (num_users, embedding_k), jnp.float32)
    item_emb = jax.random.normal(k_i, (num_items, embedding_k), jnp.float32)
    bound = 1.0 / jnp.sqrt(2.0 * embedding_k)
    weight = jax.random.uniform(k_w, (1, 2 * embedding_k), jnp.float32, -bound, bound)
    bias = jax.random.uniform(k_b, (1,), jnp.float32, -bound, bound)

    params = prepare_linear_cf_params(user_emb, item_emb, weight, bias)

    # batch=8 -> single tile; batch=600 -> 3 tiles (exercises the multi-tile
    # grid and the non-multiple-of-TB padding path).
    for batch in (8, 600):
        kx1, kx2 = jax.random.split(jax.random.fold_in(key, batch))
        u_idx = jax.random.randint(kx1, (batch,), 0, num_users, jnp.int32)
        i_idx = jax.random.randint(kx2, (batch,), 0, num_items, jnp.int32)
        x = jnp.stack([u_idx, i_idx], axis=1)          # (B, 2)

        out, ue, ie = linear_cf_forward(x, params)
        jax.block_until_ready((out, ue, ie))

        # Pure-JAX reference (same semantics as the PyTorch forward).
        ue_ref = user_emb[u_idx]
        ie_ref = item_emb[i_idx]
        z_ref = jnp.concatenate([ue_ref, ie_ref], axis=1)
        out_ref = z_ref @ weight.T + bias

        assert out.shape == (batch, 1)
        assert ue.shape == (batch, embedding_k) and ie.shape == (batch, embedding_k)
        assert jnp.allclose(ue, ue_ref, rtol=1e-2, atol=1e-3)
        assert jnp.allclose(ie, ie_ref, rtol=1e-2, atol=1e-3)
        assert jnp.allclose(out, out_ref, rtol=1e-2, atol=1e-2)

    print("KERNEL_OK")
</pallas_src>

<mosaic_0001>
module attributes {stable_mosaic.version = 11 : i64} {
  func.func @linear_cf_kernel(%arg0: i32, %arg1: memref<2x256xi32, #tpu.memory_space<vmem>>, %arg2: memref<9x32xf32, #tpu.memory_space<vmem>>, %arg3: memref<9x48xf32, #tpu.memory_space<vmem>>, %arg4: memref<1x1xf32, #tpu.memory_space<vmem>>, %arg5: memref<1x256xf32, #tpu.memory_space<vmem>>, %arg6: memref<8x256xf32, #tpu.memory_space<vmem>>, %arg7: memref<8x256xf32, #tpu.memory_space<vmem>>) attributes {dimension_semantics = [#tpu.dimension_semantics<parallel>], iteration_bounds = array<i64: 1>, scalar_prefetch = 0 : i64, scratch_operands = 0 : i64, tpu.core_type = #tpu.core_type<tc>, window_params = [{transform_indices = @transform_0, window_bounds = array<i64: 2, 256>}, {pipeline_mode = #tpu.pipeline_mode<synchronous>, transform_indices = @transform_1, window_bounds = array<i64: 9, 32>}, {pipeline_mode = #tpu.pipeline_mode<synchronous>, transform_indices = @transform_2, window_bounds = array<i64: 9, 48>}, {pipeline_mode = #tpu.pipeline_mode<synchronous>, transform_indices = @transform_3, window_bounds = array<i64: 1, 1>}, {transform_indices = @transform_4, window_bounds = array<i64: 1, 256>}, {transform_indices = @transform_5, window_bounds = array<i64: 8, 256>}, {transform_indices = @transform_6, window_bounds = array<i64: 8, 256>}]} {
    %c0 = arith.constant 0 : index
    %c0_0 = arith.constant 0 : index
    %0 = vector.load %arg1[%c0, %c0_0] : memref<2x256xi32, #tpu.memory_space<vmem>>, vector<1x256xi32>
    %c1 = arith.constant 1 : index
    %c0_1 = arith.constant 0 : index
    %1 = vector.load %arg1[%c1, %c0_1] : memref<2x256xi32, #tpu.memory_space<vmem>>, vector<1x256xi32>
    %2 = tpu.iota {dimensions = array<i32: 0>} : vector<32x256xi32>
    %3 = vector.broadcast %0 : vector<1x256xi32> to vector<32x256xi32>
    %4 = arith.cmpi eq, %2, %3 : vector<32x256xi32>
    %5 = arith.extui %4 : vector<32x256xi1> to vector<32x256xi32>
    %6 = arith.sitofp %5 : vector<32x256xi32> to vector<32x256xf32>
    %7 = tpu.iota {dimensions = array<i32: 0>} : vector<48x256xi32>
    %8 = vector.broadcast %1 : vector<1x256xi32> to vector<48x256xi32>
    %9 = arith.cmpi eq, %7, %8 : vector<48x256xi32>
    %10 = arith.extui %9 : vector<48x256xi1> to vector<48x256xi32>
    %11 = arith.sitofp %10 : vector<48x256xi32> to vector<48x256xf32>
    %c0_2 = arith.constant 0 : index
    %c0_3 = arith.constant 0 : index
    %12 = vector.load %arg2[%c0_2, %c0_3] : memref<9x32xf32, #tpu.memory_space<vmem>>, vector<9x32xf32>
    %cst = arith.constant dense<0.000000e+00> : vector<9x256xf32>
    %13 = tpu.matmul %12, %6, %cst {dimension_numbers = #tpu.dot_dimension_numbers<[1], [0], [0], [1], [0, 0, 1, 1], [], []>, precision = #tpu.contract_precision<fp32>} : vector<9x32xf32>, vector<32x256xf32>, vector<9x256xf32> -> vector<9x256xf32>
    %c0_4 = arith.constant 0 : index
    %c0_5 = arith.constant 0 : index
    %14 = vector.load %arg3[%c0_4, %c0_5] : memref<9x48xf32, #tpu.memory_space<vmem>>, vector<9x48xf32>
    %cst_6 = arith.constant dense<0.000000e+00> : vector<9x256xf32>
    %15 = tpu.matmul %14, %11, %cst_6 {dimension_numbers = #tpu.dot_dimension_numbers<[1], [0], [0], [1], [0, 0, 1, 1], [], []>, precision = #tpu.contract_precision<fp32>} : vector<9x48xf32>, vector<48x256xf32>, vector<9x256xf32> -> vector<9x256xf32>
    %16 = vector.extract_strided_slice %13 {offsets = [0, 0], sizes = [8, 256], strides = [1, 1]} : vector<9x256xf32> to vector<8x256xf32>
    %c0_7 = arith.constant 0 : index
    %c0_8 = arith.constant 0 : index
    %17 = vector.load %arg6[%c0_7, %c0_8] : memref<8x256xf32, #tpu.memory_space<vmem>>, vector<8x256xf32>
    tpu.vector_store %arg6[%c0_7, %c0_8], %16 {strides = array<i32>} : memref<8x256xf32, #tpu.memory_space<vmem>>, vector<8x256xf32>,
    %18 = vector.extract_strided_slice %15 {offsets = [0, 0], sizes = [8, 256], strides = [1, 1]} : vector<9x256xf32> to vector<8x256xf32>
    %c0_9 = arith.constant 0 : index
    %c0_10 = arith.constant 0 : index
    %19 = vector.load %arg7[%c0_9, %c0_10] : memref<8x256xf32, #tpu.memory_space<vmem>>, vector<8x256xf32>
    tpu.vector_store %arg7[%c0_9, %c0_10], %18 {strides = array<i32>} : memref<8x256xf32, #tpu.memory_space<vmem>>, vector<8x256xf32>,
    %20 = vector.extract_strided_slice %13 {offsets = [8, 0], sizes = [1, 256], strides = [1, 1]} : vector<9x256xf32> to vector<1x256xf32>
    %21 = vector.extract_strided_slice %15 {offsets = [8, 0], sizes = [1, 256], strides = [1, 1]} : vector<9x256xf32> to vector<1x256xf32>
    %22 = arith.addf %20, %21 : vector<1x256xf32>
    %c0_11 = arith.constant 0 : index
    %c0_12 = arith.constant 0 : index
    %23 = vector.load %arg4[%c0_11, %c0_12] : memref<1x1xf32, #tpu.memory_space<vmem>>, vector<1x1xf32>
    %24 = vector.broadcast %23 : vector<1x1xf32> to vector<1x256xf32>
    %25 = arith.addf %22, %24 : vector<1x256xf32>
    %c0_13 = arith.constant 0 : index
    %c0_14 = arith.constant 0 : index
    %26 = vector.load %arg5[%c0_13, %c0_14] : memref<1x256xf32, #tpu.memory_space<vmem>>, vector<1x256xf32>
    tpu.vector_store %arg5[%c0_13, %c0_14], %25 {strides = array<i32>} : memref<1x256xf32, #tpu.memory_space<vmem>>, vector<1x256xf32>,
    return
  }
  func.func @transform_0(%arg0: i32) -> (i32, i32) {
    %c0_i32 = arith.constant 0 : i32
    %c0_i32_0 = arith.constant 0 : i32
    return %c0_i32, %arg0 : i32, i32
  }
  func.func @transform_1(%arg0: i32) -> (i32, i32) {
    %c0_i32 = arith.constant 0 : i32
    %c0_i32_0 = arith.constant 0 : i32
    %c0_i32_1 = arith.constant 0 : i32
    return %c0_i32, %c0_i32_0 : i32, i32
  }
  func.func @transform_2(%arg0: i32) -> (i32, i32) {
    %c0_i32 = arith.constant 0 : i32
    %c0_i32_0 = arith.constant 0 : i32
    %c0_i32_1 = arith.constant 0 : i32
    return %c0_i32, %c0_i32_0 : i32, i32
  }
  func.func @transform_3(%arg0: i32) -> (i32, i32) {
    %c0_i32 = arith.constant 0 : i32
    %c0_i32_0 = arith.constant 0 : i32
    %c0_i32_1 = arith.constant 0 : i32
    return %c0_i32, %c0_i32_0 : i32, i32
  }
  func.func @transform_4(%arg0: i32) -> (i32, i32) {
    %c0_i32 = arith.constant 0 : i32
    %c0_i32_0 = arith.constant 0 : i32
    return %c0_i32, %arg0 : i32, i32
  }
  func.func @transform_5(%arg0: i32) -> (i32, i32) {
    %c0_i32 = arith.constant 0 : i32
    %c0_i32_0 = arith.constant 0 : i32
    return %c0_i32, %arg0 : i32, i32
  }
  func.func @transform_6(%arg0: i32) -> (i32, i32) {
    %c0_i32 = arith.constant 0 : i32
    %c0_i32_0 = arith.constant 0 : i32
    return %c0_i32, %arg0 : i32, i32
  }
}

module attributes {stable_mosaic.version = 11 : i64} {
  func.func @linear_cf_kernel(%arg0: i32, %arg1: memref<2x256xi32, #tpu.memory_space<vmem>>, %arg2: memref<9x32xf32, #tpu.memory_space<vmem>>, %arg3: memref<9x48xf32, #tpu.memory_space<vmem>>, %arg4: memref<1x1xf32, #tpu.memory_space<vmem>>, %arg5: memref<1x256xf32, #tpu.memory_space<vmem>>, %arg6: memref<8x256xf32, #tpu.memory_space<vmem>>, %arg7: memref<8x256xf32, #tpu.memory_space<vmem>>) attributes {dimension_semantics = [#tpu.dimension_semantics<parallel>], iteration_bounds = array<i64: 1>, scalar_prefetch = 0 : i64, scratch_operands = 0 : i64, tpu.core_type = #tpu.core_type<tc>, window_params = [{transform_indices = @transform_0, window_bounds = array<i64: 2, 256>}, {pipeline_mode = #tpu.pipeline_mode<synchronous>, transform_indices = @transform_1, window_bounds = array<i64: 9, 32>}, {pipeline_mode = #tpu.pipeline_mode<synchronous>, transform_indices = @transform_2, window_bounds = array<i64: 9, 48>}, {pipeline_mode = #tpu.pipeline_mode<synchronous>, transform_indices = @transform_3, window_bounds = array<i64: 1, 1>}, {transform_indices = @transform_4, window_bounds = array<i64: 1, 256>}, {transform_indices = @transform_5, window_bounds = array<i64: 8, 256>}, {transform_indices = @transform_6, window_bounds = array<i64: 8, 256>}]} {
    %c0 = arith.constant 0 : index
    %c0_0 = arith.constant 0 : index
    %0 = vector.load %arg1[%c0, %c0_0] : memref<2x256xi32, #tpu.memory_space<vmem>>, vector<1x256xi32>
    %c1 = arith.constant 1 : index
    %c0_1 = arith.constant 0 : index
    %1 = vector.load %arg1[%c1, %c0_1] : memref<2x256xi32, #tpu.memory_space<vmem>>, vector<1x256xi32>
    %2 = tpu.iota {dimensions = array<i32: 0>} : vector<32x256xi32>
    %3 = vector.broadcast %0 : vector<1x256xi32> to vector<32x256xi32>
    %4 = arith.cmpi eq, %2, %3 : vector<32x256xi32>
    %5 = arith.extui %4 : vector<32x256xi1> to vector<32x256xi32>
    %6 = arith.sitofp %5 : vector<32x256xi32> to vector<32x256xf32>
    %7 = tpu.iota {dimensions = array<i32: 0>} : vector<48x256xi32>
    %8 = vector.broadcast %1 : vector<1x256xi32> to vector<48x256xi32>
    %9 = arith.cmpi eq, %7, %8 : vector<48x256xi32>
    %10 = arith.extui %9 : vector<48x256xi1> to vector<48x256xi32>
    %11 = arith.sitofp %10 : vector<48x256xi32> to vector<48x256xf32>
    %c0_2 = arith.constant 0 : index
    %c0_3 = arith.constant 0 : index
    %12 = vector.load %arg2[%c0_2, %c0_3] : memref<9x32xf32, #tpu.memory_space<vmem>>, vector<9x32xf32>
    %cst = arith.constant dense<0.000000e+00> : vector<9x256xf32>
    %13 = tpu.matmul %12, %6, %cst {dimension_numbers = #tpu.dot_dimension_numbers<[1], [0], [0], [1], [0, 0, 1, 1], [], []>, precision = #tpu.contract_precision<fp32>} : vector<9x32xf32>, vector<32x256xf32>, vector<9x256xf32> -> vector<9x256xf32>
    %c0_4 = arith.constant 0 : index
    %c0_5 = arith.constant 0 : index
    %14 = vector.load %arg3[%c0_4, %c0_5] : memref<9x48xf32, #tpu.memory_space<vmem>>, vector<9x48xf32>
    %cst_6 = arith.constant dense<0.000000e+00> : vector<9x256xf32>
    %15 = tpu.matmul %14, %11, %cst_6 {dimension_numbers = #tpu.dot_dimension_numbers<[1], [0], [0], [1], [0, 0, 1, 1], [], []>, precision = #tpu.contract_precision<fp32>} : vector<9x48xf32>, vector<48x256xf32>, vector<9x256xf32> -> vector<9x256xf32>
    %16 = vector.extract_strided_slice %13 {offsets = [0, 0], sizes = [8, 256], strides = [1, 1]} : vector<9x256xf32> to vector<8x256xf32>
    %c0_7 = arith.constant 0 : index
    %c0_8 = arith.constant 0 : index
    %17 = vector.load %arg6[%c0_7, %c0_8] : memref<8x256xf32, #tpu.memory_space<vmem>>, vector<8x256xf32>
    tpu.vector_store %arg6[%c0_7, %c0_8], %16 {strides = array<i32>} : memref<8x256xf32, #tpu.memory_space<vmem>>, vector<8x256xf32>,
    %18 = vector.extract_strided_slice %15 {offsets = [0, 0], sizes = [8, 256], strides = [1, 1]} : vector<9x256xf32> to vector<8x256xf32>
    %c0_9 = arith.constant 0 : index
    %c0_10 = arith.constant 0 : index
    %19 = vector.load %arg7[%c0_9, %c0_10] : memref<8x256xf32, #tpu.memory_space<vmem>>, vector<8x256xf32>
    tpu.vector_store %arg7[%c0_9, %c0_10], %18 {strides = array<i32>} : memref<8x256xf32, #tpu.memory_space<vmem>>, vector<8x256xf32>,
    %20 = vector.extract_strided_slice %13 {offsets = [8, 0], sizes = [1, 256], strides = [1, 1]} : vector<9x256xf32> to vector<1x256xf32>
    %21 = vector.extract_strided_slice %15 {offsets = [8, 0], sizes = [1, 256], strides = [1, 1]} : vector<9x256xf32> to vector<1x256xf32>
    %22 = arith.addf %20, %21 : vector<1x256xf32>
    %c0_11 = arith.constant 0 : index
    %c0_12 = arith.constant 0 : index
    %23 = vector.load %arg4[%c0_11, %c0_12] : memref<1x1xf32, #tpu.memory_space<vmem>>, vector<1x1xf32>
    %24 = vector.broadcast %23 : vector<1x1xf32> to vector<1x256xf32>
    %25 = arith.addf %22, %24 : vector<1x256xf32>
    %c0_13 = arith.constant 0 : index
    %c0_14 = arith.constant 0 : index
    %26 = vector.load %arg5[%c0_13, %c0_14] : memref<1x256xf32, #tpu.memory_space<vmem>>, vector<1x256xf32>
    tpu.vector_store %arg5[%c0_13, %c0_14], %25 {strides = array<i32>} : memref<1x256xf32, #tpu.memory_space<vmem>>, vector<1x256xf32>,
    return
  }
  func.func @transform_0(%arg0: i32) -> (i32, i32) {
    %c0_i32 = arith.constant 0 : i32
    %c0_i32_0 = arith.constant 0 : i32
    return %c0_i32, %arg0 : i32, i32
  }
  func.func @transform_1(%arg0: i32) -> (i32, i32) {
    %c0_i32 = arith.constant 0 : i32
    %c0_i32_0 = arith.constant 0 : i32
    %c0_i32_1 = arith.constant 0 : i32
    return %c0_i32, %c0_i32_0 : i32, i32
  }
  func.func @transform_2(%arg0: i32) -> (i32, i32) {
    %c0_i32 = arith.constant 0 : i32
    %c0_i32_0 = arith.constant 0 : i32
    %c0_i32_1 = arith.constant 0 : i32
    return %c0_i32, %c0_i32_0 : i32, i32
  }
  func.func @transform_3(%arg0: i32) -> (i32, i32) {
    %c0_i32 = arith.constant 0 : i32
    %c0_i32_0 = arith.constant 0 : i32
    %c0_i32_1 = arith.constant 0 : i32
    return %c0_i32, %c0_i32_0 : i32, i32
  }
  func.func @transform_4(%arg0: i32) -> (i32, i32) {
    %c0_i32 = arith.constant 0 : i32
    %c0_i32_0 = arith.constant 0 : i32
    return %c0_i32, %arg0 : i32, i32
  }
  func.func @transform_5(%arg0: i32) -> (i32, i32) {
    %c0_i32 = arith.constant 0 : i32
    %c0_i32_0 = arith.constant 0 : i32
    return %c0_i32, %arg0 : i32, i32
  }
  func.func @transform_6(%arg0: i32) -> (i32, i32) {
    %c0_i32 = arith.constant 0 : i32
    %c0_i32_0 = arith.constant 0 : i32
    return %c0_i32, %arg0 : i32, i32
  }
}

module attributes {stable_mosaic.version = 11 : i64} {
  func.func @linear_cf_kernel(%arg0: i32, %arg1: memref<2x256xi32, #tpu.memory_space<vmem>>, %arg2: memref<9x32xf32, #tpu.memory_space<vmem>>, %arg3: memref<9x48xf32, #tpu.memory_space<vmem>>, %arg4: memref<1x1xf32, #tpu.memory_space<vmem>>, %arg5: memref<1x256xf32, #tpu.memory_space<vmem>>, %arg6: memref<8x256xf32, #tpu.memory_space<vmem>>, %arg7: memref<8x256xf32, #tpu.memory_space<vmem>>) attributes {dimension_semantics = [#tpu.dimension_semantics<parallel>], iteration_bounds = array<i64: 1>, scalar_prefetch = 0 : i64, scratch_operands = 0 : i64, tpu.core_type = #tpu.core_type<tc>, window_params = [{transform_indices = @transform_0, window_bounds = array<i64: 2, 256>}, {pipeline_mode = #tpu.pipeline_mode<synchronous>, transform_indices = @transform_1, window_bounds = array<i64: 9, 32>}, {pipeline_mode = #tpu.pipeline_mode<synchronous>, transform_indices = @transform_2, window_bounds = array<i64: 9, 48>}, {pipeline_mode = #tpu.pipeline_mode<synchronous>, transform_indices = @transform_3, window_bounds = array<i64: 1, 1>}, {transform_indices = @transform_4, window_bounds = array<i64: 1, 256>}, {transform_indices = @transform_5, window_bounds = array<i64: 8, 256>}, {transform_indices = @transform_6, window_bounds = array<i64: 8, 256>}]} {
    %c0 = arith.constant 0 : index
    %c0_0 = arith.constant 0 : index
    %0 = vector.load %arg1[%c0, %c0_0] : memref<2x256xi32, #tpu.memory_space<vmem>>, vector<1x256xi32>
    %c1 = arith.constant 1 : index
    %c0_1 = arith.constant 0 : index
    %1 = vector.load %arg1[%c1, %c0_1] : memref<2x256xi32, #tpu.memory_space<vmem>>, vector<1x256xi32>
    %2 = tpu.iota {dimensions = array<i32: 0>} : vector<32x256xi32>
    %3 = vector.broadcast %0 : vector<1x256xi32> to vector<32x256xi32>
    %4 = arith.cmpi eq, %2, %3 : vector<32x256xi32>
    %5 = arith.extui %4 : vector<32x256xi1> to vector<32x256xi32>
    %6 = arith.sitofp %5 : vector<32x256xi32> to vector<32x256xf32>
    %7 = tpu.iota {dimensions = array<i32: 0>} : vector<48x256xi32>
    %8 = vector.broadcast %1 : vector<1x256xi32> to vector<48x256xi32>
    %9 = arith.cmpi eq, %7, %8 : vector<48x256xi32>
    %10 = arith.extui %9 : vector<48x256xi1> to vector<48x256xi32>
    %11 = arith.sitofp %10 : vector<48x256xi32> to vector<48x256xf32>
    %c0_2 = arith.constant 0 : index
    %c0_3 = arith.constant 0 : index
    %12 = vector.load %arg2[%c0_2, %c0_3] : memref<9x32xf32, #tpu.memory_space<vmem>>, vector<9x32xf32>
    %cst = arith.constant dense<0.000000e+00> : vector<9x256xf32>
    %13 = tpu.matmul %12, %6, %cst {dimension_numbers = #tpu.dot_dimension_numbers<[1], [0], [0], [1], [0, 0, 1, 1], [], []>} : vector<9x32xf32>, vector<32x256xf32>, vector<9x256xf32> -> vector<9x256xf32>
    %c0_4 = arith.constant 0 : index
    %c0_5 = arith.constant 0 : index
    %14 = vector.load %arg3[%c0_4, %c0_5] : memref<9x48xf32, #tpu.memory_space<vmem>>, vector<9x48xf32>
    %cst_6 = arith.constant dense<0.000000e+00> : vector<9x256xf32>
    %15 = tpu.matmul %14, %11, %cst_6 {dimension_numbers = #tpu.dot_dimension_numbers<[1], [0], [0], [1], [0, 0, 1, 1], [], []>} : vector<9x48xf32>, vector<48x256xf32>, vector<9x256xf32> -> vector<9x256xf32>
    %16 = vector.extract_strided_slice %13 {offsets = [0, 0], sizes = [8, 256], strides = [1, 1]} : vector<9x256xf32> to vector<8x256xf32>
    %c0_7 = arith.constant 0 : index
    %c0_8 = arith.constant 0 : index
    %17 = vector.load %arg6[%c0_7, %c0_8] : memref<8x256xf32, #tpu.memory_space<vmem>>, vector<8x256xf32>
    tpu.vector_store %arg6[%c0_7, %c0_8], %16 {strides = array<i32>} : memref<8x256xf32, #tpu.memory_space<vmem>>, vector<8x256xf32>,
    %18 = vector.extract_strided_slice %15 {offsets = [0, 0], sizes = [8, 256], strides = [1, 1]} : vector<9x256xf32> to vector<8x256xf32>
    %c0_9 = arith.constant 0 : index
    %c0_10 = arith.constant 0 : index
    %19 = vector.load %arg7[%c0_9, %c0_10] : memref<8x256xf32, #tpu.memory_space<vmem>>, vector<8x256xf32>
    tpu.vector_store %arg7[%c0_9, %c0_10], %18 {strides = array<i32>} : memref<8x256xf32, #tpu.memory_space<vmem>>, vector<8x256xf32>,
    %20 = vector.extract_strided_slice %13 {offsets = [8, 0], sizes = [1, 256], strides = [1, 1]} : vector<9x256xf32> to vector<1x256xf32>
    %21 = vector.extract_strided_slice %15 {offsets = [8, 0], sizes = [1, 256], strides = [1, 1]} : vector<9x256xf32> to vector<1x256xf32>
    %22 = arith.addf %20, %21 : vector<1x256xf32>
    %c0_11 = arith.constant 0 : index
    %c0_12 = arith.constant 0 : index
    %23 = vector.load %arg4[%c0_11, %c0_12] : memref<1x1xf32, #tpu.memory_space<vmem>>, vector<1x1xf32>
    %24 = vector.broadcast %23 : vector<1x1xf32> to vector<1x256xf32>
    %25 = arith.addf %22, %24 : vector<1x256xf32>
    %c0_13 = arith.constant 0 : index
    %c0_14 = arith.constant 0 : index
    %26 = vector.load %arg5[%c0_13, %c0_14] : memref<1x256xf32, #tpu.memory_space<vmem>>, vector<1x256xf32>
    tpu.vector_store %arg5[%c0_13, %c0_14], %25 {strides = array<i32>} : memref<1x256xf32, #tpu.memory_space<vmem>>, vector<1x256xf32>,
    return
  }
  func.func @transform_0(%arg0: i32) -> (i32, i32) {
    %c0_i32 = arith.constant 0 : i32
    %c0_i32_0 = arith.constant 0 : i32
    return %c0_i32, %arg0 : i32, i32
  }
  func.func @transform_1(%arg0: i32) -> (i32, i32) {
    %c0_i32 = arith.constant 0 : i32
    %c0_i32_0 = arith.constant 0 : i32
    %c0_i32_1 = arith.constant 0 : i32
    return %c0_i32, %c0_i32_0 : i32, i32
  }
  func.func @transform_2(%arg0: i32) -> (i32, i32) {
    %c0_i32 = arith.constant 0 : i32
    %c0_i32_0 = arith.constant 0 : i32
    %c0_i32_1 = arith.constant 0 : i32
    return %c0_i32, %c0_i32_0 : i32, i32
  }
  func.func @transform_3(%arg0: i32) -> (i32, i32) {
    %c0_i32 = arith.constant 0 : i32
    %c0_i32_0 = arith.constant 0 : i32
    %c0_i32_1 = arith.constant 0 : i32
    return %c0_i32, %c0_i32_0 : i32, i32
  }
  func.func @transform_4(%arg0: i32) -> (i32, i32) {
    %c0_i32 = arith.constant 0 : i32
    %c0_i32_0 = arith.constant 0 : i32
    return %c0_i32, %arg0 : i32, i32
  }
  func.func @transform_5(%arg0: i32) -> (i32, i32) {
    %c0_i32 = arith.constant 0 : i32
    %c0_i32_0 = arith.constant 0 : i32
    return %c0_i32, %arg0 : i32, i32
  }
  func.func @transform_6(%arg0: i32) -> (i32, i32) {
    %c0_i32 = arith.constant 0 : i32
    %c0_i32_0 = arith.constant 0 : i32
    return %c0_i32, %arg0 : i32, i32
  }
}

</mosaic_0001>

<llo_original>
// kernel: tpu_custom_call.1
$region0: #{tpu_custom_call.1}
  #allocation0 [shape = 'u32[]', space=smem, size = 0x4, offset = 0x4, fixed_abs, tag = 'smem constant byte address 0x4 - core index']
  #allocation1 [shape = 'u32[144,128]{1,0:T(1,128)}', space=vmem, size = 0x12000, scoped, tag = 'internal scratch']
  #allocation2 [shape = 'f32[1,1]{1,0:T(1,128)S(1)}', space=vmem, size = 0x200, scoped, tag = 'scoped memory for tpu_custom_call.1']
  %s0 = inlined_call_operand.hbm [shape: s32[2,256], index: 0, kind: input, shape index: {}]
  %s1 = inlined_call_operand.hbm [shape: f32[9,32], index: 1, kind: input, shape index: {}]
  %s2 = inlined_call_operand.hbm [shape: f32[9,48], index: 2, kind: input, shape index: {}]
  %s3 = inlined_call_operand.<no memory space> [shape: f32[1,1], index: 3, kind: input, shape index: {}]
  %s4 = inlined_call_operand.hbm [shape: f32[1,256], index: 4, kind: output, shape index: {0}]
  %s5 = inlined_call_operand.hbm [shape: f32[8,256], index: 5, kind: output, shape index: {1}]
  %s6 = inlined_call_operand.hbm [shape: f32[8,256], index: 6, kind: output, shape index: {2}]
  %7 = xla_tuple %s4, %s5, %s6
  %s8 = sld [smem:[#allocation0]]
  $region54: #{tpu_custom_call.1} parent=0
    _
  %s10 = ssub.s32 1, %s8
  %s11 = scalar_select 0, %s10, %s8
  %v12 = vstv %s3
  %13 = vst [vmem:[#allocation2] sm:$0x1] %v12
  $region1: #{tpu_custom_call.1} parent=0
    #allocation3 [shape = 'u8[2048]{0}', space=vmem, size = 0x800, scoped, tag = 'input window, operand 0, single buffered']
    #allocation4 [shape = 's32[1]{0}', space=sflag, size = 0x4, scoped, tag = 'scoped memory for tpu_custom_call.1']
    #allocation5 [shape = 's32[1]{0}', space=sflag, size = 0x4, scoped, tag = 'scoped memory for tpu_custom_call.1']
    #allocation6 [shape = 'u8[8192]{0}', space=vmem, size = 0x2000, scoped, tag = 'input window, operand 1, single buffered']
    #allocation7 [shape = 's32[1]{0}', space=sflag, size = 0x4, scoped, tag = 'scoped memory for tpu_custom_call.1']
    #allocation8 [shape = 'u8[8192]{0}', space=vmem, size = 0x2000, scoped, tag = 'input window, operand 2, single buffered']
    #allocation9 [shape = 'u8[1024]{0}', space=vmem, size = 0x400, scoped, tag = 'output window, operand 0, single buffered']
    #allocation10 [shape = 'u8[8192]{0}', space=vmem, size = 0x2000, scoped, tag = 'output window, operand 1, single buffered']
    #allocation11 [shape = 's32[1]{0}', space=sflag, size = 0x4, scoped, tag = 'scoped memory for tpu_custom_call.1']
    #allocation12 [shape = 'u8[8192]{0}', space=vmem, size = 0x2000, scoped, tag = 'output window, operand 2, single buffered']
    %14 = vsyncpa [#allocation4], 0
    %15 = vsyncpa [#allocation7], 0
    %16 = vsyncpa [#allocation5], 0
    %17 = vsyncpa [#allocation11], 0
    // Predicated region
    $region2: #{tpu_custom_call.1} parent=1 // pred_check
      _
    $region3: #{tpu_custom_call.1} parent=1 // pred_check_branch
      %19 = sbr.rel (0) target = $region5
    $region4: #{tpu_custom_call.1} parent=1 // pred_region
      %s21 = ssub.s32 64, 64
      %22 = vsyncadd [#allocation4], %s21
      %s24 = sshll.u32 [#allocation3], 4
      %s25 = int_to_ptr.vmem [resolvable:$true] %s24
      %27 = dma.hbm_to_vmem [thread:$0]  %s0, 64, %s25, [#allocation4]
    $region5: #{tpu_custom_call.1} parent=1 // pred_fallthru
      _
    // Predicated region
    $region6: #{tpu_custom_call.1} parent=1 // pred_check
      _
    $region7: #{tpu_custom_call.1} parent=1 // pred_check_branch
      %29 = sbr.rel (0) target = $region9
    $region8: #{tpu_custom_call.1} parent=1 // pred_region
      %s31 = ssub.s32 256, 256
      %32 = vsyncadd [#allocation7], %s31
      %s33 = sshll.u32 [#allocation6], 4
      %s34 = int_to_ptr.vmem [resolvable:$true] %s33
      %39 = dma.hbm_to_vmem [thread:$0]  %s1, 256, %s34, [#allocation7], 128, 128, 8
    $region9: #{tpu_custom_call.1} parent=1 // pred_fallthru
      _
    // Predicated region
    $region10: #{tpu_custom_call.1} parent=1 // pred_check
      _
    $region11: #{tpu_custom_call.1} parent=1 // pred_check_branch
      %41 = sbr.rel (0) target = $region13
    $region12: #{tpu_custom_call.1} parent=1 // pred_region
      %s43 = ssub.s32 256, 256
      %44 = vsyncadd [#allocation7], %s43
      %s45 = sshll.u32 [#allocation8], 4
      %s46 = int_to_ptr.vmem [resolvable:$true] %s45
      %51 = dma.hbm_to_vmem [thread:$0]  %s2, 256, %s46, [#allocation7], 128, 128, 8
    $region13: #{tpu_custom_call.1} parent=1 // pred_fallthru
      _
    // Predicated region
    $region14: #{tpu_custom_call.1} parent=1 // pred_check
      _
    $region15: #{tpu_custom_call.1} parent=1 // pred_check_branch
      %53 = sbr.rel (0) target = $region17
    $region16: #{tpu_custom_call.1} parent=1 // pred_region
      _
    $region17: #{tpu_custom_call.1} parent=1 // pred_fallthru
      _
    // Predicated region
    $region18: #{tpu_custom_call.1} parent=1 // pred_check
      _
    $region19: #{tpu_custom_call.1} parent=1 // pred_check_branch
      %55 = sbr.rel (0) target = $region21
    $region20: #{tpu_custom_call.1} parent=1 // pred_region
      %56 = dma.done [#allocation4], 64
    $region21: #{tpu_custom_call.1} parent=1 // pred_fallthru
      _
    // Predicated region
    $region22: #{tpu_custom_call.1} parent=1 // pred_check
      _
    $region23: #{tpu_custom_call.1} parent=1 // pred_check_branch
      %58 = sbr.rel (0) target = $region25
    $region24: #{tpu_custom_call.1} parent=1 // pred_region
      %59 = dma.done [#allocation7], 256
    $region25: #{tpu_custom_call.1} parent=1 // pred_fallthru
      _
    // Predicated region
    $region26: #{tpu_custom_call.1} parent=1 // pred_check
      _
    $region27: #{tpu_custom_call.1} parent=1 // pred_check_branch
      %61 = sbr.rel (0) target = $region29
    $region28: #{tpu_custom_call.1} parent=1 // pred_region
      %62 = dma.done [#allocation7], 256
    $region29: #{tpu_custom_call.1} parent=1 // pred_fallthru
      _
    %v63 = vld [vmem:[#allocation3] ss:$2 sm:$0x3]
    %s64 = scalar_lea.vmem [#allocation3], 1
    %v65 = vld [vmem:[%s64] ss:$2 sm:$0x3]
    %v66 = vlaneseq
    %v67 = vshrl.u32 %v66, 7
    %v68 = vadd.s32 %v67, 8
    %v69 = vadd.s32 %v67, 16
    %v70 = vadd.s32 %v67, 24
    %v71 = vlaneseq
    %v72 = vshrl.u32 %v71, 7
    %v73 = vsub.s32 0, %v72
    %v74 = vrot.slane %v63, %v73
    %v75 = vlaneseq
    %v76 = vshrl.u32 %v75, 7
    %v77 = vsub.s32 1, %v76
    %v78 = vrot.slane %v63, %v77
    %vm79 = vcmp.eq.s32.totalorder %v67, %v74
    %vm80 = vcmp.eq.s32.totalorder %v67, %v78
    %vm81 = vcmp.eq.s32.totalorder %v68, %v74
    %vm82 = vcmp.eq.s32.totalorder %v68, %v78
    %vm83 = vcmp.eq.s32.totalorder %v69, %v74
    %vm84 = vcmp.eq.s32.totalorder %v69, %v78
    %vm85 = vcmp.eq.s32.totalorder %v70, %v74
    %vm86 = vcmp.eq.s32.totalorder %v70, %v78
    %v87 = vsel %vm79, 1, 0
    %v88 = vsel %vm80, 1, 0
    %v89 = vsel %vm81, 1, 0
    %v90 = vsel %vm82, 1, 0
    %v91 = vsel %vm83, 1, 0
    %v92 = vsel %vm84, 1, 0
    %v93 = vsel %vm85, 1, 0
    %v94 = vsel %vm86, 1, 0
    %v95 = vcvt.s32.f32 %v87
    %v96 = vcvt.s32.f32 %v88
    %v97 = vcvt.s32.f32 %v89
    %v98 = vcvt.s32.f32 %v90
    %v99 = vcvt.s32.f32 %v91
    %v100 = vcvt.s32.f32 %v92
    %v101 = vcvt.s32.f32 %v93
    %v102 = vcvt.s32.f32 %v94
    %v103 = vadd.s32 %v67, 32
    %v104 = vadd.s32 %v67, 40
    %v105 = vlaneseq
    %v106 = vshrl.u32 %v105, 7
    %v107 = vsub.s32 0, %v106
    %v108 = vrot.slane %v65, %v107
    %v109 = vlaneseq
    %v110 = vshrl.u32 %v109, 7
    %v111 = vsub.s32 1, %v110
    %v112 = vrot.slane %v65, %v111
    %vm113 = vcmp.eq.s32.totalorder %v67, %v108
    %vm114 = vcmp.eq.s32.totalorder %v67, %v112
    %vm115 = vcmp.eq.s32.totalorder %v68, %v108
    %vm116 = vcmp.eq.s32.totalorder %v68, %v112
    %vm117 = vcmp.eq.s32.totalorder %v69, %v108
    %vm118 = vcmp.eq.s32.totalorder %v69, %v112
    %vm119 = vcmp.eq.s32.totalorder %v70, %v108
    %vm120 = vcmp.eq.s32.totalorder %v70, %v112
    %vm121 = vcmp.eq.s32.totalorder %v103, %v108
    %vm122 = vcmp.eq.s32.totalorder %v103, %v112
    %vm123 = vcmp.eq.s32.totalorder %v104, %v108
    %vm124 = vcmp.eq.s32.totalorder %v104, %v112
    %v125 = vsel %vm113, 1, 0
    %v126 = vsel %vm114, 1, 0
    %v127 = vsel %vm115, 1, 0
    %v128 = vsel %vm116, 1, 0
    %v129 = vsel %vm117, 1, 0
    %v130 = vsel %vm118, 1, 0
    %v131 = vsel %vm119, 1, 0
    %v132 = vsel %vm120, 1, 0
    %v133 = vsel %vm121, 1, 0
    %v134 = vsel %vm122, 1, 0
    %v135 = vsel %vm123, 1, 0
    %v136 = vsel %vm124, 1, 0
    %v137 = vcvt.s32.f32 %v125
    %v138 = vcvt.s32.f32 %v126
    %v139 = vcvt.s32.f32 %v127
    %v140 = vcvt.s32.f32 %v128
    %v141 = vcvt.s32.f32 %v129
    %v142 = vcvt.s32.f32 %v130
    %v143 = vcvt.s32.f32 %v131
    %v144 = vcvt.s32.f32 %v132
    %v145 = vcvt.s32.f32 %v133
    %v146 = vcvt.s32.f32 %v134
    %v147 = vcvt.s32.f32 %v135
    %v148 = vcvt.s32.f32 %v136
    %v149 = vld [vmem:[#allocation6] sm:$0xff]
    %v150 = vld [vmem:[#allocation6 + $0x8] sm:$0x1]
    %vm151 = vcmask 261120
    %v153 = vsel %vm151, %v149, 0
    %v156 = vsel %vm151, %v150, 0
    %v158 = vand.u32 %v96, 4294901760
    %159 = vmatprep.subr.mxu0 %v158
    %v160 = vand.u32 %v95, 4294901760
    %161 = vmatpush1.msra.mxu0 %v160
    %v162 = vand.u32 %v98, 4294901760
    %163 = vmatprep.subr.mxu0 %v162
    %v164 = vand.u32 %v97, 4294901760
    %165 = vmatpush1.msra.mxu0 %v164
    %v166 = vand.u32 %v100, 4294901760
    %167 = vmatprep.subr.mxu0 %v166
    %v168 = vand.u32 %v99, 4294901760
    %169 = vmatpush1.msra.mxu0 %v168
    %v170 = vand.u32 %v102, 4294901760
    %171 = vmatprep.subr.mxu0 %v170
    %v172 = vand.u32 %v101, 4294901760
    %173 = vmatpush1.msra.mxu0 %v172
    %174 = vmatprep.subr.mxu0 0.0
    %175 = vmatpush1.msra.mxu0 0.0
    %176 = vmatprep.subr.mxu0 0.0
    %177 = vmatpush1.msra.mxu0 0.0
    %178 = vmatprep.subr.mxu0 0.0
    %179 = vmatpush1.msra.mxu0 0.0
    %180 = vmatprep.subr.mxu0 0.0
    %181 = vmatpush1.msra.mxu0 0.0
    %182 = vmatprep.subr.mxu0 0.0
    %183 = vmatpush1.msra.mxu0 0.0
    %184 = vmatprep.subr.mxu0 0.0
    %185 = vmatpush1.msra.mxu0 0.0
    %186 = vmatprep.subr.mxu0 0.0
    %187 = vmatpush1.msra.mxu0 0.0
    %188 = vmatprep.subr.mxu0 0.0
    %189 = vmatpush1.msra.mxu0 0.0
    %190 = vmatprep.subr.mxu0 0.0
    %191 = vmatpush1.msra.mxu0 0.0
    %192 = vmatprep.subr.mxu0 0.0
    %193 = vmatpush1.msra.mxu0 0.0
    %194 = vmatprep.subr.mxu0 0.0
    %195 = vmatpush1.msra.mxu0 0.0
    %196 = vmatprep.subr.mxu0 0.0
    %197 = vmatpush1.msra.mxu0 0.0
    %198 = vmatprep.subr.mxu0 0.0
    %199 = vmatpush1.msra.mxu0 0.0
    %200 = vmatprep.subr.mxu0 0.0
    %201 = vmatpush1.msra.mxu0 0.0
    %202 = vmatprep.subr.mxu0 0.0
    %203 = vmatpush1.msra.mxu0 0.0
    %204 = vmatprep.subr.mxu0 0.0
    %205 = vmatpush1.msra.mxu0 0.0
    %206 = vmatprep.subr.mxu0 0.0
    %207 = vmatpush1.msra.mxu0 0.0
    %208 = vmatprep.subr.mxu0 0.0
    %209 = vmatpush1.msra.mxu0 0.0
    %210 = vmatprep.subr.mxu0 0.0
    %211 = vmatpush1.msra.mxu0 0.0
    %212 = vmatprep.subr.mxu0 0.0
    %213 = vmatpush1.msra.mxu0 0.0
    %214 = vmatprep.subr.mxu0 0.0
    %215 = vmatpush1.msra.mxu0 0.0
    %216 = vmatprep.subr.mxu0 0.0
    %217 = vmatpush1.msra.mxu0 0.0
    %218 = vmatprep.subr.mxu0 0.0
    %219 = vmatpush1.msra.mxu0 0.0
    %220 = vmatprep.subr.mxu0 0.0
    %221 = vmatpush1.msra.mxu0 0.0
    %222 = vmatprep.subr.mxu0 0.0
    %223 = vmatpush1.msra.mxu0 0.0
    %224 = vmatprep.subr.mxu0 0.0
    %225 = vmatpush1.msra.mxu0 0.0
    %226 = vmatprep.subr.mxu0 0.0
    %227 = vmatpush1.msra.mxu0 0.0
    %228 = vmatprep.subr.mxu0 0.0
    %229 = vmatpush1.msra.mxu0 0.0
    %230 = vmatprep.mubr.f32.mxu0 0.0
    %v231 = vand.u32 %v153, 4294901760
    %v232 = vsub.f32 %v153, %v231
    %v233 = vand.u32 %v232, 4294901760
    %v234 = vsub.f32 %v232, %v233
    %v235 = vand.u32 %v234, 4294901760
    %236 = vmatmul.mubr.f32.gmra.mrb[0].mxu0 %v235
    %v237 = vpop.f32.mrb[0].mxu0
    %v238 = vadd.f32 0.0, %v237
    %v239 = vpop.f32.mrb[0].mxu0
    %v240 = vadd.f32 0.0, %v239
    %241 = vmatprep.mubr.f32.mxu0 0.0
    %v242 = vand.u32 %v156, 4294901760
    %v243 = vsub.f32 %v156, %v242
    %v244 = vand.u32 %v243, 4294901760
    %v245 = vsub.f32 %v243, %v244
    %v246 = vand.u32 %v245, 4294901760
    %247 = vmatmul.mubr.f32.gmra.mrb[0].mxu0 %v246
    %v248 = vpop.f32.mrb[0].mxu0
    %v249 = vadd.f32 0.0, %v248
    %v250 = vpop.f32.mrb[0].mxu0
    %v251 = vadd.f32 0.0, %v250
    %252 = vdwg.mxu0
    %v253 = vand.u32 %v96, 4294901760
    %v254 = vsub.f32 %v96, %v253
    %v255 = vand.u32 %v254, 4294901760
    %v256 = vsub.f32 %v254, %v255
    %v257 = vand.u32 %v256, 4294901760
    %258 = vmatprep.subr.mxu0 %v257
    %v259 = vand.u32 %v95, 4294901760
    %v260 = vsub.f32 %v95, %v259
    %v261 = vand.u32 %v260, 4294901760
    %v262 = vsub.f32 %v260, %v261
    %v263 = vand.u32 %v262, 4294901760
    %264 = vmatpush1.msra.mxu0 %v263
    %v265 = vand.u32 %v98, 4294901760
    %v266 = vsub.f32 %v98, %v265
    %v267 = vand.u32 %v266, 4294901760
    %v268 = vsub.f32 %v266, %v267
    %v269 = vand.u32 %v268, 4294901760
    %270 = vmatprep.subr.mxu0 %v269
    %v271 = vand.u32 %v97, 4294901760
    %v272 = vsub.f32 %v97, %v271
    %v273 = vand.u32 %v272, 4294901760
    %v274 = vsub.f32 %v272, %v273
    %v275 = vand.u32 %v274, 4294901760
    %276 = vmatpush1.msra.mxu0 %v275
    %v277 = vand.u32 %v100, 4294901760
    %v278 = vsub.f32 %v100, %v277
    %v279 = vand.u32 %v278, 4294901760
    %v280 = vsub.f32 %v278, %v279
    %v281 = vand.u32 %v280, 4294901760
    %282 = vmatprep.subr.mxu0 %v281
    %v283 = vand.u32 %v99, 4294901760
    %v284 = vsub.f32 %v99, %v283
    %v285 = vand.u32 %v284, 4294901760
    %v286 = vsub.f32 %v284, %v285
    %v287 = vand.u32 %v286, 4294901760
    %288 = vmatpush1.msra.mxu0 %v287
    %v289 = vand.u32 %v102, 4294901760
    %v290 = vsub.f32 %v102, %v289
    %v291 = vand.u32 %v290, 4294901760
    %v292 = vsub.f32 %v290, %v291
    %v293 = vand.u32 %v292, 4294901760
    %294 = vmatprep.subr.mxu0 %v293
    %v295 = vand.u32 %v101, 4294901760
    %v296 = vsub.f32 %v101, %v295
    %v297 = vand.u32 %v296, 4294901760
    %v298 = vsub.f32 %v296, %v297
    %v299 = vand.u32 %v298, 4294901760
    %300 = vmatpush1.msra.mxu0 %v299
    %301 = vmatprep.subr.mxu0 0.0
    %302 = vmatpush1.msra.mxu0 0.0
    %303 = vmatprep.subr.mxu0 0.0
    %304 = vmatpush1.msra.mxu0 0.0
    %305 = vmatprep.subr.mxu0 0.0
    %306 = vmatpush1.msra.mxu0 0.0
    %307 = vmatprep.subr.mxu0 0.0
    %308 = vmatpush1.msra.mxu0 0.0
    %309 = vmatprep.subr.mxu0 0.0
    %310 = vmatpush1.msra.mxu0 0.0
    %311 = vmatprep.subr.mxu0 0.0
    %312 = vmatpush1.msra.mxu0 0.0
    %313 = vmatprep.subr.mxu0 0.0
    %314 = vmatpush1.msra.mxu0 0.0
    %315 = vmatprep.subr.mxu0 0.0
    %316 = vmatpush1.msra.mxu0 0.0
    %317 = vmatprep.subr.mxu0 0.0
    %318 = vmatpush1.msra.mxu0 0.0
    %319 = vmatprep.subr.mxu0 0.0
    %320 = vmatpush1.msra.mxu0 0.0
    %321 = vmatprep.subr.mxu0 0.0
    %322 = vmatpush1.msra.mxu0 0.0
    %323 = vmatprep.subr.mxu0 0.0
    %324 = vmatpush1.msra.mxu0 0.0
    %325 = vmatprep.subr.mxu0 0.0
    %326 = vmatpush1.msra.mxu0 0.0
    %327 = vmatprep.subr.mxu0 0.0
    %328 = vmatpush1.msra.mxu0 0.0
    %329 = vmatprep.subr.mxu0 0.0
    %330 = vmatpush1.msra.mxu0 0.0
    %331 = vmatprep.subr.mxu0 0.0
    %332 = vmatpush1.msra.mxu0 0.0
    %333 = vmatprep.subr.mxu0 0.0
    %334 = vmatpush1.msra.mxu0 0.0
    %335 = vmatprep.subr.mxu0 0.0
    %336 = vmatpush1.msra.mxu0 0.0
    %337 = vmatprep.subr.mxu0 0.0
    %338 = vmatpush1.msra.mxu0 0.0
    %339 = vmatprep.subr.mxu0 0.0
    %340 = vmatpush1.msra.mxu0 0.0
    %341 = vmatprep.subr.mxu0 0.0
    %342 = vmatpush1.msra.mxu0 0.0
    %343 = vmatprep.subr.mxu0 0.0
    %344 = vmatpush1.msra.mxu0 0.0
    %345 = vmatprep.subr.mxu0 0.0
    %346 = vmatpush1.msra.mxu0 0.0
    %347 = vmatprep.subr.mxu0 0.0
    %348 = vmatpush1.msra.mxu0 0.0
    %349 = vmatprep.subr.mxu0 0.0
    %350 = vmatpush1.msra.mxu0 0.0
    %351 = vmatprep.subr.mxu0 0.0
    %352 = vmatpush1.msra.mxu0 0.0
    %353 = vmatprep.subr.mxu0 0.0
    %354 = vmatpush1.msra.mxu0 0.0
    %355 = vmatprep.subr.mxu0 0.0
    %356 = vmatpush1.msra.mxu0 0.0
    %357 = vmatprep.mubr.f32.mxu0 0.0
    %v358 = vand.u32 %v153, 4294901760
    %359 = vmatmul.mubr.f32.gmra.mrb[0].mxu0 %v358
    %v360 = vpop.f32.mrb[0].mxu0
    %v361 = vadd.f32 %v238, %v360
    %v362 = vpop.f32.mrb[0].mxu0
    %v363 = vadd.f32 %v240, %v362
    %364 = vmatprep.mubr.f32.mxu0 0.0
    %v365 = vand.u32 %v156, 4294901760
    %366 = vmatmul.mubr.f32.gmra.mrb[0].mxu0 %v365
    %v367 = vpop.f32.mrb[0].mxu0
    %v368 = vadd.f32 %v249, %v367
    %v369 = vpop.f32.mrb[0].mxu0
    %v370 = vadd.f32 %v251, %v369
    %371 = vdwg.mxu0
    %v372 = vand.u32 %v96, 4294901760
    %v373 = vsub.f32 %v96, %v372
    %374 = vmatprep.subr.mxu0 %v373
    %v375 = vand.u32 %v95, 4294901760
    %v376 = vsub.f32 %v95, %v375
    %377 = vmatpush1.msra.mxu0 %v376
    %v378 = vand.u32 %v98, 4294901760
    %v379 = vsub.f32 %v98, %v378
    %380 = vmatprep.subr.mxu0 %v379
    %v381 = vand.u32 %v97, 4294901760
    %v382 = vsub.f32 %v97, %v381
    %383 = vmatpush1.msra.mxu0 %v382
    %v384 = vand.u32 %v100, 4294901760
    %v385 = vsub.f32 %v100, %v384
    %386 = vmatprep.subr.mxu0 %v385
    %v387 = vand.u32 %v99, 4294901760
    %v388 = vsub.f32 %v99, %v387
    %389 = vmatpush1.msra.mxu0 %v388
    %v390 = vand.u32 %v102, 4294901760
    %v391 = vsub.f32 %v102, %v390
    %392 = vmatprep.subr.mxu0 %v391
    %v393 = vand.u32 %v101, 4294901760
    %v394 = vsub.f32 %v101, %v393
    %395 = vmatpush1.msra.mxu0 %v394
    %396 = vmatprep.subr.mxu0 0.0
    %397 = vmatpush1.msra.mxu0 0.0
    %398 = vmatprep.subr.mxu0 0.0
    %399 = vmatpush1.msra.mxu0 0.0
    %400 = vmatprep.subr.mxu0 0.0
    %401 = vmatpush1.msra.mxu0 0.0
    %402 = vmatprep.subr.mxu0 0.0
    %403 = vmatpush1.msra.mxu0 0.0
    %404 = vmatprep.subr.mxu0 0.0
    %405 = vmatpush1.msra.mxu0 0.0
    %406 = vmatprep.subr.mxu0 0.0
    %407 = vmatpush1.msra.mxu0 0.0
    %408 = vmatprep.subr.mxu0 0.0
    %409 = vmatpush1.msra.mxu0 0.0
    %410 = vmatprep.subr.mxu0 0.0
    %411 = vmatpush1.msra.mxu0 0.0
    %412 = vmatprep.subr.mxu0 0.0
    %413 = vmatpush1.msra.mxu0 0.0
    %414 = vmatprep.subr.mxu0 0.0
    %415 = vmatpush1.msra.mxu0 0.0
    %416 = vmatprep.subr.mxu0 0.0
    %417 = vmatpush1.msra.mxu0 0.0
    %418 = vmatprep.subr.mxu0 0.0
    %419 = vmatpush1.msra.mxu0 0.0
    %420 = vmatprep.subr.mxu0 0.0
    %421 = vmatpush1.msra.mxu0 0.0
    %422 = vmatprep.subr.mxu0 0.0
    %423 = vmatpush1.msra.mxu0 0.0
    %424 = vmatprep.subr.mxu0 0.0
    %425 = vmatpush1.msra.mxu0 0.0
    %426 = vmatprep.subr.mxu0 0.0
    %427 = vmatpush1.msra.mxu0 0.0
    %428 = vmatprep.subr.mxu0 0.0
    %429 = vmatpush1.msra.mxu0 0.0
    %430 = vmatprep.subr.mxu0 0.0
    %431 = vmatpush1.msra.mxu0 0.0
    %432 = vmatprep.subr.mxu0 0.0
    %433 = vmatpush1.msra.mxu0 0.0
    %434 = vmatprep.subr.mxu0 0.0
    %435 = vmatpush1.msra.mxu0 0.0
    %436 = vmatprep.subr.mxu0 0.0
    %437 = vmatpush1.msra.mxu0 0.0
    %438 = vmatprep.subr.mxu0 0.0
    %439 = vmatpush1.msra.mxu0 0.0
    %440 = vmatprep.subr.mxu0 0.0
    %441 = vmatpush1.msra.mxu0 0.0
    %442 = vmatprep.subr.mxu0 0.0
    %443 = vmatpush1.msra.mxu0 0.0
    %444 = vmatprep.subr.mxu0 0.0
    %445 = vmatpush1.msra.mxu0 0.0
    %446 = vmatprep.subr.mxu0 0.0
    %447 = vmatpush1.msra.mxu0 0.0
    %448 = vmatprep.subr.mxu0 0.0
    %449 = vmatpush1.msra.mxu0 0.0
    %450 = vmatprep.subr.mxu0 0.0
    %451 = vmatpush1.msra.mxu0 0.0
    %452 = vmatprep.mubr.f32.mxu0 0.0
    %v453 = vand.u32 %v153, 4294901760
    %v454 = vsub.f32 %v153, %v453
    %455 = vmatmul.mubr.f32.gmra.mrb[0].mxu0 %v454
    %v456 = vpop.f32.mrb[0].mxu0
    %v457 = vadd.f32 %v361, %v456
    %v458 = vpop.f32.mrb[0].mxu0
    %v459 = vadd.f32 %v363, %v458
    %460 = vmatprep.mubr.f32.mxu0 0.0
    %v461 = vand.u32 %v156, 4294901760
    %v462 = vsub.f32 %v156, %v461
    %463 = vmatmul.mubr.f32.gmra.mrb[0].mxu0 %v462
    %v464 = vpop.f32.mrb[0].mxu0
    %v465 = vadd.f32 %v368, %v464
    %v466 = vpop.f32.mrb[0].mxu0
    %v467 = vadd.f32 %v370, %v466
    %468 = vdwg.mxu0
    %v469 = vand.u32 %v96, 4294901760
    %470 = vmatprep.subr.mxu0 %v469
    %v471 = vand.u32 %v95, 4294901760
    %472 = vmatpush1.msra.mxu0 %v471
    %v473 = vand.u32 %v98, 4294901760
    %474 = vmatprep.subr.mxu0 %v473
    %v475 = vand.u32 %v97, 4294901760
    %476 = vmatpush1.msra.mxu0 %v475
    %v477 = vand.u32 %v100, 4294901760
    %478 = vmatprep.subr.mxu0 %v477
    %v479 = vand.u32 %v99, 4294901760
    %480 = vmatpush1.msra.mxu0 %v479
    %v481 = vand.u32 %v102, 4294901760
    %482 = vmatprep.subr.mxu0 %v481
    %v483 = vand.u32 %v101, 4294901760
    %484 = vmatpush1.msra.mxu0 %v483
    %485 = vmatprep.subr.mxu0 0.0
    %486 = vmatpush1.msra.mxu0 0.0
    %487 = vmatprep.subr.mxu0 0.0
    %488 = vmatpush1.msra.mxu0 0.0
    %489 = vmatprep.subr.mxu0 0.0
    %490 = vmatpush1.msra.mxu0 0.0
    %491 = vmatprep.subr.mxu0 0.0
    %492 = vmatpush1.msra.mxu0 0.0
    %493 = vmatprep.subr.mxu0 0.0
    %494 = vmatpush1.msra.mxu0 0.0
    %495 = vmatprep.subr.mxu0 0.0
    %496 = vmatpush1.msra.mxu0 0.0
    %497 = vmatprep.subr.mxu0 0.0
    %498 = vmatpush1.msra.mxu0 0.0
    %499 = vmatprep.subr.mxu0 0.0
    %500 = vmatpush1.msra.mxu0 0.0
    %501 = vmatprep.subr.mxu0 0.0
    %502 = vmatpush1.msra.mxu0 0.0
    %503 = vmatprep.subr.mxu0 0.0
    %504 = vmatpush1.msra.mxu0 0.0
    %505 = vmatprep.subr.mxu0 0.0
    %506 = vmatpush1.msra.mxu0 0.0
    %507 = vmatprep.subr.mxu0 0.0
    %508 = vmatpush1.msra.mxu0 0.0
    %509 = vmatprep.subr.mxu0 0.0
    %510 = vmatpush1.msra.mxu0 0.0
    %511 = vmatprep.subr.mxu0 0.0
    %512 = vmatpush1.msra.mxu0 0.0
    %513 = vmatprep.subr.mxu0 0.0
    %514 = vmatpush1.msra.mxu0 0.0
    %515 = vmatprep.subr.mxu0 0.0
    %516 = vmatpush1.msra.mxu0 0.0
    %517 = vmatprep.subr.mxu0 0.0
    %518 = vmatpush1.msra.mxu0 0.0
    %519 = vmatprep.subr.mxu0 0.0
    %520 = vmatpush1.msra.mxu0 0.0
    %521 = vmatprep.subr.mxu0 0.0
    %522 = vmatpush1.msra.mxu0 0.0
    %523 = vmatprep.subr.mxu0 0.0
    %524 = vmatpush1.msra.mxu0 0.0
    %525 = vmatprep.subr.mxu0 0.0
    %526 = vmatpush1.msra.mxu0 0.0
    %527 = vmatprep.subr.mxu0 0.0
    %528 = vmatpush1.msra.mxu0 0.0
    %529 = vmatprep.subr.mxu0 0.0
    %530 = vmatpush1.msra.mxu0 0.0
    %531 = vmatprep.subr.mxu0 0.0
    %532 = vmatpush1.msra.mxu0 0.0
    %533 = vmatprep.subr.mxu0 0.0
    %534 = vmatpush1.msra.mxu0 0.0
    %535 = vmatprep.subr.mxu0 0.0
    %536 = vmatpush1.msra.mxu0 0.0
    %537 = vmatprep.subr.mxu0 0.0
    %538 = vmatpush1.msra.mxu0 0.0
    %539 = vmatprep.subr.mxu0 0.0
    %540 = vmatpush1.msra.mxu0 0.0
    %541 = vmatprep.mubr.f32.mxu0 0.0
    %v542 = vand.u32 %v153, 4294901760
    %v543 = vsub.f32 %v153, %v542
    %v544 = vand.u32 %v543, 4294901760
    %545 = vmatmul.mubr.f32.gmra.mrb[0].mxu0 %v544
    %v546 = vpop.f32.mrb[0].mxu0
    %v547 = vadd.f32 %v457, %v546
    %v548 = vpop.f32.mrb[0].mxu0
    %v549 = vadd.f32 %v459, %v548
    %550 = vmatprep.mubr.f32.mxu0 0.0
    %v551 = vand.u32 %v156, 4294901760
    %v552 = vsub.f32 %v156, %v551
    %v553 = vand.u32 %v552, 4294901760
    %554 = vmatmul.mubr.f32.gmra.mrb[0].mxu0 %v553
    %v555 = vpop.f32.mrb[0].mxu0
    %v556 = vadd.f32 %v465, %v555
    %v557 = vpop.f32.mrb[0].mxu0
    %v558 = vadd.f32 %v467, %v557
    %559 = vdwg.mxu0
    %v560 = vand.u32 %v96, 4294901760
    %v561 = vsub.f32 %v96, %v560
    %v562 = vand.u32 %v561, 4294901760
    %563 = vmatprep.subr.mxu0 %v562
    %v564 = vand.u32 %v95, 4294901760
    %v565 = vsub.f32 %v95, %v564
    %v566 = vand.u32 %v565, 4294901760
    %567 = vmatpush1.msra.mxu0 %v566
    %v568 = vand.u32 %v98, 4294901760
    %v569 = vsub.f32 %v98, %v568
    %v570 = vand.u32 %v569, 4294901760
    %571 = vmatprep.subr.mxu0 %v570
    %v572 = vand.u32 %v97, 4294901760
    %v573 = vsub.f32 %v97, %v572
    %v574 = vand.u32 %v573, 4294901760
    %575 = vmatpush1.msra.mxu0 %v574
    %v576 = vand.u32 %v100, 4294901760
    %v577 = vsub.f32 %v100, %v576
    %v578 = vand.u32 %v577, 4294901760
    %579 = vmatprep.subr.mxu0 %v578
    %v580 = vand.u32 %v99, 4294901760
    %v581 = vsub.f32 %v99, %v580
    %v582 = vand.u32 %v581, 4294901760
    %583 = vmatpush1.msra.mxu0 %v582
    %v584 = vand.u32 %v102, 4294901760
    %v585 = vsub.f32 %v102, %v584
    %v586 = vand.u32 %v585, 4294901760
    %587 = vmatprep.subr.mxu0 %v586
    %v588 = vand.u32 %v101, 4294901760
    %v589 = vsub.f32 %v101, %v588
    %v590 = vand.u32 %v589, 4294901760
    %591 = vmatpush1.msra.mxu0 %v590
    %592 = vmatprep.subr.mxu0 0.0
    %593 = vmatpush1.msra.mxu0 0.0
    %594 = vmatprep.subr.mxu0 0.0
    %595 = vmatpush1.msra.mxu0 0.0
    %596 = vmatprep.subr.mxu0 0.0
    %597 = vmatpush1.msra.mxu0 0.0
    %598 = vmatprep.subr.mxu0 0.0
    %599 = vmatpush1.msra.mxu0 0.0
    %600 = vmatprep.subr.mxu0 0.0
    %601 = vmatpush1.msra.mxu0 0.0
    %602 = vmatprep.subr.mxu0 0.0
    %603 = vmatpush1.msra.mxu0 0.0
    %604 = vmatprep.subr.mxu0 0.0
    %605 = vmatpush1.msra.mxu0 0.0
    %606 = vmatprep.subr.mxu0 0.0
    %607 = vmatpush1.msra.mxu0 0.0
    %608 = vmatprep.subr.mxu0 0.0
    %609 = vmatpush1.msra.mxu0 0.0
    %610 = vmatprep.subr.mxu0 0.0
    %611 = vmatpush1.msra.mxu0 0.0
    %612 = vmatprep.subr.mxu0 0.0
    %613 = vmatpush1.msra.mxu0 0.0
    %614 = vmatprep.subr.mxu0 0.0
    %615 = vmatpush1.msra.mxu0 0.0
    %616 = vmatprep.subr.mxu0 0.0
    %617 = vmatpush1.msra.mxu0 0.0
    %618 = vmatprep.subr.mxu0 0.0
    %619 = vmatpush1.msra.mxu0 0.0
    %620 = vmatprep.subr.mxu0 0.0
    %621 = vmatpush1.msra.mxu0 0.0
    %622 = vmatprep.subr.mxu0 0.0
    %623 = vmatpush1.msra.mxu0 0.0
    %624 = vmatprep.subr.mxu0 0.0
    %625 = vmatpush1.msra.mxu0 0.0
    %626 = vmatprep.subr.mxu0 0.0
    %627 = vmatpush1.msra.mxu0 0.0
    %628 = vmatprep.subr.mxu0 0.0
    %629 = vmatpush1.msra.mxu0 0.0
    %630 = vmatprep.subr.mxu0 0.0
    %631 = vmatpush1.msra.mxu0 0.0
    %632 = vmatprep.subr.mxu0 0.0
    %633 = vmatpush1.msra.mxu0 0.0
    %634 = vmatprep.subr.mxu0 0.0
    %635 = vmatpush1.msra.mxu0 0.0
    %636 = vmatprep.subr.mxu0 0.0
    %637 = vmatpush1.msra.mxu0 0.0
    %638 = vmatprep.subr.mxu0 0.0
    %639 = vmatpush1.msra.mxu0 0.0
    %640 = vmatprep.subr.mxu0 0.0
    %641 = vmatpush1.msra.mxu0 0.0
    %642 = vmatprep.subr.mxu0 0.0
    %643 = vmatpush1.msra.mxu0 0.0
    %644 = vmatprep.subr.mxu0 0.0
    %645 = vmatpush1.msra.mxu0 0.0
    %646 = vmatprep.subr.mxu0 0.0
    %647 = vmatpush1.msra.mxu0 0.0
    %648 = vmatprep.mubr.f32.mxu0 0.0
    %v649 = vand.u32 %v153, 4294901760
    %650 = vmatmul.mubr.f32.gmra.mrb[0].mxu0 %v649
    %v651 = vpop.f32.mrb[0].mxu0
    %v652 = vadd.f32 %v547, %v651
    %v653 = vpop.f32.mrb[0].mxu0
    %v654 = vadd.f32 %v549, %v653
    %655 = vmatprep.mubr.f32.mxu0 0.0
    %v656 = vand.u32 %v156, 4294901760
    %657 = vmatmul.mubr.f32.gmra.mrb[0].mxu0 %v656
    %v658 = vpop.f32.mrb[0].mxu0
    %v659 = vadd.f32 %v556, %v658
    %v660 = vpop.f32.mrb[0].mxu0
    %v661 = vadd.f32 %v558, %v660
    %662 = vdwg.mxu0
    %v663 = vand.u32 %v96, 4294901760
    %664 = vmatprep.subr.mxu0 %v663
    %v665 = vand.u32 %v95, 4294901760
    %666 = vmatpush1.msra.mxu0 %v665
    %v667 = vand.u32 %v98, 4294901760
    %668 = vmatprep.subr.mxu0 %v667
    %v669 = vand.u32 %v97, 4294901760
    %670 = vmatpush1.msra.mxu0 %v669
    %v671 = vand.u32 %v100, 4294901760
    %672 = vmatprep.subr.mxu0 %v671
    %v673 = vand.u32 %v99, 4294901760
    %674 = vmatpush1.msra.mxu0 %v673
    %v675 = vand.u32 %v102, 4294901760
    %676 = vmatprep.subr.mxu0 %v675
    %v677 = vand.u32 %v101, 4294901760
    %678 = vmatpush1.msra.mxu0 %v677
    %679 = vmatprep.subr.mxu0 0.0
    %680 = vmatpush1.msra.mxu0 0.0
    %681 = vmatprep.subr.mxu0 0.0
    %682 = vmatpush1.msra.mxu0 0.0
    %683 = vmatprep.subr.mxu0 0.0
    %684 = vmatpush1.msra.mxu0 0.0
    %685 = vmatprep.subr.mxu0 0.0
    %686 = vmatpush1.msra.mxu0 0.0
    %687 = vmatprep.subr.mxu0 0.0
    %688 = vmatpush1.msra.mxu0 0.0
    %689 = vmatprep.subr.mxu0 0.0
    %690 = vmatpush1.msra.mxu0 0.0
    %691 = vmatprep.subr.mxu0 0.0
    %692 = vmatpush1.msra.mxu0 0.0
    %693 = vmatprep.subr.mxu0 0.0
    %694 = vmatpush1.msra.mxu0 0.0
    %695 = vmatprep.subr.mxu0 0.0
    %696 = vmatpush1.msra.mxu0 0.0
    %697 = vmatprep.subr.mxu0 0.0
    %698 = vmatpush1.msra.mxu0 0.0
    %699 = vmatprep.subr.mxu0 0.0
    %700 = vmatpush1.msra.mxu0 0.0
    %701 = vmatprep.subr.mxu0 0.0
    %702 = vmatpush1.msra.mxu0 0.0
    %703 = vmatprep.subr.mxu0 0.0
    %704 = vmatpush1.msra.mxu0 0.0
    %705 = vmatprep.subr.mxu0 0.0
    %706 = vmatpush1.msra.mxu0 0.0
    %707 = vmatprep.subr.mxu0 0.0
    %708 = vmatpush1.msra.mxu0 0.0
    %709 = vmatprep.subr.mxu0 0.0
    %710 = vmatpush1.msra.mxu0 0.0
    %711 = vmatprep.subr.mxu0 0.0
    %712 = vmatpush1.msra.mxu0 0.0
    %713 = vmatprep.subr.mxu0 0.0
    %714 = vmatpush1.msra.mxu0 0.0
    %715 = vmatprep.subr.mxu0 0.0
    %716 = vmatpush1.msra.mxu0 0.0
    %717 = vmatprep.subr.mxu0 0.0
    %718 = vmatpush1.msra.mxu0 0.0
    %719 = vmatprep.subr.mxu0 0.0
    %720 = vmatpush1.msra.mxu0 0.0
    %721 = vmatprep.subr.mxu0 0.0
    %722 = vmatpush1.msra.mxu0 0.0
    %723 = vmatprep.subr.mxu0 0.0
    %724 = vmatpush1.msra.mxu0 0.0
    %725 = vmatprep.subr.mxu0 0.0
    %726 = vmatpush1.msra.mxu0 0.0
    %727 = vmatprep.subr.mxu0 0.0
    %728 = vmatpush1.msra.mxu0 0.0
    %729 = vmatprep.subr.mxu0 0.0
    %730 = vmatpush1.msra.mxu0 0.0
    %731 = vmatprep.subr.mxu0 0.0
    %732 = vmatpush1.msra.mxu0 0.0
    %733 = vmatprep.subr.mxu0 0.0
    %734 = vmatpush1.msra.mxu0 0.0
    %735 = vmatprep.mubr.f32.mxu0 0.0
    %v736 = vand.u32 %v153, 4294901760
    %737 = vmatmul.mubr.f32.gmra.mrb[0].mxu0 %v736
    %v738 = vpop.f32.mrb[0].mxu0
    %v739 = vadd.f32 %v652, %v738
    %v740 = vpop.f32.mrb[0].mxu0
    %v741 = vadd.f32 %v654, %v740
    %742 = vmatprep.mubr.f32.mxu0 0.0
    %v743 = vand.u32 %v156, 4294901760
    %744 = vmatmul.mubr.f32.gmra.mrb[0].mxu0 %v743
    %v745 = vpop.f32.mrb[0].mxu0
    %v746 = vadd.f32 %v659, %v745
    %v747 = vpop.f32.mrb[0].mxu0
    %v748 = vadd.f32 %v661, %v747
    %749 = vdwg.mxu0
    %v750 = vld [vmem:[#allocation8] sm:$0xff]
    %v751 = vld [vmem:[#allocation8 + $0x8] sm:$0x1]
    %vm752 = vcmask 392192
    %v754 = vsel %vm752, %v750, 0
    %v757 = vsel %vm752, %v751, 0
    %v759 = vand.u32 %v138, 4294901760
    %760 = vmatprep.subr.mxu0 %v759
    %v761 = vand.u32 %v137, 4294901760
    %762 = vmatpush1.msra.mxu0 %v761
    %v763 = vand.u32 %v140, 4294901760
    %764 = vmatprep.subr.mxu0 %v763
    %v765 = vand.u32 %v139, 4294901760
    %766 = vmatpush1.msra.mxu0 %v765
    %v767 = vand.u32 %v142, 4294901760
    %768 = vmatprep.subr.mxu0 %v767
    %v769 = vand.u32 %v141, 4294901760
    %770 = vmatpush1.msra.mxu0 %v769
    %v771 = vand.u32 %v144, 4294901760
    %772 = vmatprep.subr.mxu0 %v771
    %v773 = vand.u32 %v143, 4294901760
    %774 = vmatpush1.msra.mxu0 %v773
    %v775 = vand.u32 %v146, 4294901760
    %776 = vmatprep.subr.mxu0 %v775
    %v777 = vand.u32 %v145, 4294901760
    %778 = vmatpush1.msra.mxu0 %v777
    %v779 = vand.u32 %v148, 4294901760
    %780 = vmatprep.subr.mxu0 %v779
    %v781 = vand.u32 %v147, 4294901760
    %782 = vmatpush1.msra.mxu0 %v781
    %783 = vmatprep.subr.mxu0 0.0
    %784 = vmatpush1.msra.mxu0 0.0
    %785 = vmatprep.subr.mxu0 0.0
    %786 = vmatpush1.msra.mxu0 0.0
    %787 = vmatprep.subr.mxu0 0.0
    %788 = vmatpush1.msra.mxu0 0.0
    %789 = vmatprep.subr.mxu0 0.0
    %790 = vmatpush1.msra.mxu0 0.0
    %791 = vmatprep.subr.mxu0 0.0
    %792 = vmatpush1.msra.mxu0 0.0
    %793 = vmatprep.subr.mxu0 0.0
    %794 = vmatpush1.msra.mxu0 0.0
    %795 = vmatprep.subr.mxu0 0.0
    %796 = vmatpush1.msra.mxu0 0.0
    %797 = vmatprep.subr.mxu0 0.0
    %798 = vmatpush1.msra.mxu0 0.0
    %799 = vmatprep.subr.mxu0 0.0
    %800 = vmatpush1.msra.mxu0 0.0
    %801 = vmatprep.subr.mxu0 0.0
    %802 = vmatpush1.msra.mxu0 0.0
    %803 = vmatprep.subr.mxu0 0.0
    %804 = vmatpush1.msra.mxu0 0.0
    %805 = vmatprep.subr.mxu0 0.0
    %806 = vmatpush1.msra.mxu0 0.0
    %807 = vmatprep.subr.mxu0 0.0
    %808 = vmatpush1.msra.mxu0 0.0
    %809 = vmatprep.subr.mxu0 0.0
    %810 = vmatpush1.msra.mxu0 0.0
    %811 = vmatprep.subr.mxu0 0.0
    %812 = vmatpush1.msra.mxu0 0.0
    %813 = vmatprep.subr.mxu0 0.0
    %814 = vmatpush1.msra.mxu0 0.0
    %815 = vmatprep.subr.mxu0 0.0
    %816 = vmatpush1.msra.mxu0 0.0
    %817 = vmatprep.subr.mxu0 0.0
    %818 = vmatpush1.msra.mxu0 0.0
    %819 = vmatprep.subr.mxu0 0.0
    %820 = vmatpush1.msra.mxu0 0.0
    %821 = vmatprep.subr.mxu0 0.0
    %822 = vmatpush1.msra.mxu0 0.0
    %823 = vmatprep.subr.mxu0 0.0
    %824 = vmatpush1.msra.mxu0 0.0
    %825 = vmatprep.subr.mxu0 0.0
    %826 = vmatpush1.msra.mxu0 0.0
    %827 = vmatprep.subr.mxu0 0.0
    %828 = vmatpush1.msra.mxu0 0.0
    %829 = vmatprep.subr.mxu0 0.0
    %830 = vmatpush1.msra.mxu0 0.0
    %831 = vmatprep.subr.mxu0 0.0
    %832 = vmatpush1.msra.mxu0 0.0
    %833 = vmatprep.subr.mxu0 0.0
    %834 = vmatpush1.msra.mxu0 0.0
    %835 = vmatprep.mubr.f32.mxu0 0.0
    %v836 = vand.u32 %v754, 4294901760
    %v837 = vsub.f32 %v754, %v836
    %v838 = vand.u32 %v837, 4294901760
    %v839 = vsub.f32 %v837, %v838
    %v840 = vand.u32 %v839, 4294901760
    %841 = vmatmul.mubr.f32.gmra.mrb[0].mxu0 %v840
    %v842 = vpop.f32.mrb[0].mxu0
    %v843 = vadd.f32 0.0, %v842
    %v844 = vpop.f32.mrb[0].mxu0
    %v845 = vadd.f32 0.0, %v844
    %846 = vmatprep.mubr.f32.mxu0 0.0
    %v847 = vand.u32 %v757, 4294901760
    %v848 = vsub.f32 %v757, %v847
    %v849 = vand.u32 %v848, 4294901760
    %v850 = vsub.f32 %v848, %v849
    %v851 = vand.u32 %v850, 4294901760
    %852 = vmatmul.mubr.f32.gmra.mrb[0].mxu0 %v851
    %v853 = vpop.f32.mrb[0].mxu0
    %v854 = vadd.f32 0.0, %v853
    %v855 = vpop.f32.mrb[0].mxu0
    %v856 = vadd.f32 0.0, %v855
    %857 = vdwg.mxu0
    %v858 = vand.u32 %v138, 4294901760
    %v859 = vsub.f32 %v138, %v858
    %v860 = vand.u32 %v859, 4294901760
    %v861 = vsub.f32 %v859, %v860
    %v862 = vand.u32 %v861, 4294901760
    %863 = vmatprep.subr.mxu0 %v862
    %v864 = vand.u32 %v137, 4294901760
    %v865 = vsub.f32 %v137, %v864
    %v866 = vand.u32 %v865, 4294901760
    %v867 = vsub.f32 %v865, %v866
    %v868 = vand.u32 %v867, 4294901760
    %869 = vmatpush1.msra.mxu0 %v868
    %v870 = vand.u32 %v140, 4294901760
    %v871 = vsub.f32 %v140, %v870
    %v872 = vand.u32 %v871, 4294901760
    %v873 = vsub.f32 %v871, %v872
    %v874 = vand.u32 %v873, 4294901760
    %875 = vmatprep.subr.mxu0 %v874
    %v876 = vand.u32 %v139, 4294901760
    %v877 = vsub.f32 %v139, %v876
    %v878 = vand.u32 %v877, 4294901760
    %v879 = vsub.f32 %v877, %v878
    %v880 = vand.u32 %v879, 4294901760
    %881 = vmatpush1.msra.mxu0 %v880
    %v882 = vand.u32 %v142, 4294901760
    %v883 = vsub.f32 %v142, %v882
    %v884 = vand.u32 %v883, 4294901760
    %v885 = vsub.f32 %v883, %v884
    %v886 = vand.u32 %v885, 4294901760
    %887 = vmatprep.subr.mxu0 %v886
    %v888 = vand.u32 %v141, 4294901760
    %v889 = vsub.f32 %v141, %v888
    %v890 = vand.u32 %v889, 4294901760
    %v891 = vsub.f32 %v889, %v890
    %v892 = vand.u32 %v891, 4294901760
    %893 = vmatpush1.msra.mxu0 %v892
    %v894 = vand.u32 %v144, 4294901760
    %v895 = vsub.f32 %v144, %v894
    %v896 = vand.u32 %v895, 4294901760
    %v897 = vsub.f32 %v895, %v896
    %v898 = vand.u32 %v897, 4294901760
    %899 = vmatprep.subr.mxu0 %v898
    %v900 = vand.u32 %v143, 4294901760
    %v901 = vsub.f32 %v143, %v900
    %v902 = vand.u32 %v901, 4294901760
    %v903 = vsub.f32 %v901, %v902
    %v904 = vand.u32 %v903, 4294901760
    %905 = vmatpush1.msra.mxu0 %v904
    %v906 = vand.u32 %v146, 4294901760
    %v907 = vsub.f32 %v146, %v906
    %v908 = vand.u32 %v907, 4294901760
    %v909 = vsub.f32 %v907, %v908
    %v910 = vand.u32 %v909, 4294901760
    %911 = vmatprep.subr.mxu0 %v910
    %v912 = vand.u32 %v145, 4294901760
    %v913 = vsub.f32 %v145, %v912
    %v914 = vand.u32 %v913, 4294901760
    %v915 = vsub.f32 %v913, %v914
    %v916 = vand.u32 %v915, 4294901760
    %917 = vmatpush1.msra.mxu0 %v916
    %v918 = vand.u32 %v148, 4294901760
    %v919 = vsub.f32 %v148, %v918
    %v920 = vand.u32 %v919, 4294901760
    %v921 = vsub.f32 %v919, %v920
    %v922 = vand.u32 %v921, 4294901760
    %923 = vmatprep.subr.mxu0 %v922
    %v924 = vand.u32 %v147, 4294901760
    %v925 = vsub.f32 %v147, %v924
    %v926 = vand.u32 %v925, 4294901760
    %v927 = vsub.f32 %v925, %v926
    %v928 = vand.u32 %v927, 4294901760
    %929 = vmatpush1.msra.mxu0 %v928
    %930 = vmatprep.subr.mxu0 0.0
    %931 = vmatpush1.msra.mxu0 0.0
    %932 = vmatprep.subr.mxu0 0.0
    %933 = vmatpush1.msra.mxu0 0.0
    %934 = vmatprep.subr.mxu0 0.0
    %935 = vmatpush1.msra.mxu0 0.0
    %936 = vmatprep.subr.mxu0 0.0
    %937 = vmatpush1.msra.mxu0 0.0
    %938 = vmatprep.subr.mxu0 0.0
    %939 = vmatpush1.msra.mxu0 0.0
    %940 = vmatprep.subr.mxu0 0.0
    %941 = vmatpush1.msra.mxu0 0.0
    %942 = vmatprep.subr.mxu0 0.0
    %943 = vmatpush1.msra.mxu0 0.0
    %944 = vmatprep.subr.mxu0 0.0
    %945 = vmatpush1.msra.mxu0 0.0
    %946 = vmatprep.subr.mxu0 0.0
    %947 = vmatpush1.msra.mxu0 0.0
    %948 = vmatprep.subr.mxu0 0.0
    %949 = vmatpush1.msra.mxu0 0.0
    %950 = vmatprep.subr.mxu0 0.0
    %951 = vmatpush1.msra.mxu0 0.0
    %952 = vmatprep.subr.mxu0 0.0
    %953 = vmatpush1.msra.mxu0 0.0
    %954 = vmatprep.subr.mxu0 0.0
    %955 = vmatpush1.msra.mxu0 0.0
    %956 = vmatprep.subr.mxu0 0.0
    %957 = vmatpush1.msra.mxu0 0.0
    %958 = vmatprep.subr.mxu0 0.0
    %959 = vmatpush1.msra.mxu0 0.0
    %960 = vmatprep.subr.mxu0 0.0
    %961 = vmatpush1.msra.mxu0 0.0
    %962 = vmatprep.subr.mxu0 0.0
    %963 = vmatpush1.msra.mxu0 0.0
    %964 = vmatprep.subr.mxu0 0.0
    %965 = vmatpush1.msra.mxu0 0.0
    %966 = vmatprep.subr.mxu0 0.0
    %967 = vmatpush1.msra.mxu0 0.0
    %968 = vmatprep.subr.mxu0 0.0
    %969 = vmatpush1.msra.mxu0 0.0
    %970 = vmatprep.subr.mxu0 0.0
    %971 = vmatpush1.msra.mxu0 0.0
    %972 = vmatprep.subr.mxu0 0.0
    %973 = vmatpush1.msra.mxu0 0.0
    %974 = vmatprep.subr.mxu0 0.0
    %975 = vmatpush1.msra.mxu0 0.0
    %976 = vmatprep.subr.mxu0 0.0
    %977 = vmatpush1.msra.mxu0 0.0
    %978 = vmatprep.subr.mxu0 0.0
    %979 = vmatpush1.msra.mxu0 0.0
    %980 = vmatprep.subr.mxu0 0.0
    %981 = vmatpush1.msra.mxu0 0.0
    %982 = vmatprep.mubr.f32.mxu0 0.0
    %v983 = vand.u32 %v754, 4294901760
    %984 = vmatmul.mubr.f32.gmra.mrb[0].mxu0 %v983
    %v985 = vpop.f32.mrb[0].mxu0
    %v986 = vadd.f32 %v843, %v985
    %v987 = vpop.f32.mrb[0].mxu0
    %v988 = vadd.f32 %v845, %v987
    %989 = vmatprep.mubr.f32.mxu0 0.0
    %v990 = vand.u32 %v757, 4294901760
    %991 = vmatmul.mubr.f32.gmra.mrb[0].mxu0 %v990
    %v992 = vpop.f32.mrb[0].mxu0
    %v993 = vadd.f32 %v854, %v992
    %v994 = vpop.f32.mrb[0].mxu0
    %v995 = vadd.f32 %v856, %v994
    %996 = vdwg.mxu0
    %v997 = vand.u32 %v138, 4294901760
    %v998 = vsub.f32 %v138, %v997
    %999 = vmatprep.subr.mxu0 %v998
    %v1000 = vand.u32 %v137, 4294901760
    %v1001 = vsub.f32 %v137, %v1000
    %1002 = vmatpush1.msra.mxu0 %v1001
    %v1003 = vand.u32 %v140, 4294901760
    %v1004 = vsub.f32 %v140, %v1003
    %1005 = vmatprep.subr.mxu0 %v1004
    %v1006 = vand.u32 %v139, 4294901760
    %v1007 = vsub.f32 %v139, %v1006
    %1008 = vmatpush1.msra.mxu0 %v1007
    %v1009 = vand.u32 %v142, 4294901760
    %v1010 = vsub.f32 %v142, %v1009
    %1011 = vmatprep.subr.mxu0 %v1010
    %v1012 = vand.u32 %v141, 4294901760
    %v1013 = vsub.f32 %v141, %v1012
    %1014 = vmatpush1.msra.mxu0 %v1013
    %v1015 = vand.u32 %v144, 4294901760
    %v1016 = vsub.f32 %v144, %v1015
    %1017 = vmatprep.subr.mxu0 %v1016
    %v1018 = vand.u32 %v143, 4294901760
    %v1019 = vsub.f32 %v143, %v1018
    %1020 = vmatpush1.msra.mxu0 %v1019
    %v1021 = vand.u32 %v146, 4294901760
    %v1022 = vsub.f32 %v146, %v1021
    %1023 = vmatprep.subr.mxu0 %v1022
    %v1024 = vand.u32 %v145, 4294901760
    %v1025 = vsub.f32 %v145, %v1024
    %1026 = vmatpush1.msra.mxu0 %v1025
    %v1027 = vand.u32 %v148, 4294901760
    %v1028 = vsub.f32 %v148, %v1027
    %1029 = vmatprep.subr.mxu0 %v1028
    %v1030 = vand.u32 %v147, 4294901760
    %v1031 = vsub.f32 %v147, %v1030
    %1032 = vmatpush1.msra.mxu0 %v1031
    %1033 = vmatprep.subr.mxu0 0.0
    %1034 = vmatpush1.msra.mxu0 0.0
    %1035 = vmatprep.subr.mxu0 0.0
    %1036 = vmatpush1.msra.mxu0 0.0
    %1037 = vmatprep.subr.mxu0 0.0
    %1038 = vmatpush1.msra.mxu0 0.0
    %1039 = vmatprep.subr.mxu0 0.0
    %1040 = vmatpush1.msra.mxu0 0.0
    %1041 = vmatprep.subr.mxu0 0.0
    %1042 = vmatpush1.msra.mxu0 0.0
    %1043 = vmatprep.subr.mxu0 0.0
    %1044 = vmatpush1.msra.mxu0 0.0
    %1045 = vmatprep.subr.mxu0 0.0
    %1046 = vmatpush1.msra.mxu0 0.0
    %1047 = vmatprep.subr.mxu0 0.0
    %1048 = vmatpush1.msra.mxu0 0.0
    %1049 = vmatprep.subr.mxu0 0.0
    %1050 = vmatpush1.msra.mxu0 0.0
    %1051 = vmatprep.subr.mxu0 0.0
    %1052 = vmatpush1.msra.mxu0 0.0
    %1053 = vmatprep.subr.mxu0 0.0
    %1054 = vmatpush1.msra.mxu0 0.0
    %1055 = vmatprep.subr.mxu0 0.0
    %1056 = vmatpush1.msra.mxu0 0.0
    %1057 = vmatprep.subr.mxu0 0.0
    %1058 = vmatpush1.msra.mxu0 0.0
    %1059 = vmatprep.subr.mxu0 0.0
    %1060 = vmatpush1.msra.mxu0 0.0
    %1061 = vmatprep.subr.mxu0 0.0
    %1062 = vmatpush1.msra.mxu0 0.0
    %1063 = vmatprep.subr.mxu0 0.0
    %1064 = vmatpush1.msra.mxu0 0.0
    %1065 = vmatprep.subr.mxu0 0.0
    %1066 = vmatpush1.msra.mxu0 0.0
    %1067 = vmatprep.subr.mxu0 0.0
    %1068 = vmatpush1.msra.mxu0 0.0
    %1069 = vmatprep.subr.mxu0 0.0
    %1070 = vmatpush1.msra.mxu0 0.0
    %1071 = vmatprep.subr.mxu0 0.0
    %1072 = vmatpush1.msra.mxu0 0.0
    %1073 = vmatprep.subr.mxu0 0.0
    %1074 = vmatpush1.msra.mxu0 0.0
    %1075 = vmatprep.subr.mxu0 0.0
    %1076 = vmatpush1.msra.mxu0 0.0
    %1077 = vmatprep.subr.mxu0 0.0
    %1078 = vmatpush1.msra.mxu0 0.0
    %1079 = vmatprep.subr.mxu0 0.0
    %1080 = vmatpush1.msra.mxu0 0.0
    %1081 = vmatprep.subr.mxu0 0.0
    %1082 = vmatpush1.msra.mxu0 0.0
    %1083 = vmatprep.subr.mxu0 0.0
    %1084 = vmatpush1.msra.mxu0 0.0
    %1085 = vmatprep.mubr.f32.mxu0 0.0
    %v1086 = vand.u32 %v754, 4294901760
    %v1087 = vsub.f32 %v754, %v1086
    %1088 = vmatmul.mubr.f32.gmra.mrb[0].mxu0 %v1087
    %v1089 = vpop.f32.mrb[0].mxu0
    %v1090 = vadd.f32 %v986, %v1089
    %v1091 = vpop.f32.mrb[0].mxu0
    %v1092 = vadd.f32 %v988, %v1091
    %1093 = vmatprep.mubr.f32.mxu0 0.0
    %v1094 = vand.u32 %v757, 4294901760
    %v1095 = vsub.f32 %v757, %v1094
    %1096 = vmatmul.mubr.f32.gmra.mrb[0].mxu0 %v1095
    %v1097 = vpop.f32.mrb[0].mxu0
    %v1098 = vadd.f32 %v993, %v1097
    %v1099 = vpop.f32.mrb[0].mxu0
    %v1100 = vadd.f32 %v995, %v1099
    %1101 = vdwg.mxu0
    %v1102 = vand.u32 %v138, 4294901760
    %1103 = vmatprep.subr.mxu0 %v1102
    %v1104 = vand.u32 %v137, 4294901760
    %1105 = vmatpush1.msra.mxu0 %v1104
    %v1106 = vand.u32 %v140, 4294901760
    %1107 = vmatprep.subr.mxu0 %v1106
    %v1108 = vand.u32 %v139, 4294901760
    %1109 = vmatpush1.msra.mxu0 %v1108
    %v1110 = vand.u32 %v142, 4294901760
    %1111 = vmatprep.subr.mxu0 %v1110
    %v1112 = vand.u32 %v141, 4294901760
    %1113 = vmatpush1.msra.mxu0 %v1112
    %v1114 = vand.u32 %v144, 4294901760
    %1115 = vmatprep.subr.mxu0 %v1114
    %v1116 = vand.u32 %v143, 4294901760
    %1117 = vmatpush1.msra.mxu0 %v1116
    %v1118 = vand.u32 %v146, 4294901760
    %1119 = vmatprep.subr.mxu0 %v1118
    %v1120 = vand.u32 %v145, 4294901760
    %1121 = vmatpush1.msra.mxu0 %v1120
    %v1122 = vand.u32 %v148, 4294901760
    %1123 = vmatprep.subr.mxu0 %v1122
    %v1124 = vand.u32 %v147, 4294901760
    %1125 = vmatpush1.msra.mxu0 %v1124
    %1126 = vmatprep.subr.mxu0 0.0
    %1127 = vmatpush1.msra.mxu0 0.0
    %1128 = vmatprep.subr.mxu0 0.0
    %1129 = vmatpush1.msra.mxu0 0.0
    %1130 = vmatprep.subr.mxu0 0.0
    %1131 = vmatpush1.msra.mxu0 0.0
    %1132 = vmatprep.subr.mxu0 0.0
    %1133 = vmatpush1.msra.mxu0 0.0
    %1134 = vmatprep.subr.mxu0 0.0
    %1135 = vmatpush1.msra.mxu0 0.0
    %1136 = vmatprep.subr.mxu0 0.0
    %1137 = vmatpush1.msra.mxu0 0.0
    %1138 = vmatprep.subr.mxu0 0.0
    %1139 = vmatpush1.msra.mxu0 0.0
    %1140 = vmatprep.subr.mxu0 0.0
    %1141 = vmatpush1.msra.mxu0 0.0
    %1142 = vmatprep.subr.mxu0 0.0
    %1143 = vmatpush1.msra.mxu0 0.0
    %1144 = vmatprep.subr.mxu0 0.0
    %1145 = vmatpush1.msra.mxu0 0.0
    %1146 = vmatprep.subr.mxu0 0.0
    %1147 = vmatpush1.msra.mxu0 0.0
    %1148 = vmatprep.subr.mxu0 0.0
    %1149 = vmatpush1.msra.mxu0 0.0
    %1150 = vmatprep.subr.mxu0 0.0
    %1151 = vmatpush1.msra.mxu0 0.0
    %1152 = vmatprep.subr.mxu0 0.0
    %1153 = vmatpush1.msra.mxu0 0.0
    %1154 = vmatprep.subr.mxu0 0.0
    %1155 = vmatpush1.msra.mxu0 0.0
    %1156 = vmatprep.subr.mxu0 0.0
    %1157 = vmatpush1.msra.mxu0 0.0
    %1158 = vmatprep.subr.mxu0 0.0
    %1159 = vmatpush1.msra.mxu0 0.0
    %1160 = vmatprep.subr.mxu0 0.0
    %1161 = vmatpush1.msra.mxu0 0.0
    %1162 = vmatprep.subr.mxu0 0.0
    %1163 = vmatpush1.msra.mxu0 0.0
    %1164 = vmatprep.subr.mxu0 0.0
    %1165 = vmatpush1.msra.mxu0 0.0
    %1166 = vmatprep.subr.mxu0 0.0
    %1167 = vmatpush1.msra.mxu0 0.0
    %1168 = vmatprep.subr.mxu0 0.0
    %1169 = vmatpush1.msra.mxu0 0.0
    %1170 = vmatprep.subr.mxu0 0.0
    %1171 = vmatpush1.msra.mxu0 0.0
    %1172 = vmatprep.subr.mxu0 0.0
    %1173 = vmatpush1.msra.mxu0 0.0
    %1174 = vmatprep.subr.mxu0 0.0
    %1175 = vmatpush1.msra.mxu0 0.0
    %1176 = vmatprep.subr.mxu0 0.0
    %1177 = vmatpush1.msra.mxu0 0.0
    %1178 = vmatprep.mubr.f32.mxu0 0.0
    %v1179 = vand.u32 %v754, 4294901760
    %v1180 = vsub.f32 %v754, %v1179
    %v1181 = vand.u32 %v1180, 4294901760
    %1182 = vmatmul.mubr.f32.gmra.mrb[0].mxu0 %v1181
    %v1183 = vpop.f32.mrb[0].mxu0
    %v1184 = vadd.f32 %v1090, %v1183
    %v1185 = vpop.f32.mrb[0].mxu0
    %v1186 = vadd.f32 %v1092, %v1185
    %1187 = vmatprep.mubr.f32.mxu0 0.0
    %v1188 = vand.u32 %v757, 4294901760
    %v1189 = vsub.f32 %v757, %v1188
    %v1190 = vand.u32 %v1189, 4294901760
    %1191 = vmatmul.mubr.f32.gmra.mrb[0].mxu0 %v1190
    %v1192 = vpop.f32.mrb[0].mxu0
    %v1193 = vadd.f32 %v1098, %v1192
    %v1194 = vpop.f32.mrb[0].mxu0
    %v1195 = vadd.f32 %v1100, %v1194
    %1196 = vdwg.mxu0
    %v1197 = vand.u32 %v138, 4294901760
    %v1198 = vsub.f32 %v138, %v1197
    %v1199 = vand.u32 %v1198, 4294901760
    %1200 = vmatprep.subr.mxu0 %v1199
    %v1201 = vand.u32 %v137, 4294901760
    %v1202 = vsub.f32 %v137, %v1201
    %v1203 = vand.u32 %v1202, 4294901760
    %1204 = vmatpush1.msra.mxu0 %v1203
    %v1205 = vand.u32 %v140, 4294901760
    %v1206 = vsub.f32 %v140, %v1205
    %v1207 = vand.u32 %v1206, 4294901760
    %1208 = vmatprep.subr.mxu0 %v1207
    %v1209 = vand.u32 %v139, 4294901760
    %v1210 = vsub.f32 %v139, %v1209
    %v1211 = vand.u32 %v1210, 4294901760
    %1212 = vmatpush1.msra.mxu0 %v1211
    %v1213 = vand.u32 %v142, 4294901760
    %v1214 = vsub.f32 %v142, %v1213
    %v1215 = vand.u32 %v1214, 4294901760
    %1216 = vmatprep.subr.mxu0 %v1215
    %v1217 = vand.u32 %v141, 4294901760
    %v1218 = vsub.f32 %v141, %v1217
    %v1219 = vand.u32 %v1218, 4294901760
    %1220 = vmatpush1.msra.mxu0 %v1219
    %v1221 = vand.u32 %v144, 4294901760
    %v1222 = vsub.f32 %v144, %v1221
    %v1223 = vand.u32 %v1222, 4294901760
    %1224 = vmatprep.subr.mxu0 %v1223
    %v1225 = vand.u32 %v143, 4294901760
    %v1226 = vsub.f32 %v143, %v1225
    %v1227 = vand.u32 %v1226, 4294901760
    %1228 = vmatpush1.msra.mxu0 %v1227
    %v1229 = vand.u32 %v146, 4294901760
    %v1230 = vsub.f32 %v146, %v1229
    %v1231 = vand.u32 %v1230, 4294901760
    %1232 = vmatprep.subr.mxu0 %v1231
    %v1233 = vand.u32 %v145, 4294901760
    %v1234 = vsub.f32 %v145, %v1233
    %v1235 = vand.u32 %v1234, 4294901760
    %1236 = vmatpush1.msra.mxu0 %v1235
    %v1237 = vand.u32 %v148, 4294901760
    %v1238 = vsub.f32 %v148, %v1237
    %v1239 = vand.u32 %v1238, 4294901760
    %1240 = vmatprep.subr.mxu0 %v1239
    %v1241 = vand.u32 %v147, 4294901760
    %v1242 = vsub.f32 %v147, %v1241
    %v1243 = vand.u32 %v1242, 4294901760
    %1244 = vmatpush1.msra.mxu0 %v1243
    %1245 = vmatprep.subr.mxu0 0.0
    %1246 = vmatpush1.msra.mxu0 0.0
    %1247 = vmatprep.subr.mxu0 0.0
    %1248 = vmatpush1.msra.mxu0 0.0
    %1249 = vmatprep.subr.mxu0 0.0
    %1250 = vmatpush1.msra.mxu0 0.0
    %1251 = vmatprep.subr.mxu0 0.0
    %1252 = vmatpush1.msra.mxu0 0.0
    %1253 = vmatprep.subr.mxu0 0.0
    %1254 = vmatpush1.msra.mxu0 0.0
    %1255 = vmatprep.subr.mxu0 0.0
    %1256 = vmatpush1.msra.mxu0 0.0
    %1257 = vmatprep.subr.mxu0 0.0
    %1258 = vmatpush1.msra.mxu0 0.0
    %1259 = vmatprep.subr.mxu0 0.0
    %1260 = vmatpush1.msra.mxu0 0.0
    %1261 = vmatprep.subr.mxu0 0.0
    %1262 = vmatpush1.msra.mxu0 0.0
    %1263 = vmatprep.subr.mxu0 0.0
    %1264 = vmatpush1.msra.mxu0 0.0
    %1265 = vmatprep.subr.mxu0 0.0
    %1266 = vmatpush1.msra.mxu0 0.0
    %1267 = vmatprep.subr.mxu0 0.0
    %1268 = vmatpush1.msra.mxu0 0.0
    %1269 = vmatprep.subr.mxu0 0.0
    %1270 = vmatpush1.msra.mxu0 0.0
    %1271 = vmatprep.subr.mxu0 0.0
    %1272 = vmatpush1.msra.mxu0 0.0
    %1273 = vmatprep.subr.mxu0 0.0
    %1274 = vmatpush1.msra.mxu0 0.0
    %1275 = vmatprep.subr.mxu0 0.0
    %1276 = vmatpush1.msra.mxu0 0.0
    %1277 = vmatprep.subr.mxu0 0.0
    %1278 = vmatpush1.msra.mxu0 0.0
    %1279 = vmatprep.subr.mxu0 0.0
    %1280 = vmatpush1.msra.mxu0 0.0
    %1281 = vmatprep.subr.mxu0 0.0
    %1282 = vmatpush1.msra.mxu0 0.0
    %1283 = vmatprep.subr.mxu0 0.0
    %1284 = vmatpush1.msra.mxu0 0.0
    %1285 = vmatprep.subr.mxu0 0.0
    %1286 = vmatpush1.msra.mxu0 0.0
    %1287 = vmatprep.subr.mxu0 0.0
    %1288 = vmatpush1.msra.mxu0 0.0
    %1289 = vmatprep.subr.mxu0 0.0
    %1290 = vmatpush1.msra.mxu0 0.0
    %1291 = vmatprep.subr.mxu0 0.0
    %1292 = vmatpush1.msra.mxu0 0.0
    %1293 = vmatprep.subr.mxu0 0.0
    %1294 = vmatpush1.msra.mxu0 0.0
    %1295 = vmatprep.subr.mxu0 0.0
    %1296 = vmatpush1.msra.mxu0 0.0
    %1297 = vmatprep.mubr.f32.mxu0 0.0
    %v1298 = vand.u32 %v754, 4294901760
    %1299 = vmatmul.mubr.f32.gmra.mrb[0].mxu0 %v1298
    %v1300 = vpop.f32.mrb[0].mxu0
    %v1301 = vadd.f32 %v1184, %v1300
    %v1302 = vpop.f32.mrb[0].mxu0
    %v1303 = vadd.f32 %v1186, %v1302
    %1304 = vmatprep.mubr.f32.mxu0 0.0
    %v1305 = vand.u32 %v757, 4294901760
    %1306 = vmatmul.mubr.f32.gmra.mrb[0].mxu0 %v1305
    %v1307 = vpop.f32.mrb[0].mxu0
    %v1308 = vadd.f32 %v1193, %v1307
    %v1309 = vpop.f32.mrb[0].mxu0
    %v1310 = vadd.f32 %v1195, %v1309
    %1311 = vdwg.mxu0
    %v1312 = vand.u32 %v138, 4294901760
    %1313 = vmatprep.subr.mxu0 %v1312
    %v1314 = vand.u32 %v137, 4294901760
    %1315 = vmatpush1.msra.mxu0 %v1314
    %v1316 = vand.u32 %v140, 4294901760
    %1317 = vmatprep.subr.mxu0 %v1316
    %v1318 = vand.u32 %v139, 4294901760
    %1319 = vmatpush1.msra.mxu0 %v1318
    %v1320 = vand.u32 %v142, 4294901760
    %1321 = vmatprep.subr.mxu0 %v1320
    %v1322 = vand.u32 %v141, 4294901760
    %1323 = vmatpush1.msra.mxu0 %v1322
    %v1324 = vand.u32 %v144, 4294901760
    %1325 = vmatprep.subr.mxu0 %v1324
    %v1326 = vand.u32 %v143, 4294901760
    %1327 = vmatpush1.msra.mxu0 %v1326
    %v1328 = vand.u32 %v146, 4294901760
    %1329 = vmatprep.subr.mxu0 %v1328
    %v1330 = vand.u32 %v145, 4294901760
    %1331 = vmatpush1.msra.mxu0 %v1330
    %v1332 = vand.u32 %v148, 4294901760
    %1333 = vmatprep.subr.mxu0 %v1332
    %v1334 = vand.u32 %v147, 4294901760
    %1335 = vmatpush1.msra.mxu0 %v1334
    %1336 = vmatprep.subr.mxu0 0.0
    %1337 = vmatpush1.msra.mxu0 0.0
    %1338 = vmatprep.subr.mxu0 0.0
    %1339 = vmatpush1.msra.mxu0 0.0
    %1340 = vmatprep.subr.mxu0 0.0
    %1341 = vmatpush1.msra.mxu0 0.0
    %1342 = vmatprep.subr.mxu0 0.0
    %1343 = vmatpush1.msra.mxu0 0.0
    %1344 = vmatprep.subr.mxu0 0.0
    %1345 = vmatpush1.msra.mxu0 0.0
    %1346 = vmatprep.subr.mxu0 0.0
    %1347 = vmatpush1.msra.mxu0 0.0
    %1348 = vmatprep.subr.mxu0 0.0
    %1349 = vmatpush1.msra.mxu0 0.0
    %1350 = vmatprep.subr.mxu0 0.0
    %1351 = vmatpush1.msra.mxu0 0.0
    %1352 = vmatprep.subr.mxu0 0.0
    %1353 = vmatpush1.msra.mxu0 0.0
    %1354 = vmatprep.subr.mxu0 0.0
    %1355 = vmatpush1.msra.mxu0 0.0
    %1356 = vmatprep.subr.mxu0 0.0
    %1357 = vmatpush1.msra.mxu0 0.0
    %1358 = vmatprep.subr.mxu0 0.0
    %1359 = vmatpush1.msra.mxu0 0.0
    %1360 = vmatprep.subr.mxu0 0.0
    %1361 = vmatpush1.msra.mxu0 0.0
    %1362 = vmatprep.subr.mxu0 0.0
    %1363 = vmatpush1.msra.mxu0 0.0
    %1364 = vmatprep.subr.mxu0 0.0
    %1365 = vmatpush1.msra.mxu0 0.0
    %1366 = vmatprep.subr.mxu0 0.0
    %1367 = vmatpush1.msra.mxu0 0.0
    %1368 = vmatprep.subr.mxu0 0.0
    %1369 = vmatpush1.msra.mxu0 0.0
    %1370 = vmatprep.subr.mxu0 0.0
    %1371 = vmatpush1.msra.mxu0 0.0
    %1372 = vmatprep.subr.mxu0 0.0
    %1373 = vmatpush1.msra.mxu0 0.0
    %1374 = vmatprep.subr.mxu0 0.0
    %1375 = vmatpush1.msra.mxu0 0.0
    %1376 = vmatprep.subr.mxu0 0.0
    %1377 = vmatpush1.msra.mxu0 0.0
    %1378 = vmatprep.subr.mxu0 0.0
    %1379 = vmatpush1.msra.mxu0 0.0
    %1380 = vmatprep.subr.mxu0 0.0
    %1381 = vmatpush1.msra.mxu0 0.0
    %1382 = vmatprep.subr.mxu0 0.0
    %1383 = vmatpush1.msra.mxu0 0.0
    %1384 = vmatprep.subr.mxu0 0.0
    %1385 = vmatpush1.msra.mxu0 0.0
    %1386 = vmatprep.subr.mxu0 0.0
    %1387 = vmatpush1.msra.mxu0 0.0
    %1388 = vmatprep.mubr.f32.mxu0 0.0
    %v1389 = vand.u32 %v754, 4294901760
    %1390 = vmatmul.mubr.f32.gmra.mrb[0].mxu0 %v1389
    %v1391 = vpop.f32.mrb[0].mxu0
    %v1392 = vadd.f32 %v1301, %v1391
    %v1393 = vpop.f32.mrb[0].mxu0
    %v1394 = vadd.f32 %v1303, %v1393
    %1395 = vmatprep.mubr.f32.mxu0 0.0
    %v1396 = vand.u32 %v757, 4294901760
    %1397 = vmatmul.mubr.f32.gmra.mrb[0].mxu0 %v1396
    %v1398 = vpop.f32.mrb[0].mxu0
    %v1399 = vadd.f32 %v1308, %v1398
    %v1400 = vpop.f32.mrb[0].mxu0
    %v1401 = vadd.f32 %v1310, %v1400
    %1402 = vdwg.mxu0
    %1403 = vst [vmem:[#allocation10] sm:$0xff] %v739
    %1404 = vst [vmem:[#allocation10 + $0x8] sm:$0xff] %v741
    %1405 = vst [vmem:[#allocation12] sm:$0xff] %v1392
    %1406 = vst [vmem:[#allocation12 + $0x8] sm:$0xff] %v1394
    %v1407 = vadd.f32 %v746, %v1399
    %v1408 = vadd.f32 %v748, %v1401
    %v1409 = vld [vmem:[#allocation2] sm:$0x1]
    %1411 = vset.pattern.permute.xlu0 0
    %1412 = vperm.xlu0 %1411, %v1409
    %v1413 = vpop.permute.xlu0 %1412
    %v1415 = vlaneseq
    %v1416 = vshrl.u32 %v1415, 7
    %v1417 = vsub.s32 0, %v1416
    %v1418 = vrot.slane %v1413, %v1417
    %v1419 = vadd.f32 %v1407, %v1418
    %v1420 = vadd.f32 %v1408, %v1418
    %v1423 = vcombine.low %v1419, %v1420
    %v1425 = vunpack.c.l.s4 1966171168
    %v1426 = vunpack.c.0.s8 %v1425
    %v1427 = vlaneseq
    %v1428 = vshrl.u32 %v1427, 7
    %v1429 = vsub.s32 %v1426, %v1428
    %v1430 = vrot.slane %v1423, %v1429
    %v1432 = vunpack.c.l.s4 1966171168
    %v1433 = vunpack.c.0.s8 %v1432
    %v1434 = vlaneseq
    %v1435 = vshrl.u32 %v1434, 7
    %v1436 = vsub.s32 %v1433, %v1435
    %v1437 = vrot.slane %v1430, %v1436
    %v1439 = vlaneseq
    %vm1440 = vcmp.ge.s32.totalorder %v1439, 0
    %vm1441 = vcmp.lt.s32.totalorder %v1439, 256
    %vm1442 = vmand %vm1440, %vm1441
    %1443 = vst.msk [vmem:[#allocation9] sm:$0x3] %vm1442, %v1437
    // Predicated region
    $region30: #{tpu_custom_call.1} parent=1 // pred_check
      _
    $region31: #{tpu_custom_call.1} parent=1 // pred_check_branch
      %1445 = sbr.rel (0) target = $region33
    $region32: #{tpu_custom_call.1} parent=1 // pred_region
      %s1447 = ssub.s32 32, 32
      %1448 = vsyncadd [#allocation5], %s1447
      %s1450 = sshll.u32 [#allocation9], 4
      %s1451 = int_to_ptr.vmem [resolvable:$true] %s1450
      %1453 = dma.vmem_to_hbm [thread:$0]  %s1451, 32, %s4, [#allocation5]
    $region33: #{tpu_custom_call.1} parent=1 // pred_fallthru
      _
    // Predicated region
    $region34: #{tpu_custom_call.1} parent=1 // pred_check
      _
    $region35: #{tpu_custom_call.1} parent=1 // pred_check_branch
      %1455 = sbr.rel (0) target = $region37
    $region36: #{tpu_custom_call.1} parent=1 // pred_region
      %s1457 = ssub.s32 256, 256
      %1458 = vsyncadd [#allocation11], %s1457
      %s1460 = sshll.u32 [#allocation10], 4
      %s1461 = int_to_ptr.vmem [resolvable:$true] %s1460
      %1463 = dma.vmem_to_hbm [thread:$0]  %s1461, 256, %s5, [#allocation11]
    $region37: #{tpu_custom_call.1} parent=1 // pred_fallthru
      _
    // Predicated region
    $region38: #{tpu_custom_call.1} parent=1 // pred_check
      _
    $region39: #{tpu_custom_call.1} parent=1 // pred_check_branch
      %1465 = sbr.rel (0) target = $region41
    $region40: #{tpu_custom_call.1} parent=1 // pred_region
      %s1467 = ssub.s32 256, 256
      %1468 = vsyncadd [#allocation11], %s1467
      %s1470 = sshll.u32 [#allocation12], 4
      %s1471 = int_to_ptr.vmem [resolvable:$true] %s1470
      %1473 = dma.vmem_to_hbm [thread:$0]  %s1471, 256, %s6, [#allocation11]
    $region41: #{tpu_custom_call.1} parent=1 // pred_fallthru
      _
    // Predicated region
    $region42: #{tpu_custom_call.1} parent=1 // pred_check
      _
    $region43: #{tpu_custom_call.1} parent=1 // pred_check_branch
      %1475 = sbr.rel (0) target = $region45
    $region44: #{tpu_custom_call.1} parent=1 // pred_region
      %1476 = dma.done [#allocation5], 32
    $region45: #{tpu_custom_call.1} parent=1 // pred_fallthru
      _
    // Predicated region
    $region46: #{tpu_custom_call.1} parent=1 // pred_check
      _
    $region47: #{tpu_custom_call.1} parent=1 // pred_check_branch
      %1478 = sbr.rel (0) target = $region49
    $region48: #{tpu_custom_call.1} parent=1 // pred_region
      %1479 = dma.done [#allocation11], 256
    $region49: #{tpu_custom_call.1} parent=1 // pred_fallthru
      _
    // Predicated region
    $region50: #{tpu_custom_call.1} parent=1 // pred_check
      _
    $region51: #{tpu_custom_call.1} parent=1 // pred_check_branch
      %1481 = sbr.rel (0) target = $region53
    $region52: #{tpu_custom_call.1} parent=1 // pred_region
      %1482 = dma.done [#allocation11], 256
    $region53: #{tpu_custom_call.1} parent=1 // pred_fallthru
      _
    %1483 = vsyncpa [#allocation4], 1
    %1484 = vsyncpa [#allocation7], 1
    %1485 = vsyncpa [#allocation5], 1
    %1486 = vsyncpa [#allocation11], 1

// kernel: tpu_custom_call.1
$region0: #{tpu_custom_call.1}
  #allocation0 [shape = 'u32[]', space=smem, size = 0x4, offset = 0x4, fixed_abs, tag = 'smem constant byte address 0x4 - core index']
  #allocation1 [shape = 'u32[144,128]{1,0:T(1,128)}', space=vmem, size = 0x12000, scoped, tag = 'internal scratch']
  #allocation2 [shape = 'f32[1,1]{1,0:T(1,128)S(1)}', space=vmem, size = 0x200, scoped, tag = 'scoped memory for tpu_custom_call.1']
  %s0 = inlined_call_operand.hbm [shape: s32[2,256], index: 0, kind: input, shape index: {}]
  %s1 = inlined_call_operand.hbm [shape: f32[9,32], index: 1, kind: input, shape index: {}]
  %s2 = inlined_call_operand.hbm [shape: f32[9,48], index: 2, kind: input, shape index: {}]
  %s3 = inlined_call_operand.<no memory space> [shape: f32[1,1], index: 3, kind: input, shape index: {}]
  %s4 = inlined_call_operand.hbm [shape: f32[1,256], index: 4, kind: output, shape index: {0}]
  %s5 = inlined_call_operand.hbm [shape: f32[8,256], index: 5, kind: output, shape index: {1}]
  %s6 = inlined_call_operand.hbm [shape: f32[8,256], index: 6, kind: output, shape index: {2}]
  %7 = xla_tuple %s4, %s5, %s6
  %s8 = sld [smem:[#allocation0]]
  $region54: #{tpu_custom_call.1} parent=0
    _
  %s10 = ssub.s32 1, %s8
  %s11 = scalar_select 0, %s10, %s8
  %v12 = vstv %s3
  %13 = vst [vmem:[#allocation2] sm:$0x1] %v12
  $region1: #{tpu_custom_call.1} parent=0
    #allocation3 [shape = 'u8[2048]{0}', space=vmem, size = 0x800, scoped, tag = 'input window, operand 0, single buffered']
    #allocation4 [shape = 's32[1]{0}', space=sflag, size = 0x4, scoped, tag = 'scoped memory for tpu_custom_call.1']
    #allocation5 [shape = 's32[1]{0}', space=sflag, size = 0x4, scoped, tag = 'scoped memory for tpu_custom_call.1']
    #allocation6 [shape = 'u8[8192]{0}', space=vmem, size = 0x2000, scoped, tag = 'input window, operand 1, single buffered']
    #allocation7 [shape = 's32[1]{0}', space=sflag, size = 0x4, scoped, tag = 'scoped memory for tpu_custom_call.1']
    #allocation8 [shape = 'u8[8192]{0}', space=vmem, size = 0x2000, scoped, tag = 'input window, operand 2, single buffered']
    #allocation9 [shape = 'u8[1024]{0}', space=vmem, size = 0x400, scoped, tag = 'output window, operand 0, single buffered']
    #allocation10 [shape = 'u8[8192]{0}', space=vmem, size = 0x2000, scoped, tag = 'output window, operand 1, single buffered']
    #allocation11 [shape = 's32[1]{0}', space=sflag, size = 0x4, scoped, tag = 'scoped memory for tpu_custom_call.1']
    #allocation12 [shape = 'u8[8192]{0}', space=vmem, size = 0x2000, scoped, tag = 'output window, operand 2, single buffered']
    %14 = vsyncpa [#allocation4], 0
    %15 = vsyncpa [#allocation7], 0
    %16 = vsyncpa [#allocation5], 0
    %17 = vsyncpa [#allocation11], 0
    // Predicated region
    $region2: #{tpu_custom_call.1} parent=1 // pred_check
      _
    $region3: #{tpu_custom_call.1} parent=1 // pred_check_branch
      %19 = sbr.rel (0) target = $region5
    $region4: #{tpu_custom_call.1} parent=1 // pred_region
      %s21 = ssub.s32 64, 64
      %22 = vsyncadd [#allocation4], %s21
      %s24 = sshll.u32 [#allocation3], 4
      %s25 = int_to_ptr.vmem [resolvable:$true] %s24
      %27 = dma.hbm_to_vmem [thread:$0]  %s0, 64, %s25, [#allocation4]
    $region5: #{tpu_custom_call.1} parent=1 // pred_fallthru
      _
    // Predicated region
    $region6: #{tpu_custom_call.1} parent=1 // pred_check
      _
    $region7: #{tpu_custom_call.1} parent=1 // pred_check_branch
      %29 = sbr.rel (0) target = $region9
    $region8: #{tpu_custom_call.1} parent=1 // pred_region
      %s31 = ssub.s32 256, 256
      %32 = vsyncadd [#allocation7], %s31
      %s33 = sshll.u32 [#allocation6], 4
      %s34 = int_to_ptr.vmem [resolvable:$true] %s33
      %39 = dma.hbm_to_vmem [thread:$0]  %s1, 256, %s34, [#allocation7], 128, 128, 8
    $region9: #{tpu_custom_call.1} parent=1 // pred_fallthru
      _
    // Predicated region
    $region10: #{tpu_custom_call.1} parent=1 // pred_check
      _
    $region11: #{tpu_custom_call.1} parent=1 // pred_check_branch
      %41 = sbr.rel (0) target = $region13
    $region12: #{tpu_custom_call.1} parent=1 // pred_region
      %s43 = ssub.s32 256, 256
      %44 = vsyncadd [#allocation7], %s43
      %s45 = sshll.u32 [#allocation8], 4
      %s46 = int_to_ptr.vmem [resolvable:$true] %s45
      %51 = dma.hbm_to_vmem [thread:$0]  %s2, 256, %s46, [#allocation7], 128, 128, 8
    $region13: #{tpu_custom_call.1} parent=1 // pred_fallthru
      _
    // Predicated region
    $region14: #{tpu_custom_call.1} parent=1 // pred_check
      _
    $region15: #{tpu_custom_call.1} parent=1 // pred_check_branch
      %53 = sbr.rel (0) target = $region17
    $region16: #{tpu_custom_call.1} parent=1 // pred_region
      _
    $region17: #{tpu_custom_call.1} parent=1 // pred_fallthru
      _
    // Predicated region
    $region18: #{tpu_custom_call.1} parent=1 // pred_check
      _
    $region19: #{tpu_custom_call.1} parent=1 // pred_check_branch
      %55 = sbr.rel (0) target = $region21
    $region20: #{tpu_custom_call.1} parent=1 // pred_region
      %56 = dma.done [#allocation4], 64
    $region21: #{tpu_custom_call.1} parent=1 // pred_fallthru
      _
    // Predicated region
    $region22: #{tpu_custom_call.1} parent=1 // pred_check
      _
    $region23: #{tpu_custom_call.1} parent=1 // pred_check_branch
      %58 = sbr.rel (0) target = $region25
    $region24: #{tpu_custom_call.1} parent=1 // pred_region
      %59 = dma.done [#allocation7], 256
    $region25: #{tpu_custom_call.1} parent=1 // pred_fallthru
      _
    // Predicated region
    $region26: #{tpu_custom_call.1} parent=1 // pred_check
      _
    $region27: #{tpu_custom_call.1} parent=1 // pred_check_branch
      %61 = sbr.rel (0) target = $region29
    $region28: #{tpu_custom_call.1} parent=1 // pred_region
      %62 = dma.done [#allocation7], 256
    $region29: #{tpu_custom_call.1} parent=1 // pred_fallthru
      _
    %v63 = vld [vmem:[#allocation3] ss:$2 sm:$0x3]
    %s64 = scalar_lea.vmem [#allocation3], 1
    %v65 = vld [vmem:[%s64] ss:$2 sm:$0x3]
    %v66 = vlaneseq
    %v67 = vshrl.u32 %v66, 7
    %v68 = vadd.s32 %v67, 8
    %v69 = vadd.s32 %v67, 16
    %v70 = vadd.s32 %v67, 24
    %v71 = vlaneseq
    %v72 = vshrl.u32 %v71, 7
    %v73 = vsub.s32 0, %v72
    %v74 = vrot.slane %v63, %v73
    %v75 = vlaneseq
    %v76 = vshrl.u32 %v75, 7
    %v77 = vsub.s32 1, %v76
    %v78 = vrot.slane %v63, %v77
    %vm79 = vcmp.eq.s32.totalorder %v67, %v74
    %vm80 = vcmp.eq.s32.totalorder %v67, %v78
    %vm81 = vcmp.eq.s32.totalorder %v68, %v74
    %vm82 = vcmp.eq.s32.totalorder %v68, %v78
    %vm83 = vcmp.eq.s32.totalorder %v69, %v74
    %vm84 = vcmp.eq.s32.totalorder %v69, %v78
    %vm85 = vcmp.eq.s32.totalorder %v70, %v74
    %vm86 = vcmp.eq.s32.totalorder %v70, %v78
    %v87 = vsel %vm79, 1, 0
    %v88 = vsel %vm80, 1, 0
    %v89 = vsel %vm81, 1, 0
    %v90 = vsel %vm82, 1, 0
    %v91 = vsel %vm83, 1, 0
    %v92 = vsel %vm84, 1, 0
    %v93 = vsel %vm85, 1, 0
    %v94 = vsel %vm86, 1, 0
    %v95 = vcvt.s32.f32 %v87
    %v96 = vcvt.s32.f32 %v88
    %v97 = vcvt.s32.f32 %v89
    %v98 = vcvt.s32.f32 %v90
    %v99 = vcvt.s32.f32 %v91
    %v100 = vcvt.s32.f32 %v92
    %v101 = vcvt.s32.f32 %v93
    %v102 = vcvt.s32.f32 %v94
    %v103 = vadd.s32 %v67, 32
    %v104 = vadd.s32 %v67, 40
    %v105 = vlaneseq
    %v106 = vshrl.u32 %v105, 7
    %v107 = vsub.s32 0, %v106
    %v108 = vrot.slane %v65, %v107
    %v109 = vlaneseq
    %v110 = vshrl.u32 %v109, 7
    %v111 = vsub.s32 1, %v110
    %v112 = vrot.slane %v65, %v111
    %vm113 = vcmp.eq.s32.totalorder %v67, %v108
    %vm114 = vcmp.eq.s32.totalorder %v67, %v112
    %vm115 = vcmp.eq.s32.totalorder %v68, %v108
    %vm116 = vcmp.eq.s32.totalorder %v68, %v112
    %vm117 = vcmp.eq.s32.totalorder %v69, %v108
    %vm118 = vcmp.eq.s32.totalorder %v69, %v112
    %vm119 = vcmp.eq.s32.totalorder %v70, %v108
    %vm120 = vcmp.eq.s32.totalorder %v70, %v112
    %vm121 = vcmp.eq.s32.totalorder %v103, %v108
    %vm122 = vcmp.eq.s32.totalorder %v103, %v112
    %vm123 = vcmp.eq.s32.totalorder %v104, %v108
    %vm124 = vcmp.eq.s32.totalorder %v104, %v112
    %v125 = vsel %vm113, 1, 0
    %v126 = vsel %vm114, 1, 0
    %v127 = vsel %vm115, 1, 0
    %v128 = vsel %vm116, 1, 0
    %v129 = vsel %vm117, 1, 0
    %v130 = vsel %vm118, 1, 0
    %v131 = vsel %vm119, 1, 0
    %v132 = vsel %vm120, 1, 0
    %v133 = vsel %vm121, 1, 0
    %v134 = vsel %vm122, 1, 0
    %v135 = vsel %vm123, 1, 0
    %v136 = vsel %vm124, 1, 0
    %v137 = vcvt.s32.f32 %v125
    %v138 = vcvt.s32.f32 %v126
    %v139 = vcvt.s32.f32 %v127
    %v140 = vcvt.s32.f32 %v128
    %v141 = vcvt.s32.f32 %v129
    %v142 = vcvt.s32.f32 %v130
    %v143 = vcvt.s32.f32 %v131
    %v144 = vcvt.s32.f32 %v132
    %v145 = vcvt.s32.f32 %v133
    %v146 = vcvt.s32.f32 %v134
    %v147 = vcvt.s32.f32 %v135
    %v148 = vcvt.s32.f32 %v136
    %v149 = vld [vmem:[#allocation6] sm:$0xff]
    %v150 = vld [vmem:[#allocation6 + $0x8] sm:$0x1]
    %vm151 = vcmask 261120
    %v153 = vsel %vm151, %v149, 0
    %v156 = vsel %vm151, %v150, 0
    %v158 = vand.u32 %v96, 4294901760
    %159 = vmatprep.subr.mxu0 %v158
    %v160 = vand.u32 %v95, 4294901760
    %161 = vmatpush1.msra.mxu0 %v160
    %v162 = vand.u32 %v98, 4294901760
    %163 = vmatprep.subr.mxu0 %v162
    %v164 = vand.u32 %v97, 4294901760
    %165 = vmatpush1.msra.mxu0 %v164
    %v166 = vand.u32 %v100, 4294901760
    %167 = vmatprep.subr.mxu0 %v166
    %v168 = vand.u32 %v99, 4294901760
    %169 = vmatpush1.msra.mxu0 %v168
    %v170 = vand.u32 %v102, 4294901760
    %171 = vmatprep.subr.mxu0 %v170
    %v172 = vand.u32 %v101, 4294901760
    %173 = vmatpush1.msra.mxu0 %v172
    %174 = vmatprep.subr.mxu0 0.0
    %175 = vmatpush1.msra.mxu0 0.0
    %176 = vmatprep.subr.mxu0 0.0
    %177 = vmatpush1.msra.mxu0 0.0
    %178 = vmatprep.subr.mxu0 0.0
    %179 = vmatpush1.msra.mxu0 0.0
    %180 = vmatprep.subr.mxu0 0.0
    %181 = vmatpush1.msra.mxu0 0.0
    %182 = vmatprep.subr.mxu0 0.0
    %183 = vmatpush1.msra.mxu0 0.0
    %184 = vmatprep.subr.mxu0 0.0
    %185 = vmatpush1.msra.mxu0 0.0
    %186 = vmatprep.subr.mxu0 0.0
    %187 = vmatpush1.msra.mxu0 0.0
    %188 = vmatprep.subr.mxu0 0.0
    %189 = vmatpush1.msra.mxu0 0.0
    %190 = vmatprep.subr.mxu0 0.0
    %191 = vmatpush1.msra.mxu0 0.0
    %192 = vmatprep.subr.mxu0 0.0
    %193 = vmatpush1.msra.mxu0 0.0
    %194 = vmatprep.subr.mxu0 0.0
    %195 = vmatpush1.msra.mxu0 0.0
    %196 = vmatprep.subr.mxu0 0.0
    %197 = vmatpush1.msra.mxu0 0.0
    %198 = vmatprep.subr.mxu0 0.0
    %199 = vmatpush1.msra.mxu0 0.0
    %200 = vmatprep.subr.mxu0 0.0
    %201 = vmatpush1.msra.mxu0 0.0
    %202 = vmatprep.subr.mxu0 0.0
    %203 = vmatpush1.msra.mxu0 0.0
    %204 = vmatprep.subr.mxu0 0.0
    %205 = vmatpush1.msra.mxu0 0.0
    %206 = vmatprep.subr.mxu0 0.0
    %207 = vmatpush1.msra.mxu0 0.0
    %208 = vmatprep.subr.mxu0 0.0
    %209 = vmatpush1.msra.mxu0 0.0
    %210 = vmatprep.subr.mxu0 0.0
    %211 = vmatpush1.msra.mxu0 0.0
    %212 = vmatprep.subr.mxu0 0.0
    %213 = vmatpush1.msra.mxu0 0.0
    %214 = vmatprep.subr.mxu0 0.0
    %215 = vmatpush1.msra.mxu0 0.0
    %216 = vmatprep.subr.mxu0 0.0
    %217 = vmatpush1.msra.mxu0 0.0
    %218 = vmatprep.subr.mxu0 0.0
    %219 = vmatpush1.msra.mxu0 0.0
    %220 = vmatprep.subr.mxu0 0.0
    %221 = vmatpush1.msra.mxu0 0.0
    %222 = vmatprep.subr.mxu0 0.0
    %223 = vmatpush1.msra.mxu0 0.0
    %224 = vmatprep.subr.mxu0 0.0
    %225 = vmatpush1.msra.mxu0 0.0
    %226 = vmatprep.subr.mxu0 0.0
    %227 = vmatpush1.msra.mxu0 0.0
    %228 = vmatprep.subr.mxu0 0.0
    %229 = vmatpush1.msra.mxu0 0.0
    %230 = vmatprep.mubr.f32.mxu0 0.0
    %v231 = vand.u32 %v153, 4294901760
    %v232 = vsub.f32 %v153, %v231
    %v233 = vand.u32 %v232, 4294901760
    %v234 = vsub.f32 %v232, %v233
    %v235 = vand.u32 %v234, 4294901760
    %236 = vmatmul.mubr.f32.gmra.mrb[0].mxu0 %v235
    %v237 = vpop.f32.mrb[0].mxu0
    %v238 = vadd.f32 0.0, %v237
    %v239 = vpop.f32.mrb[0].mxu0
    %v240 = vadd.f32 0.0, %v239
    %241 = vmatprep.mubr.f32.mxu0 0.0
    %v242 = vand.u32 %v156, 4294901760
    %v243 = vsub.f32 %v156, %v242
    %v244 = vand.u32 %v243, 4294901760
    %v245 = vsub.f32 %v243, %v244
    %v246 = vand.u32 %v245, 4294901760
    %247 = vmatmul.mubr.f32.gmra.mrb[0].mxu0 %v246
    %v248 = vpop.f32.mrb[0].mxu0
    %v249 = vadd.f32 0.0, %v248
    %v250 = vpop.f32.mrb[0].mxu0
    %v251 = vadd.f32 0.0, %v250
    %252 = vdwg.mxu0
    %v253 = vand.u32 %v96, 4294901760
    %v254 = vsub.f32 %v96, %v253
    %v255 = vand.u32 %v254, 4294901760
    %v256 = vsub.f32 %v254, %v255
    %v257 = vand.u32 %v256, 4294901760
    %258 = vmatprep.subr.mxu0 %v257
    %v259 = vand.u32 %v95, 4294901760
    %v260 = vsub.f32 %v95, %v259
    %v261 = vand.u32 %v260, 4294901760
    %v262 = vsub.f32 %v260, %v261
    %v263 = vand.u32 %v262, 4294901760
    %264 = vmatpush1.msra.mxu0 %v263
    %v265 = vand.u32 %v98, 4294901760
    %v266 = vsub.f32 %v98, %v265
    %v267 = vand.u32 %v266, 4294901760
    %v268 = vsub.f32 %v266, %v267
    %v269 = vand.u32 %v268, 4294901760
    %270 = vmatprep.subr.mxu0 %v269
    %v271 = vand.u32 %v97, 4294901760
    %v272 = vsub.f32 %v97, %v271
    %v273 = vand.u32 %v272, 4294901760
    %v274 = vsub.f32 %v272, %v273
    %v275 = vand.u32 %v274, 4294901760
    %276 = vmatpush1.msra.mxu0 %v275
    %v277 = vand.u32 %v100, 4294901760
    %v278 = vsub.f32 %v100, %v277
    %v279 = vand.u32 %v278, 4294901760
    %v280 = vsub.f32 %v278, %v279
    %v281 = vand.u32 %v280, 4294901760
    %282 = vmatprep.subr.mxu0 %v281
    %v283 = vand.u32 %v99, 4294901760
    %v284 = vsub.f32 %v99, %v283
    %v285 = vand.u32 %v284, 4294901760
    %v286 = vsub.f32 %v284, %v285
    %v287 = vand.u32 %v286, 4294901760
    %288 = vmatpush1.msra.mxu0 %v287
    %v289 = vand.u32 %v102, 4294901760
    %v290 = vsub.f32 %v102, %v289
    %v291 = vand.u32 %v290, 4294901760
    %v292 = vsub.f32 %v290, %v291
    %v293 = vand.u32 %v292, 4294901760
    %294 = vmatprep.subr.mxu0 %v293
    %v295 = vand.u32 %v101, 4294901760
    %v296 = vsub.f32 %v101, %v295
    %v297 = vand.u32 %v296, 4294901760
    %v298 = vsub.f32 %v296, %v297
    %v299 = vand.u32 %v298, 4294901760
    %300 = vmatpush1.msra.mxu0 %v299
    %301 = vmatprep.subr.mxu0 0.0
    %302 = vmatpush1.msra.mxu0 0.0
    %303 = vmatprep.subr.mxu0 0.0
    %304 = vmatpush1.msra.mxu0 0.0
    %305 = vmatprep.subr.mxu0 0.0
    %306 = vmatpush1.msra.mxu0 0.0
    %307 = vmatprep.subr.mxu0 0.0
    %308 = vmatpush1.msra.mxu0 0.0
    %309 = vmatprep.subr.mxu0 0.0
    %310 = vmatpush1.msra.mxu0 0.0
    %311 = vmatprep.subr.mxu0 0.0
    %312 = vmatpush1.msra.mxu0 0.0
    %313 = vmatprep.subr.mxu0 0.0
    %314 = vmatpush1.msra.mxu0 0.0
    %315 = vmatprep.subr.mxu0 0.0
    %316 = vmatpush1.msra.mxu0 0.0
    %317 = vmatprep.subr.mxu0 0.0
    %318 = vmatpush1.msra.mxu0 0.0
    %319 = vmatprep.subr.mxu0 0.0
    %320 = vmatpush1.msra.mxu0 0.0
    %321 = vmatprep.subr.mxu0 0.0
    %322 = vmatpush1.msra.mxu0 0.0
    %323 = vmatprep.subr.mxu0 0.0
    %324 = vmatpush1.msra.mxu0 0.0
    %325 = vmatprep.subr.mxu0 0.0
    %326 = vmatpush1.msra.mxu0 0.0
    %327 = vmatprep.subr.mxu0 0.0
    %328 = vmatpush1.msra.mxu0 0.0
    %329 = vmatprep.subr.mxu0 0.0
    %330 = vmatpush1.msra.mxu0 0.0
    %331 = vmatprep.subr.mxu0 0.0
    %332 = vmatpush1.msra.mxu0 0.0
    %333 = vmatprep.subr.mxu0 0.0
    %334 = vmatpush1.msra.mxu0 0.0
    %335 = vmatprep.subr.mxu0 0.0
    %336 = vmatpush1.msra.mxu0 0.0
    %337 = vmatprep.subr.mxu0 0.0
    %338 = vmatpush1.msra.mxu0 0.0
    %339 = vmatprep.subr.mxu0 0.0
    %340 = vmatpush1.msra.mxu0 0.0
    %341 = vmatprep.subr.mxu0 0.0
    %342 = vmatpush1.msra.mxu0 0.0
    %343 = vmatprep.subr.mxu0 0.0
    %344 = vmatpush1.msra.mxu0 0.0
    %345 = vmatprep.subr.mxu0 0.0
    %346 = vmatpush1.msra.mxu0 0.0
    %347 = vmatprep.subr.mxu0 0.0
    %348 = vmatpush1.msra.mxu0 0.0
    %349 = vmatprep.subr.mxu0 0.0
    %350 = vmatpush1.msra.mxu0 0.0
    %351 = vmatprep.subr.mxu0 0.0
    %352 = vmatpush1.msra.mxu0 0.0
    %353 = vmatprep.subr.mxu0 0.0
    %354 = vmatpush1.msra.mxu0 0.0
    %355 = vmatprep.subr.mxu0 0.0
    %356 = vmatpush1.msra.mxu0 0.0
    %357 = vmatprep.mubr.f32.mxu0 0.0
    %v358 = vand.u32 %v153, 4294901760
    %359 = vmatmul.mubr.f32.gmra.mrb[0].mxu0 %v358
    %v360 = vpop.f32.mrb[0].mxu0
    %v361 = vadd.f32 %v238, %v360
    %v362 = vpop.f32.mrb[0].mxu0
    %v363 = vadd.f32 %v240, %v362
    %364 = vmatprep.mubr.f32.mxu0 0.0
    %v365 = vand.u32 %v156, 4294901760
    %366 = vmatmul.mubr.f32.gmra.mrb[0].mxu0 %v365
    %v367 = vpop.f32.mrb[0].mxu0
    %v368 = vadd.f32 %v249, %v367
    %v369 = vpop.f32.mrb[0].mxu0
    %v370 = vadd.f32 %v251, %v369
    %371 = vdwg.mxu0
    %v372 = vand.u32 %v96, 4294901760
    %v373 = vsub.f32 %v96, %v372
    %374 = vmatprep.subr.mxu0 %v373
    %v375 = vand.u32 %v95, 4294901760
    %v376 = vsub.f32 %v95, %v375
    %377 = vmatpush1.msra.mxu0 %v376
    %v378 = vand.u32 %v98, 4294901760
    %v379 = vsub.f32 %v98, %v378
    %380 = vmatprep.subr.mxu0 %v379
    %v381 = vand.u32 %v97, 4294901760
    %v382 = vsub.f32 %v97, %v381
    %383 = vmatpush1.msra.mxu0 %v382
    %v384 = vand.u32 %v100, 4294901760
    %v385 = vsub.f32 %v100, %v384
    %386 = vmatprep.subr.mxu0 %v385
    %v387 = vand.u32 %v99, 4294901760
    %v388 = vsub.f32 %v99, %v387
    %389 = vmatpush1.msra.mxu0 %v388
    %v390 = vand.u32 %v102, 4294901760
    %v391 = vsub.f32 %v102, %v390
    %392 = vmatprep.subr.mxu0 %v391
    %v393 = vand.u32 %v101, 4294901760
    %v394 = vsub.f32 %v101, %v393
    %395 = vmatpush1.msra.mxu0 %v394
    %396 = vmatprep.subr.mxu0 0.0
    %397 = vmatpush1.msra.mxu0 0.0
    %398 = vmatprep.subr.mxu0 0.0
    %399 = vmatpush1.msra.mxu0 0.0
    %400 = vmatprep.subr.mxu0 0.0
    %401 = vmatpush1.msra.mxu0 0.0
    %402 = vmatprep.subr.mxu0 0.0
    %403 = vmatpush1.msra.mxu0 0.0
    %404 = vmatprep.subr.mxu0 0.0
    %405 = vmatpush1.msra.mxu0 0.0
    %406 = vmatprep.subr.mxu0 0.0
    %407 = vmatpush1.msra.mxu0 0.0
    %408 = vmatprep.subr.mxu0 0.0
    %409 = vmatpush1.msra.mxu0 0.0
    %410 = vmatprep.subr.mxu0 0.0
    %411 = vmatpush1.msra.mxu0 0.0
    %412 = vmatprep.subr.mxu0 0.0
    %413 = vmatpush1.msra.mxu0 0.0
    %414 = vmatprep.subr.mxu0 0.0
    %415 = vmatpush1.msra.mxu0 0.0
    %416 = vmatprep.subr.mxu0 0.0
    %417 = vmatpush1.msra.mxu0 0.0
    %418 = vmatprep.subr.mxu0 0.0
    %419 = vmatpush1.msra.mxu0 0.0
    %420 = vmatprep.subr.mxu0 0.0
    %421 = vmatpush1.msra.mxu0 0.0
    %422 = vmatprep.subr.mxu0 0.0
    %423 = vmatpush1.msra.mxu0 0.0
    %424 = vmatprep.subr.mxu0 0.0
    %425 = vmatpush1.msra.mxu0 0.0
    %426 = vmatprep.subr.mxu0 0.0
    %427 = vmatpush1.msra.mxu0 0.0
    %428 = vmatprep.subr.mxu0 0.0
    %429 = vmatpush1.msra.mxu0 0.0
    %430 = vmatprep.subr.mxu0 0.0
    %431 = vmatpush1.msra.mxu0 0.0
    %432 = vmatprep.subr.mxu0 0.0
    %433 = vmatpush1.msra.mxu0 0.0
    %434 = vmatprep.subr.mxu0 0.0
    %435 = vmatpush1.msra.mxu0 0.0
    %436 = vmatprep.subr.mxu0 0.0
    %437 = vmatpush1.msra.mxu0 0.0
    %438 = vmatprep.subr.mxu0 0.0
    %439 = vmatpush1.msra.mxu0 0.0
    %440 = vmatprep.subr.mxu0 0.0
    %441 = vmatpush1.msra.mxu0 0.0
    %442 = vmatprep.subr.mxu0 0.0
    %443 = vmatpush1.msra.mxu0 0.0
    %444 = vmatprep.subr.mxu0 0.0
    %445 = vmatpush1.msra.mxu0 0.0
    %446 = vmatprep.subr.mxu0 0.0
    %447 = vmatpush1.msra.mxu0 0.0
    %448 = vmatprep.subr.mxu0 0.0
    %449 = vmatpush1.msra.mxu0 0.0
    %450 = vmatprep.subr.mxu0 0.0
    %451 = vmatpush1.msra.mxu0 0.0
    %452 = vmatprep.mubr.f32.mxu0 0.0
    %v453 = vand.u32 %v153, 4294901760
    %v454 = vsub.f32 %v153, %v453
    %455 = vmatmul.mubr.f32.gmra.mrb[0].mxu0 %v454
    %v456 = vpop.f32.mrb[0].mxu0
    %v457 = vadd.f32 %v361, %v456
    %v458 = vpop.f32.mrb[0].mxu0
    %v459 = vadd.f32 %v363, %v458
    %460 = vmatprep.mubr.f32.mxu0 0.0
    %v461 = vand.u32 %v156, 4294901760
    %v462 = vsub.f32 %v156, %v461
    %463 = vmatmul.mubr.f32.gmra.mrb[0].mxu0 %v462
    %v464 = vpop.f32.mrb[0].mxu0
    %v465 = vadd.f32 %v368, %v464
    %v466 = vpop.f32.mrb[0].mxu0
    %v467 = vadd.f32 %v370, %v466
    %468 = vdwg.mxu0
    %v469 = vand.u32 %v96, 4294901760
    %470 = vmatprep.subr.mxu0 %v469
    %v471 = vand.u32 %v95, 4294901760
    %472 = vmatpush1.msra.mxu0 %v471
    %v473 = vand.u32 %v98, 4294901760
    %474 = vmatprep.subr.mxu0 %v473
    %v475 = vand.u32 %v97, 4294901760
    %476 = vmatpush1.msra.mxu0 %v475
    %v477 = vand.u32 %v100, 4294901760
    %478 = vmatprep.subr.mxu0 %v477
    %v479 = vand.u32 %v99, 4294901760
    %480 = vmatpush1.msra.mxu0 %v479
    %v481 = vand.u32 %v102, 4294901760
    %482 = vmatprep.subr.mxu0 %v481
    %v483 = vand.u32 %v101, 4294901760
    %484 = vmatpush1.msra.mxu0 %v483
    %485 = vmatprep.subr.mxu0 0.0
    %486 = vmatpush1.msra.mxu0 0.0
    %487 = vmatprep.subr.mxu0 0.0
    %488 = vmatpush1.msra.mxu0 0.0
    %489 = vmatprep.subr.mxu0 0.0
    %490 = vmatpush1.msra.mxu0 0.0
    %491 = vmatprep.subr.mxu0 0.0
    %492 = vmatpush1.msra.mxu0 0.0
    %493 = vmatprep.subr.mxu0 0.0
    %494 = vmatpush1.msra.mxu0 0.0
    %495 = vmatprep.subr.mxu0 0.0
    %496 = vmatpush1.msra.mxu0 0.0
    %497 = vmatprep.subr.mxu0 0.0
    %498 = vmatpush1.msra.mxu0 0.0
    %499 = vmatprep.subr.mxu0 0.0
    %500 = vmatpush1.msra.mxu0 0.0
    %501 = vmatprep.subr.mxu0 0.0
    %502 = vmatpush1.msra.mxu0 0.0
    %503 = vmatprep.subr.mxu0 0.0
    %504 = vmatpush1.msra.mxu0 0.0
    %505 = vmatprep.subr.mxu0 0.0
    %506 = vmatpush1.msra.mxu0 0.0
    %507 = vmatprep.subr.mxu0 0.0
    %508 = vmatpush1.msra.mxu0 0.0
    %509 = vmatprep.subr.mxu0 0.0
    %510 = vmatpush1.msra.mxu0 0.0
    %511 = vmatprep.subr.mxu0 0.0
    %512 = vmatpush1.msra.mxu0 0.0
    %513 = vmatprep.subr.mxu0 0.0
    %514 = vmatpush1.msra.mxu0 0.0
    %515 = vmatprep.subr.mxu0 0.0
    %516 = vmatpush1.msra.mxu0 0.0
    %517 = vmatprep.subr.mxu0 0.0
    %518 = vmatpush1.msra.mxu0 0.0
    %519 = vmatprep.subr.mxu0 0.0
    %520 = vmatpush1.msra.mxu0 0.0
    %521 = vmatprep.subr.mxu0 0.0
    %522 = vmatpush1.msra.mxu0 0.0
    %523 = vmatprep.subr.mxu0 0.0
    %524 = vmatpush1.msra.mxu0 0.0
    %525 = vmatprep.subr.mxu0 0.0
    %526 = vmatpush1.msra.mxu0 0.0
    %527 = vmatprep.subr.mxu0 0.0
    %528 = vmatpush1.msra.mxu0 0.0
    %529 = vmatprep.subr.mxu0 0.0
    %530 = vmatpush1.msra.mxu0 0.0
    %531 = vmatprep.subr.mxu0 0.0
    %532 = vmatpush1.msra.mxu0 0.0
    %533 = vmatprep.subr.mxu0 0.0
    %534 = vmatpush1.msra.mxu0 0.0
    %535 = vmatprep.subr.mxu0 0.0
    %536 = vmatpush1.msra.mxu0 0.0
    %537 = vmatprep.subr.mxu0 0.0
    %538 = vmatpush1.msra.mxu0 0.0
    %539 = vmatprep.subr.mxu0 0.0
    %540 = vmatpush1.msra.mxu0 0.0
    %541 = vmatprep.mubr.f32.mxu0 0.0
    %v542 = vand.u32 %v153, 4294901760
    %v543 = vsub.f32 %v153, %v542
    %v544 = vand.u32 %v543, 4294901760
    %545 = vmatmul.mubr.f32.gmra.mrb[0].mxu0 %v544
    %v546 = vpop.f32.mrb[0].mxu0
    %v547 = vadd.f32 %v457, %v546
    %v548 = vpop.f32.mrb[0].mxu0
    %v549 = vadd.f32 %v459, %v548
    %550 = vmatprep.mubr.f32.mxu0 0.0
    %v551 = vand.u32 %v156, 4294901760
    %v552 = vsub.f32 %v156, %v551
    %v553 = vand.u32 %v552, 4294901760
    %554 = vmatmul.mubr.f32.gmra.mrb[0].mxu0 %v553
    %v555 = vpop.f32.mrb[0].mxu0
    %v556 = vadd.f32 %v465, %v555
    %v557 = vpop.f32.mrb[0].mxu0
    %v558 = vadd.f32 %v467, %v557
    %559 = vdwg.mxu0
    %v560 = vand.u32 %v96, 4294901760
    %v561 = vsub.f32 %v96, %v560
    %v562 = vand.u32 %v561, 4294901760
    %563 = vmatprep.subr.mxu0 %v562
    %v564 = vand.u32 %v95, 4294901760
    %v565 = vsub.f32 %v95, %v564
    %v566 = vand.u32 %v565, 4294901760
    %567 = vmatpush1.msra.mxu0 %v566
    %v568 = vand.u32 %v98, 4294901760
    %v569 = vsub.f32 %v98, %v568
    %v570 = vand.u32 %v569, 4294901760
    %571 = vmatprep.subr.mxu0 %v570
    %v572 = vand.u32 %v97, 4294901760
    %v573 = vsub.f32 %v97, %v572
    %v574 = vand.u32 %v573, 4294901760
    %575 = vmatpush1.msra.mxu0 %v574
    %v576 = vand.u32 %v100, 4294901760
    %v577 = vsub.f32 %v100, %v576
    %v578 = vand.u32 %v577, 4294901760
    %579 = vmatprep.subr.mxu0 %v578
    %v580 = vand.u32 %v99, 4294901760
    %v581 = vsub.f32 %v99, %v580
    %v582 = vand.u32 %v581, 4294901760
    %583 = vmatpush1.msra.mxu0 %v582
    %v584 = vand.u32 %v102, 4294901760
    %v585 = vsub.f32 %v102, %v584
    %v586 = vand.u32 %v585, 4294901760
    %587 = vmatprep.subr.mxu0 %v586
    %v588 = vand.u32 %v101, 4294901760
    %v589 = vsub.f32 %v101, %v588
    %v590 = vand.u32 %v589, 4294901760
    %591 = vmatpush1.msra.mxu0 %v590
    %592 = vmatprep.subr.mxu0 0.0
    %593 = vmatpush1.msra.mxu0 0.0
    %594 = vmatprep.subr.mxu0 0.0
    %595 = vmatpush1.msra.mxu0 0.0
    %596 = vmatprep.subr.mxu0 0.0
    %597 = vmatpush1.msra.mxu0 0.0
    %598 = vmatprep.subr.mxu0 0.0
    %599 = vmatpush1.msra.mxu0 0.0
    %600 = vmatprep.subr.mxu0 0.0
    %601 = vmatpush1.msra.mxu0 0.0
    %602 = vmatprep.subr.mxu0 0.0
    %603 = vmatpush1.msra.mxu0 0.0
    %604 = vmatprep.subr.mxu0 0.0
    %605 = vmatpush1.msra.mxu0 0.0
    %606 = vmatprep.subr.mxu0 0.0
    %607 = vmatpush1.msra.mxu0 0.0
    %608 = vmatprep.subr.mxu0 0.0
    %609 = vmatpush1.msra.mxu0 0.0
    %610 = vmatprep.subr.mxu0 0.0
    %611 = vmatpush1.msra.mxu0 0.0
    %612 = vmatprep.subr.mxu0 0.0
    %613 = vmatpush1.msra.mxu0 0.0
    %614 = vmatprep.subr.mxu0 0.0
    %615 = vmatpush1.msra.mxu0 0.0
    %616 = vmatprep.subr.mxu0 0.0
    %617 = vmatpush1.msra.mxu0 0.0
    %618 = vmatprep.subr.mxu0 0.0
    %619 = vmatpush1.msra.mxu0 0.0
    %620 = vmatprep.subr.mxu0 0.0
    %621 = vmatpush1.msra.mxu0 0.0
    %622 = vmatprep.subr.mxu0 0.0
    %623 = vmatpush1.msra.mxu0 0.0
    %624 = vmatprep.subr.mxu0 0.0
    %625 = vmatpush1.msra.mxu0 0.0
    %626 = vmatprep.subr.mxu0 0.0
    %627 = vmatpush1.msra.mxu0 0.0
    %628 = vmatprep.subr.mxu0 0.0
    %629 = vmatpush1.msra.mxu0 0.0
    %630 = vmatprep.subr.mxu0 0.0
    %631 = vmatpush1.msra.mxu0 0.0
    %632 = vmatprep.subr.mxu0 0.0
    %633 = vmatpush1.msra.mxu0 0.0
    %634 = vmatprep.subr.mxu0 0.0
    %635 = vmatpush1.msra.mxu0 0.0
    %636 = vmatprep.subr.mxu0 0.0
    %637 = vmatpush1.msra.mxu0 0.0
    %638 = vmatprep.subr.mxu0 0.0
    %639 = vmatpush1.msra.mxu0 0.0
    %640 = vmatprep.subr.mxu0 0.0
    %641 = vmatpush1.msra.mxu0 0.0
    %642 = vmatprep.subr.mxu0 0.0
    %643 = vmatpush1.msra.mxu0 0.0
    %644 = vmatprep.subr.mxu0 0.0
    %645 = vmatpush1.msra.mxu0 0.0
    %646 = vmatprep.subr.mxu0 0.0
    %647 = vmatpush1.msra.mxu0 0.0
    %648 = vmatprep.mubr.f32.mxu0 0.0
    %v649 = vand.u32 %v153, 4294901760
    %650 = vmatmul.mubr.f32.gmra.mrb[0].mxu0 %v649
    %v651 = vpop.f32.mrb[0].mxu0
    %v652 = vadd.f32 %v547, %v651
    %v653 = vpop.f32.mrb[0].mxu0
    %v654 = vadd.f32 %v549, %v653
    %655 = vmatprep.mubr.f32.mxu0 0.0
    %v656 = vand.u32 %v156, 4294901760
    %657 = vmatmul.mubr.f32.gmra.mrb[0].mxu0 %v656
    %v658 = vpop.f32.mrb[0].mxu0
    %v659 = vadd.f32 %v556, %v658
    %v660 = vpop.f32.mrb[0].mxu0
    %v661 = vadd.f32 %v558, %v660
    %662 = vdwg.mxu0
    %v663 = vand.u32 %v96, 4294901760
    %664 = vmatprep.subr.mxu0 %v663
    %v665 = vand.u32 %v95, 4294901760
    %666 = vmatpush1.msra.mxu0 %v665
    %v667 = vand.u32 %v98, 4294901760
    %668 = vmatprep.subr.mxu0 %v667
    %v669 = vand.u32 %v97, 4294901760
    %670 = vmatpush1.msra.mxu0 %v669
    %v671 = vand.u32 %v100, 4294901760
    %672 = vmatprep.subr.mxu0 %v671
    %v673 = vand.u32 %v99, 4294901760
    %674 = vmatpush1.msra.mxu0 %v673
    %v675 = vand.u32 %v102, 4294901760
    %676 = vmatprep.subr.mxu0 %v675
    %v677 = vand.u32 %v101, 4294901760
    %678 = vmatpush1.msra.mxu0 %v677
    %679 = vmatprep.subr.mxu0 0.0
    %680 = vmatpush1.msra.mxu0 0.0
    %681 = vmatprep.subr.mxu0 0.0
    %682 = vmatpush1.msra.mxu0 0.0
    %683 = vmatprep.subr.mxu0 0.0
    %684 = vmatpush1.msra.mxu0 0.0
    %685 = vmatprep.subr.mxu0 0.0
    %686 = vmatpush1.msra.mxu0 0.0
    %687 = vmatprep.subr.mxu0 0.0
    %688 = vmatpush1.msra.mxu0 0.0
    %689 = vmatprep.subr.mxu0 0.0
    %690 = vmatpush1.msra.mxu0 0.0
    %691 = vmatprep.subr.mxu0 0.0
    %692 = vmatpush1.msra.mxu0 0.0
    %693 = vmatprep.subr.mxu0 0.0
    %694 = vmatpush1.msra.mxu0 0.0
    %695 = vmatprep.subr.mxu0 0.0
    %696 = vmatpush1.msra.mxu0 0.0
    %697 = vmatprep.subr.mxu0 0.0
    %698 = vmatpush1.msra.mxu0 0.0
    %699 = vmatprep.subr.mxu0 0.0
    %700 = vmatpush1.msra.mxu0 0.0
    %701 = vmatprep.subr.mxu0 0.0
    %702 = vmatpush1.msra.mxu0 0.0
    %703 = vmatprep.subr.mxu0 0.0
    %704 = vmatpush1.msra.mxu0 0.0
    %705 = vmatprep.subr.mxu0 0.0
    %706 = vmatpush1.msra.mxu0 0.0
    %707 = vmatprep.subr.mxu0 0.0
    %708 = vmatpush1.msra.mxu0 0.0
    %709 = vmatprep.subr.mxu0 0.0
    %710 = vmatpush1.msra.mxu0 0.0
    %711 = vmatprep.subr.mxu0 0.0
    %712 = vmatpush1.msra.mxu0 0.0
    %713 = vmatprep.subr.mxu0 0.0
    %714 = vmatpush1.msra.mxu0 0.0
    %715 = vmatprep.subr.mxu0 0.0
    %716 = vmatpush1.msra.mxu0 0.0
    %717 = vmatprep.subr.mxu0 0.0
    %718 = vmatpush1.msra.mxu0 0.0
    %719 = vmatprep.subr.mxu0 0.0
    %720 = vmatpush1.msra.mxu0 0.0
    %721 = vmatprep.subr.mxu0 0.0
    %722 = vmatpush1.msra.mxu0 0.0
    %723 = vmatprep.subr.mxu0 0.0
    %724 = vmatpush1.msra.mxu0 0.0
    %725 = vmatprep.subr.mxu0 0.0
    %726 = vmatpush1.msra.mxu0 0.0
    %727 = vmatprep.subr.mxu0 0.0
    %728 = vmatpush1.msra.mxu0 0.0
    %729 = vmatprep.subr.mxu0 0.0
    %730 = vmatpush1.msra.mxu0 0.0
    %731 = vmatprep.subr.mxu0 0.0
    %732 = vmatpush1.msra.mxu0 0.0
    %733 = vmatprep.subr.mxu0 0.0
    %734 = vmatpush1.msra.mxu0 0.0
    %735 = vmatprep.mubr.f32.mxu0 0.0
    %v736 = vand.u32 %v153, 4294901760
    %737 = vmatmul.mubr.f32.gmra.mrb[0].mxu0 %v736
    %v738 = vpop.f32.mrb[0].mxu0
    %v739 = vadd.f32 %v652, %v738
    %v740 = vpop.f32.mrb[0].mxu0
    %v741 = vadd.f32 %v654, %v740
    %742 = vmatprep.mubr.f32.mxu0 0.0
    %v743 = vand.u32 %v156, 4294901760
    %744 = vmatmul.mubr.f32.gmra.mrb[0].mxu0 %v743
    %v745 = vpop.f32.mrb[0].mxu0
    %v746 = vadd.f32 %v659, %v745
    %v747 = vpop.f32.mrb[0].mxu0
    %v748 = vadd.f32 %v661, %v747
    %749 = vdwg.mxu0
    %v750 = vld [vmem:[#allocation8] sm:$0xff]
    %v751 = vld [vmem:[#allocation8 + $0x8] sm:$0x1]
    %vm752 = vcmask 392192
    %v754 = vsel %vm752, %v750, 0
    %v757 = vsel %vm752, %v751, 0
    %v759 = vand.u32 %v138, 4294901760
    %760 = vmatprep.subr.mxu0 %v759
    %v761 = vand.u32 %v137, 4294901760
    %762 = vmatpush1.msra.mxu0 %v761
    %v763 = vand.u32 %v140, 4294901760
    %764 = vmatprep.subr.mxu0 %v763
    %v765 = vand.u32 %v139, 4294901760
    %766 = vmatpush1.msra.mxu0 %v765
    %v767 = vand.u32 %v142, 4294901760
    %768 = vmatprep.subr.mxu0 %v767
    %v769 = vand.u32 %v141, 4294901760
    %770 = vmatpush1.msra.mxu0 %v769
    %v771 = vand.u32 %v144, 4294901760
    %772 = vmatprep.subr.mxu0 %v771
    %v773 = vand.u32 %v143, 4294901760
    %774 = vmatpush1.msra.mxu0 %v773
    %v775 = vand.u32 %v146, 4294901760
    %776 = vmatprep.subr.mxu0 %v775
    %v777 = vand.u32 %v145, 4294901760
    %778 = vmatpush1.msra.mxu0 %v777
    %v779 = vand.u32 %v148, 4294901760
    %780 = vmatprep.subr.mxu0 %v779
    %v781 = vand.u32 %v147, 4294901760
    %782 = vmatpush1.msra.mxu0 %v781
    %783 = vmatprep.subr.mxu0 0.0
    %784 = vmatpush1.msra.mxu0 0.0
    %785 = vmatprep.subr.mxu0 0.0
    %786 = vmatpush1.msra.mxu0 0.0
    %787 = vmatprep.subr.mxu0 0.0
    %788 = vmatpush1.msra.mxu0 0.0
    %789 = vmatprep.subr.mxu0 0.0
    %790 = vmatpush1.msra.mxu0 0.0
    %791 = vmatprep.subr.mxu0 0.0
    %792 = vmatpush1.msra.mxu0 0.0
    %793 = vmatprep.subr.mxu0 0.0
    %794 = vmatpush1.msra.mxu0 0.0
    %795 = vmatprep.subr.mxu0 0.0
    %796 = vmatpush1.msra.mxu0 0.0
    %797 = vmatprep.subr.mxu0 0.0
    %798 = vmatpush1.msra.mxu0 0.0
    %799 = vmatprep.subr.mxu0 0.0
    %800 = vmatpush1.msra.mxu0 0.0
    %801 = vmatprep.subr.mxu0 0.0
    %802 = vmatpush1.msra.mxu0 0.0
    %803 = vmatprep.subr.mxu0 0.0
    %804 = vmatpush1.msra.mxu0 0.0
    %805 = vmatprep.subr.mxu0 0.0
    %806 = vmatpush1.msra.mxu0 0.0
    %807 = vmatprep.subr.mxu0 0.0
    %808 = vmatpush1.msra.mxu0 0.0
    %809 = vmatprep.subr.mxu0 0.0
    %810 = vmatpush1.msra.mxu0 0.0
    %811 = vmatprep.subr.mxu0 0.0
    %812 = vmatpush1.msra.mxu0 0.0
    %813 = vmatprep.subr.mxu0 0.0
    %814 = vmatpush1.msra.mxu0 0.0
    %815 = vmatprep.subr.mxu0 0.0
    %816 = vmatpush1.msra.mxu0 0.0
    %817 = vmatprep.subr.mxu0 0.0
    %818 = vmatpush1.msra.mxu0 0.0
    %819 = vmatprep.subr.mxu0 0.0
    %820 = vmatpush1.msra.mxu0 0.0
    %821 = vmatprep.subr.mxu0 0.0
    %822 = vmatpush1.msra.mxu0 0.0
    %823 = vmatprep.subr.mxu0 0.0
    %824 = vmatpush1.msra.mxu0 0.0
    %825 = vmatprep.subr.mxu0 0.0
    %826 = vmatpush1.msra.mxu0 0.0
    %827 = vmatprep.subr.mxu0 0.0
    %828 = vmatpush1.msra.mxu0 0.0
    %829 = vmatprep.subr.mxu0 0.0
    %830 = vmatpush1.msra.mxu0 0.0
    %831 = vmatprep.subr.mxu0 0.0
    %832 = vmatpush1.msra.mxu0 0.0
    %833 = vmatprep.subr.mxu0 0.0
    %834 = vmatpush1.msra.mxu0 0.0
    %835 = vmatprep.mubr.f32.mxu0 0.0
    %v836 = vand.u32 %v754, 4294901760
    %v837 = vsub.f32 %v754, %v836
    %v838 = vand.u32 %v837, 4294901760
    %v839 = vsub.f32 %v837, %v838
    %v840 = vand.u32 %v839, 4294901760
    %841 = vmatmul.mubr.f32.gmra.mrb[0].mxu0 %v840
    %v842 = vpop.f32.mrb[0].mxu0
    %v843 = vadd.f32 0.0, %v842
    %v844 = vpop.f32.mrb[0].mxu0
    %v845 = vadd.f32 0.0, %v844
    %846 = vmatprep.mubr.f32.mxu0 0.0
    %v847 = vand.u32 %v757, 4294901760
    %v848 = vsub.f32 %v757, %v847
    %v849 = vand.u32 %v848, 4294901760
    %v850 = vsub.f32 %v848, %v849
    %v851 = vand.u32 %v850, 4294901760
    %852 = vmatmul.mubr.f32.gmra.mrb[0].mxu0 %v851
    %v853 = vpop.f32.mrb[0].mxu0
    %v854 = vadd.f32 0.0, %v853
    %v855 = vpop.f32.mrb[0].mxu0
    %v856 = vadd.f32 0.0, %v855
    %857 = vdwg.mxu0
    %v858 = vand.u32 %v138, 4294901760
    %v859 = vsub.f32 %v138, %v858
    %v860 = vand.u32 %v859, 4294901760
    %v861 = vsub.f32 %v859, %v860
    %v862 = vand.u32 %v861, 4294901760
    %863 = vmatprep.subr.mxu0 %v862
    %v864 = vand.u32 %v137, 4294901760
    %v865 = vsub.f32 %v137, %v864
    %v866 = vand.u32 %v865, 4294901760
    %v867 = vsub.f32 %v865, %v866
    %v868 = vand.u32 %v867, 4294901760
    %869 = vmatpush1.msra.mxu0 %v868
    %v870 = vand.u32 %v140, 4294901760
    %v871 = vsub.f32 %v140, %v870
    %v872 = vand.u32 %v871, 4294901760
    %v873 = vsub.f32 %v871, %v872
    %v874 = vand.u32 %v873, 4294901760
    %875 = vmatprep.subr.mxu0 %v874
    %v876 = vand.u32 %v139, 4294901760
    %v877 = vsub.f32 %v139, %v876
    %v878 = vand.u32 %v877, 4294901760
    %v879 = vsub.f32 %v877, %v878
    %v880 = vand.u32 %v879, 4294901760
    %881 = vmatpush1.msra.mxu0 %v880
    %v882 = vand.u32 %v142, 4294901760
    %v883 = vsub.f32 %v142, %v882
    %v884 = vand.u32 %v883, 4294901760
    %v885 = vsub.f32 %v883, %v884
    %v886 = vand.u32 %v885, 4294901760
    %887 = vmatprep.subr.mxu0 %v886
    %v888 = vand.u32 %v141, 4294901760
    %v889 = vsub.f32 %v141, %v888
    %v890 = vand.u32 %v889, 4294901760
    %v891 = vsub.f32 %v889, %v890
    %v892 = vand.u32 %v891, 4294901760
    %893 = vmatpush1.msra.mxu0 %v892
    %v894 = vand.u32 %v144, 4294901760
    %v895 = vsub.f32 %v144, %v894
    %v896 = vand.u32 %v895, 4294901760
    %v897 = vsub.f32 %v895, %v896
    %v898 = vand.u32 %v897, 4294901760
    %899 = vmatprep.subr.mxu0 %v898
    %v900 = vand.u32 %v143, 4294901760
    %v901 = vsub.f32 %v143, %v900
    %v902 = vand.u32 %v901, 4294901760
    %v903 = vsub.f32 %v901, %v902
    %v904 = vand.u32 %v903, 4294901760
    %905 = vmatpush1.msra.mxu0 %v904
    %v906 = vand.u32 %v146, 4294901760
    %v907 = vsub.f32 %v146, %v906
    %v908 = vand.u32 %v907, 4294901760
    %v909 = vsub.f32 %v907, %v908
    %v910 = vand.u32 %v909, 4294901760
    %911 = vmatprep.subr.mxu0 %v910
    %v912 = vand.u32 %v145, 4294901760
    %v913 = vsub.f32 %v145, %v912
    %v914 = vand.u32 %v913, 4294901760
    %v915 = vsub.f32 %v913, %v914
    %v916 = vand.u32 %v915, 4294901760
    %917 = vmatpush1.msra.mxu0 %v916
    %v918 = vand.u32 %v148, 4294901760
    %v919 = vsub.f32 %v148, %v918
    %v920 = vand.u32 %v919, 4294901760
    %v921 = vsub.f32 %v919, %v920
    %v922 = vand.u32 %v921, 4294901760
    %923 = vmatprep.subr.mxu0 %v922
    %v924 = vand.u32 %v147, 4294901760
    %v925 = vsub.f32 %v147, %v924
    %v926 = vand.u32 %v925, 4294901760
    %v927 = vsub.f32 %v925, %v926
    %v928 = vand.u32 %v927, 4294901760
    %929 = vmatpush1.msra.mxu0 %v928
    %930 = vmatprep.subr.mxu0 0.0
    %931 = vmatpush1.msra.mxu0 0.0
    %932 = vmatprep.subr.mxu0 0.0
    %933 = vmatpush1.msra.mxu0 0.0
    %934 = vmatprep.subr.mxu0 0.0
    %935 = vmatpush1.msra.mxu0 0.0
    %936 = vmatprep.subr.mxu0 0.0
    %937 = vmatpush1.msra.mxu0 0.0
    %938 = vmatprep.subr.mxu0 0.0
    %939 = vmatpush1.msra.mxu0 0.0
    %940 = vmatprep.subr.mxu0 0.0
    %941 = vmatpush1.msra.mxu0 0.0
    %942 = vmatprep.subr.mxu0 0.0
    %943 = vmatpush1.msra.mxu0 0.0
    %944 = vmatprep.subr.mxu0 0.0
    %945 = vmatpush1.msra.mxu0 0.0
    %946 = vmatprep.subr.mxu0 0.0
    %947 = vmatpush1.msra.mxu0 0.0
    %948 = vmatprep.subr.mxu0 0.0
    %949 = vmatpush1.msra.mxu0 0.0
    %950 = vmatprep.subr.mxu0 0.0
    %951 = vmatpush1.msra.mxu0 0.0
    %952 = vmatprep.subr.mxu0 0.0
    %953 = vmatpush1.msra.mxu0 0.0
    %954 = vmatprep.subr.mxu0 0.0
    %955 = vmatpush1.msra.mxu0 0.0
    %956 = vmatprep.subr.mxu0 0.0
    %957 = vmatpush1.msra.mxu0 0.0
    %958 = vmatprep.subr.mxu0 0.0
    %959 = vmatpush1.msra.mxu0 0.0
    %960 = vmatprep.subr.mxu0 0.0
    %961 = vmatpush1.msra.mxu0 0.0
    %962 = vmatprep.subr.mxu0 0.0
    %963 = vmatpush1.msra.mxu0 0.0
    %964 = vmatprep.subr.mxu0 0.0
    %965 = vmatpush1.msra.mxu0 0.0
    %966 = vmatprep.subr.mxu0 0.0
    %967 = vmatpush1.msra.mxu0 0.0
    %968 = vmatprep.subr.mxu0 0.0
    %969 = vmatpush1.msra.mxu0 0.0
    %970 = vmatprep.subr.mxu0 0.0
    %971 = vmatpush1.msra.mxu0 0.0
    %972 = vmatprep.subr.mxu0 0.0
    %973 = vmatpush1.msra.mxu0 0.0
    %974 = vmatprep.subr.mxu0 0.0
    %975 = vmatpush1.msra.mxu0 0.0
    %976 = vmatprep.subr.mxu0 0.0
    %977 = vmatpush1.msra.mxu0 0.0
    %978 = vmatprep.subr.mxu0 0.0
    %979 = vmatpush1.msra.mxu0 0.0
    %980 = vmatprep.subr.mxu0 0.0
    %981 = vmatpush1.msra.mxu0 0.0
    %982 = vmatprep.mubr.f32.mxu0 0.0
    %v983 = vand.u32 %v754, 4294901760
    %984 = vmatmul.mubr.f32.gmra.mrb[0].mxu0 %v983
    %v985 = vpop.f32.mrb[0].mxu0
    %v986 = vadd.f32 %v843, %v985
    %v987 = vpop.f32.mrb[0].mxu0
    %v988 = vadd.f32 %v845, %v987
    %989 = vmatprep.mubr.f32.mxu0 0.0
    %v990 = vand.u32 %v757, 4294901760
    %991 = vmatmul.mubr.f32.gmra.mrb[0].mxu0 %v990
    %v992 = vpop.f32.mrb[0].mxu0
    %v993 = vadd.f32 %v854, %v992
    %v994 = vpop.f32.mrb[0].mxu0
    %v995 = vadd.f32 %v856, %v994
    %996 = vdwg.mxu0
    %v997 = vand.u32 %v138, 4294901760
    %v998 = vsub.f32 %v138, %v997
    %999 = vmatprep.subr.mxu0 %v998
    %v1000 = vand.u32 %v137, 4294901760
    %v1001 = vsub.f32 %v137, %v1000
    %1002 = vmatpush1.msra.mxu0 %v1001
    %v1003 = vand.u32 %v140, 4294901760
    %v1004 = vsub.f32 %v140, %v1003
    %1005 = vmatprep.subr.mxu0 %v1004
    %v1006 = vand.u32 %v139, 4294901760
    %v1007 = vsub.f32 %v139, %v1006
    %1008 = vmatpush1.msra.mxu0 %v1007
    %v1009 = vand.u32 %v142, 4294901760
    %v1010 = vsub.f32 %v142, %v1009
    %1011 = vmatprep.subr.mxu0 %v1010
    %v1012 = vand.u32 %v141, 4294901760
    %v1013 = vsub.f32 %v141, %v1012
    %1014 = vmatpush1.msra.mxu0 %v1013
    %v1015 = vand.u32 %v144, 4294901760
    %v1016 = vsub.f32 %v144, %v1015
    %1017 = vmatprep.subr.mxu0 %v1016
    %v1018 = vand.u32 %v143, 4294901760
    %v1019 = vsub.f32 %v143, %v1018
    %1020 = vmatpush1.msra.mxu0 %v1019
    %v1021 = vand.u32 %v146, 4294901760
    %v1022 = vsub.f32 %v146, %v1021
    %1023 = vmatprep.subr.mxu0 %v1022
    %v1024 = vand.u32 %v145, 4294901760
    %v1025 = vsub.f32 %v145, %v1024
    %1026 = vmatpush1.msra.mxu0 %v1025
    %v1027 = vand.u32 %v148, 4294901760
    %v1028 = vsub.f32 %v148, %v1027
    %1029 = vmatprep.subr.mxu0 %v1028
    %v1030 = vand.u32 %v147, 4294901760
    %v1031 = vsub.f32 %v147, %v1030
    %1032 = vmatpush1.msra.mxu0 %v1031
    %1033 = vmatprep.subr.mxu0 0.0
    %1034 = vmatpush1.msra.mxu0 0.0
    %1035 = vmatprep.subr.mxu0 0.0
    %1036 = vmatpush1.msra.mxu0 0.0
    %1037 = vmatprep.subr.mxu0 0.0
    %1038 = vmatpush1.msra.mxu0 0.0
    %1039 = vmatprep.subr.mxu0 0.0
    %1040 = vmatpush1.msra.mxu0 0.0
    %1041 = vmatprep.subr.mxu0 0.0
    %1042 = vmatpush1.msra.mxu0 0.0
    %1043 = vmatprep.subr.mxu0 0.0
    %1044 = vmatpush1.msra.mxu0 0.0
    %1045 = vmatprep.subr.mxu0 0.0
    %1046 = vmatpush1.msra.mxu0 0.0
    %1047 = vmatprep.subr.mxu0 0.0
    %1048 = vmatpush1.msra.mxu0 0.0
    %1049 = vmatprep.subr.mxu0 0.0
    %1050 = vmatpush1.msra.mxu0 0.0
    %1051 = vmatprep.subr.mxu0 0.0
    %1052 = vmatpush1.msra.mxu0 0.0
    %1053 = vmatprep.subr.mxu0 0.0
    %1054 = vmatpush1.msra.mxu0 0.0
    %1055 = vmatprep.subr.mxu0 0.0
    %1056 = vmatpush1.msra.mxu0 0.0
    %1057 = vmatprep.subr.mxu0 0.0
    %1058 = vmatpush1.msra.mxu0 0.0
    %1059 = vmatprep.subr.mxu0 0.0
    %1060 = vmatpush1.msra.mxu0 0.0
    %1061 = vmatprep.subr.mxu0 0.0
    %1062 = vmatpush1.msra.mxu0 0.0
    %1063 = vmatprep.subr.mxu0 0.0
    %1064 = vmatpush1.msra.mxu0 0.0
    %1065 = vmatprep.subr.mxu0 0.0
    %1066 = vmatpush1.msra.mxu0 0.0
    %1067 = vmatprep.subr.mxu0 0.0
    %1068 = vmatpush1.msra.mxu0 0.0
    %1069 = vmatprep.subr.mxu0 0.0
    %1070 = vmatpush1.msra.mxu0 0.0
    %1071 = vmatprep.subr.mxu0 0.0
    %1072 = vmatpush1.msra.mxu0 0.0
    %1073 = vmatprep.subr.mxu0 0.0
    %1074 = vmatpush1.msra.mxu0 0.0
    %1075 = vmatprep.subr.mxu0 0.0
    %1076 = vmatpush1.msra.mxu0 0.0
    %1077 = vmatprep.subr.mxu0 0.0
    %1078 = vmatpush1.msra.mxu0 0.0
    %1079 = vmatprep.subr.mxu0 0.0
    %1080 = vmatpush1.msra.mxu0 0.0
    %1081 = vmatprep.subr.mxu0 0.0
    %1082 = vmatpush1.msra.mxu0 0.0
    %1083 = vmatprep.subr.mxu0 0.0
    %1084 = vmatpush1.msra.mxu0 0.0
    %1085 = vmatprep.mubr.f32.mxu0 0.0
    %v1086 = vand.u32 %v754, 4294901760
    %v1087 = vsub.f32 %v754, %v1086
    %1088 = vmatmul.mubr.f32.gmra.mrb[0].mxu0 %v1087
    %v1089 = vpop.f32.mrb[0].mxu0
    %v1090 = vadd.f32 %v986, %v1089
    %v1091 = vpop.f32.mrb[0].mxu0
    %v1092 = vadd.f32 %v988, %v1091
    %1093 = vmatprep.mubr.f32.mxu0 0.0
    %v1094 = vand.u32 %v757, 4294901760
    %v1095 = vsub.f32 %v757, %v1094
    %1096 = vmatmul.mubr.f32.gmra.mrb[0].mxu0 %v1095
    %v1097 = vpop.f32.mrb[0].mxu0
    %v1098 = vadd.f32 %v993, %v1097
    %v1099 = vpop.f32.mrb[0].mxu0
    %v1100 = vadd.f32 %v995, %v1099
    %1101 = vdwg.mxu0
    %v1102 = vand.u32 %v138, 4294901760
    %1103 = vmatprep.subr.mxu0 %v1102
    %v1104 = vand.u32 %v137, 4294901760
    %1105 = vmatpush1.msra.mxu0 %v1104
    %v1106 = vand.u32 %v140, 4294901760
    %1107 = vmatprep.subr.mxu0 %v1106
    %v1108 = vand.u32 %v139, 4294901760
    %1109 = vmatpush1.msra.mxu0 %v1108
    %v1110 = vand.u32 %v142, 4294901760
    %1111 = vmatprep.subr.mxu0 %v1110
    %v1112 = vand.u32 %v141, 4294901760
    %1113 = vmatpush1.msra.mxu0 %v1112
    %v1114 = vand.u32 %v144, 4294901760
    %1115 = vmatprep.subr.mxu0 %v1114
    %v1116 = vand.u32 %v143, 4294901760
    %1117 = vmatpush1.msra.mxu0 %v1116
    %v1118 = vand.u32 %v146, 4294901760
    %1119 = vmatprep.subr.mxu0 %v1118
    %v1120 = vand.u32 %v145, 4294901760
    %1121 = vmatpush1.msra.mxu0 %v1120
    %v1122 = vand.u32 %v148, 4294901760
    %1123 = vmatprep.subr.mxu0 %v1122
    %v1124 = vand.u32 %v147, 4294901760
    %1125 = vmatpush1.msra.mxu0 %v1124
    %1126 = vmatprep.subr.mxu0 0.0
    %1127 = vmatpush1.msra.mxu0 0.0
    %1128 = vmatprep.subr.mxu0 0.0
    %1129 = vmatpush1.msra.mxu0 0.0
    %1130 = vmatprep.subr.mxu0 0.0
    %1131 = vmatpush1.msra.mxu0 0.0
    %1132 = vmatprep.subr.mxu0 0.0
    %1133 = vmatpush1.msra.mxu0 0.0
    %1134 = vmatprep.subr.mxu0 0.0
    %1135 = vmatpush1.msra.mxu0 0.0
    %1136 = vmatprep.subr.mxu0 0.0
    %1137 = vmatpush1.msra.mxu0 0.0
    %1138 = vmatprep.subr.mxu0 0.0
    %1139 = vmatpush1.msra.mxu0 0.0
    %1140 = vmatprep.subr.mxu0 0.0
    %1141 = vmatpush1.msra.mxu0 0.0
    %1142 = vmatprep.subr.mxu0 0.0
    %1143 = vmatpush1.msra.mxu0 0.0
    %1144 = vmatprep.subr.mxu0 0.0
    %1145 = vmatpush1.msra.mxu0 0.0
    %1146 = vmatprep.subr.mxu0 0.0
    %1147 = vmatpush1.msra.mxu0 0.0
    %1148 = vmatprep.subr.mxu0 0.0
    %1149 = vmatpush1.msra.mxu0 0.0
    %1150 = vmatprep.subr.mxu0 0.0
    %1151 = vmatpush1.msra.mxu0 0.0
    %1152 = vmatprep.subr.mxu0 0.0
    %1153 = vmatpush1.msra.mxu0 0.0
    %1154 = vmatprep.subr.mxu0 0.0
    %1155 = vmatpush1.msra.mxu0 0.0
    %1156 = vmatprep.subr.mxu0 0.0
    %1157 = vmatpush1.msra.mxu0 0.0
    %1158 = vmatprep.subr.mxu0 0.0
    %1159 = vmatpush1.msra.mxu0 0.0
    %1160 = vmatprep.subr.mxu0 0.0
    %1161 = vmatpush1.msra.mxu0 0.0
    %1162 = vmatprep.subr.mxu0 0.0
    %1163 = vmatpush1.msra.mxu0 0.0
    %1164 = vmatprep.subr.mxu0 0.0
    %1165 = vmatpush1.msra.mxu0 0.0
    %1166 = vmatprep.subr.mxu0 0.0
    %1167 = vmatpush1.msra.mxu0 0.0
    %1168 = vmatprep.subr.mxu0 0.0
    %1169 = vmatpush1.msra.mxu0 0.0
    %1170 = vmatprep.subr.mxu0 0.0
    %1171 = vmatpush1.msra.mxu0 0.0
    %1172 = vmatprep.subr.mxu0 0.0
    %1173 = vmatpush1.msra.mxu0 0.0
    %1174 = vmatprep.subr.mxu0 0.0
    %1175 = vmatpush1.msra.mxu0 0.0
    %1176 = vmatprep.subr.mxu0 0.0
    %1177 = vmatpush1.msra.mxu0 0.0
    %1178 = vmatprep.mubr.f32.mxu0 0.0
    %v1179 = vand.u32 %v754, 4294901760
    %v1180 = vsub.f32 %v754, %v1179
    %v1181 = vand.u32 %v1180, 4294901760
    %1182 = vmatmul.mubr.f32.gmra.mrb[0].mxu0 %v1181
    %v1183 = vpop.f32.mrb[0].mxu0
    %v1184 = vadd.f32 %v1090, %v1183
    %v1185 = vpop.f32.mrb[0].mxu0
    %v1186 = vadd.f32 %v1092, %v1185
    %1187 = vmatprep.mubr.f32.mxu0 0.0
    %v1188 = vand.u32 %v757, 4294901760
    %v1189 = vsub.f32 %v757, %v1188
    %v1190 = vand.u32 %v1189, 4294901760
    %1191 = vmatmul.mubr.f32.gmra.mrb[0].mxu0 %v1190
    %v1192 = vpop.f32.mrb[0].mxu0
    %v1193 = vadd.f32 %v1098, %v1192
    %v1194 = vpop.f32.mrb[0].mxu0
    %v1195 = vadd.f32 %v1100, %v1194
    %1196 = vdwg.mxu0
    %v1197 = vand.u32 %v138, 4294901760
    %v1198 = vsub.f32 %v138, %v1197
    %v1199 = vand.u32 %v1198, 4294901760
    %1200 = vmatprep.subr.mxu0 %v1199
    %v1201 = vand.u32 %v137, 4294901760
    %v1202 = vsub.f32 %v137, %v1201
    %v1203 = vand.u32 %v1202, 4294901760
    %1204 = vmatpush1.msra.mxu0 %v1203
    %v1205 = vand.u32 %v140, 4294901760
    %v1206 = vsub.f32 %v140, %v1205
    %v1207 = vand.u32 %v1206, 4294901760
    %1208 = vmatprep.subr.mxu0 %v1207
    %v1209 = vand.u32 %v139, 4294901760
    %v1210 = vsub.f32 %v139, %v1209
    %v1211 = vand.u32 %v1210, 4294901760
    %1212 = vmatpush1.msra.mxu0 %v1211
    %v1213 = vand.u32 %v142, 4294901760
    %v1214 = vsub.f32 %v142, %v1213
    %v1215 = vand.u32 %v1214, 4294901760
    %1216 = vmatprep.subr.mxu0 %v1215
    %v1217 = vand.u32 %v141, 4294901760
    %v1218 = vsub.f32 %v141, %v1217
    %v1219 = vand.u32 %v1218, 4294901760
    %1220 = vmatpush1.msra.mxu0 %v1219
    %v1221 = vand.u32 %v144, 4294901760
    %v1222 = vsub.f32 %v144, %v1221
    %v1223 = vand.u32 %v1222, 4294901760
    %1224 = vmatprep.subr.mxu0 %v1223
    %v1225 = vand.u32 %v143, 4294901760
    %v1226 = vsub.f32 %v143, %v1225
    %v1227 = vand.u32 %v1226, 4294901760
    %1228 = vmatpush1.msra.mxu0 %v1227
    %v1229 = vand.u32 %v146, 4294901760
    %v1230 = vsub.f32 %v146, %v1229
    %v1231 = vand.u32 %v1230, 4294901760
    %1232 = vmatprep.subr.mxu0 %v1231
    %v1233 = vand.u32 %v145, 4294901760
    %v1234 = vsub.f32 %v145, %v1233
    %v1235 = vand.u32 %v1234, 4294901760
    %1236 = vmatpush1.msra.mxu0 %v1235
    %v1237 = vand.u32 %v148, 4294901760
    %v1238 = vsub.f32 %v148, %v1237
    %v1239 = vand.u32 %v1238, 4294901760
    %1240 = vmatprep.subr.mxu0 %v1239
    %v1241 = vand.u32 %v147, 4294901760
    %v1242 = vsub.f32 %v147, %v1241
    %v1243 = vand.u32 %v1242, 4294901760
    %1244 = vmatpush1.msra.mxu0 %v1243
    %1245 = vmatprep.subr.mxu0 0.0
    %1246 = vmatpush1.msra.mxu0 0.0
    %1247 = vmatprep.subr.mxu0 0.0
    %1248 = vmatpush1.msra.mxu0 0.0
    %1249 = vmatprep.subr.mxu0 0.0
    %1250 = vmatpush1.msra.mxu0 0.0
    %1251 = vmatprep.subr.mxu0 0.0
    %1252 = vmatpush1.msra.mxu0 0.0
    %1253 = vmatprep.subr.mxu0 0.0
    %1254 = vmatpush1.msra.mxu0 0.0
    %1255 = vmatprep.subr.mxu0 0.0
    %1256 = vmatpush1.msra.mxu0 0.0
    %1257 = vmatprep.subr.mxu0 0.0
    %1258 = vmatpush1.msra.mxu0 0.0
    %1259 = vmatprep.subr.mxu0 0.0
    %1260 = vmatpush1.msra.mxu0 0.0
    %1261 = vmatprep.subr.mxu0 0.0
    %1262 = vmatpush1.msra.mxu0 0.0
    %1263 = vmatprep.subr.mxu0 0.0
    %1264 = vmatpush1.msra.mxu0 0.0
    %1265 = vmatprep.subr.mxu0 0.0
    %1266 = vmatpush1.msra.mxu0 0.0
    %1267 = vmatprep.subr.mxu0 0.0
    %1268 = vmatpush1.msra.mxu0 0.0
    %1269 = vmatprep.subr.mxu0 0.0
    %1270 = vmatpush1.msra.mxu0 0.0
    %1271 = vmatprep.subr.mxu0 0.0
    %1272 = vmatpush1.msra.mxu0 0.0
    %1273 = vmatprep.subr.mxu0 0.0
    %1274 = vmatpush1.msra.mxu0 0.0
    %1275 = vmatprep.subr.mxu0 0.0
    %1276 = vmatpush1.msra.mxu0 0.0
    %1277 = vmatprep.subr.mxu0 0.0
    %1278 = vmatpush1.msra.mxu0 0.0
    %1279 = vmatprep.subr.mxu0 0.0
    %1280 = vmatpush1.msra.mxu0 0.0
    %1281 = vmatprep.subr.mxu0 0.0
    %1282 = vmatpush1.msra.mxu0 0.0
    %1283 = vmatprep.subr.mxu0 0.0
    %1284 = vmatpush1.msra.mxu0 0.0
    %1285 = vmatprep.subr.mxu0 0.0
    %1286 = vmatpush1.msra.mxu0 0.0
    %1287 = vmatprep.subr.mxu0 0.0
    %1288 = vmatpush1.msra.mxu0 0.0
    %1289 = vmatprep.subr.mxu0 0.0
    %1290 = vmatpush1.msra.mxu0 0.0
    %1291 = vmatprep.subr.mxu0 0.0
    %1292 = vmatpush1.msra.mxu0 0.0
    %1293 = vmatprep.subr.mxu0 0.0
    %1294 = vmatpush1.msra.mxu0 0.0
    %1295 = vmatprep.subr.mxu0 0.0
    %1296 = vmatpush1.msra.mxu0 0.0
    %1297 = vmatprep.mubr.f32.mxu0 0.0
    %v1298 = vand.u32 %v754, 4294901760
    %1299 = vmatmul.mubr.f32.gmra.mrb[0].mxu0 %v1298
    %v1300 = vpop.f32.mrb[0].mxu0
    %v1301 = vadd.f32 %v1184, %v1300
    %v1302 = vpop.f32.mrb[0].mxu0
    %v1303 = vadd.f32 %v1186, %v1302
    %1304 = vmatprep.mubr.f32.mxu0 0.0
    %v1305 = vand.u32 %v757, 4294901760
    %1306 = vmatmul.mubr.f32.gmra.mrb[0].mxu0 %v1305
    %v1307 = vpop.f32.mrb[0].mxu0
    %v1308 = vadd.f32 %v1193, %v1307
    %v1309 = vpop.f32.mrb[0].mxu0
    %v1310 = vadd.f32 %v1195, %v1309
    %1311 = vdwg.mxu0
    %v1312 = vand.u32 %v138, 4294901760
    %1313 = vmatprep.subr.mxu0 %v1312
    %v1314 = vand.u32 %v137, 4294901760
    %1315 = vmatpush1.msra.mxu0 %v1314
    %v1316 = vand.u32 %v140, 4294901760
    %1317 = vmatprep.subr.mxu0 %v1316
    %v1318 = vand.u32 %v139, 4294901760
    %1319 = vmatpush1.msra.mxu0 %v1318
    %v1320 = vand.u32 %v142, 4294901760
    %1321 = vmatprep.subr.mxu0 %v1320
    %v1322 = vand.u32 %v141, 4294901760
    %1323 = vmatpush1.msra.mxu0 %v1322
    %v1324 = vand.u32 %v144, 4294901760
    %1325 = vmatprep.subr.mxu0 %v1324
    %v1326 = vand.u32 %v143, 4294901760
    %1327 = vmatpush1.msra.mxu0 %v1326
    %v1328 = vand.u32 %v146, 4294901760
    %1329 = vmatprep.subr.mxu0 %v1328
    %v1330 = vand.u32 %v145, 4294901760
    %1331 = vmatpush1.msra.mxu0 %v1330
    %v1332 = vand.u32 %v148, 4294901760
    %1333 = vmatprep.subr.mxu0 %v1332
    %v1334 = vand.u32 %v147, 4294901760
    %1335 = vmatpush1.msra.mxu0 %v1334
    %1336 = vmatprep.subr.mxu0 0.0
    %1337 = vmatpush1.msra.mxu0 0.0
    %1338 = vmatprep.subr.mxu0 0.0
    %1339 = vmatpush1.msra.mxu0 0.0
    %1340 = vmatprep.subr.mxu0 0.0
    %1341 = vmatpush1.msra.mxu0 0.0
    %1342 = vmatprep.subr.mxu0 0.0
    %1343 = vmatpush1.msra.mxu0 0.0
    %1344 = vmatprep.subr.mxu0 0.0
    %1345 = vmatpush1.msra.mxu0 0.0
    %1346 = vmatprep.subr.mxu0 0.0
    %1347 = vmatpush1.msra.mxu0 0.0
    %1348 = vmatprep.subr.mxu0 0.0
    %1349 = vmatpush1.msra.mxu0 0.0
    %1350 = vmatprep.subr.mxu0 0.0
    %1351 = vmatpush1.msra.mxu0 0.0
    %1352 = vmatprep.subr.mxu0 0.0
    %1353 = vmatpush1.msra.mxu0 0.0
    %1354 = vmatprep.subr.mxu0 0.0
    %1355 = vmatpush1.msra.mxu0 0.0
    %1356 = vmatprep.subr.mxu0 0.0
    %1357 = vmatpush1.msra.mxu0 0.0
    %1358 = vmatprep.subr.mxu0 0.0
    %1359 = vmatpush1.msra.mxu0 0.0
    %1360 = vmatprep.subr.mxu0 0.0
    %1361 = vmatpush1.msra.mxu0 0.0
    %1362 = vmatprep.subr.mxu0 0.0
    %1363 = vmatpush1.msra.mxu0 0.0
    %1364 = vmatprep.subr.mxu0 0.0
    %1365 = vmatpush1.msra.mxu0 0.0
    %1366 = vmatprep.subr.mxu0 0.0
    %1367 = vmatpush1.msra.mxu0 0.0
    %1368 = vmatprep.subr.mxu0 0.0
    %1369 = vmatpush1.msra.mxu0 0.0
    %1370 = vmatprep.subr.mxu0 0.0
    %1371 = vmatpush1.msra.mxu0 0.0
    %1372 = vmatprep.subr.mxu0 0.0
    %1373 = vmatpush1.msra.mxu0 0.0
    %1374 = vmatprep.subr.mxu0 0.0
    %1375 = vmatpush1.msra.mxu0 0.0
    %1376 = vmatprep.subr.mxu0 0.0
    %1377 = vmatpush1.msra.mxu0 0.0
    %1378 = vmatprep.subr.mxu0 0.0
    %1379 = vmatpush1.msra.mxu0 0.0
    %1380 = vmatprep.subr.mxu0 0.0
    %1381 = vmatpush1.msra.mxu0 0.0
    %1382 = vmatprep.subr.mxu0 0.0
    %1383 = vmatpush1.msra.mxu0 0.0
    %1384 = vmatprep.subr.mxu0 0.0
    %1385 = vmatpush1.msra.mxu0 0.0
    %1386 = vmatprep.subr.mxu0 0.0
    %1387 = vmatpush1.msra.mxu0 0.0
    %1388 = vmatprep.mubr.f32.mxu0 0.0
    %v1389 = vand.u32 %v754, 4294901760
    %1390 = vmatmul.mubr.f32.gmra.mrb[0].mxu0 %v1389
    %v1391 = vpop.f32.mrb[0].mxu0
    %v1392 = vadd.f32 %v1301, %v1391
    %v1393 = vpop.f32.mrb[0].mxu0
    %v1394 = vadd.f32 %v1303, %v1393
    %1395 = vmatprep.mubr.f32.mxu0 0.0
    %v1396 = vand.u32 %v757, 4294901760
    %1397 = vmatmul.mubr.f32.gmra.mrb[0].mxu0 %v1396
    %v1398 = vpop.f32.mrb[0].mxu0
    %v1399 = vadd.f32 %v1308, %v1398
    %v1400 = vpop.f32.mrb[0].mxu0
    %v1401 = vadd.f32 %v1310, %v1400
    %1402 = vdwg.mxu0
    %1403 = vst [vmem:[#allocation10] sm:$0xff] %v739
    %1404 = vst [vmem:[#allocation10 + $0x8] sm:$0xff] %v741
    %1405 = vst [vmem:[#allocation12] sm:$0xff] %v1392
    %1406 = vst [vmem:[#allocation12 + $0x8] sm:$0xff] %v1394
    %v1407 = vadd.f32 %v746, %v1399
    %v1408 = vadd.f32 %v748, %v1401
    %v1409 = vld [vmem:[#allocation2] sm:$0x1]
    %1411 = vset.pattern.permute.xlu0 0
    %1412 = vperm.xlu0 %1411, %v1409
    %v1413 = vpop.permute.xlu0 %1412
    %v1415 = vlaneseq
    %v1416 = vshrl.u32 %v1415, 7
    %v1417 = vsub.s32 0, %v1416
    %v1418 = vrot.slane %v1413, %v1417
    %v1419 = vadd.f32 %v1407, %v1418
    %v1420 = vadd.f32 %v1408, %v1418
    %v1423 = vcombine.low %v1419, %v1420
    %v1425 = vunpack.c.l.s4 1966171168
    %v1426 = vunpack.c.0.s8 %v1425
    %v1427 = vlaneseq
    %v1428 = vshrl.u32 %v1427, 7
    %v1429 = vsub.s32 %v1426, %v1428
    %v1430 = vrot.slane %v1423, %v1429
    %v1432 = vunpack.c.l.s4 1966171168
    %v1433 = vunpack.c.0.s8 %v1432
    %v1434 = vlaneseq
    %v1435 = vshrl.u32 %v1434, 7
    %v1436 = vsub.s32 %v1433, %v1435
    %v1437 = vrot.slane %v1430, %v1436
    %v1439 = vlaneseq
    %vm1440 = vcmp.ge.s32.totalorder %v1439, 0
    %vm1441 = vcmp.lt.s32.totalorder %v1439, 256
    %vm1442 = vmand %vm1440, %vm1441
    %1443 = vst.msk [vmem:[#allocation9] sm:$0x3] %vm1442, %v1437
    // Predicated region
    $region30: #{tpu_custom_call.1} parent=1 // pred_check
      _
    $region31: #{tpu_custom_call.1} parent=1 // pred_check_branch
      %1445 = sbr.rel (0) target = $region33
    $region32: #{tpu_custom_call.1} parent=1 // pred_region
      %s1447 = ssub.s32 32, 32
      %1448 = vsyncadd [#allocation5], %s1447
      %s1450 = sshll.u32 [#allocation9], 4
      %s1451 = int_to_ptr.vmem [resolvable:$true] %s1450
      %1453 = dma.vmem_to_hbm [thread:$0]  %s1451, 32, %s4, [#allocation5]
    $region33: #{tpu_custom_call.1} parent=1 // pred_fallthru
      _
    // Predicated region
    $region34: #{tpu_custom_call.1} parent=1 // pred_check
      _
    $region35: #{tpu_custom_call.1} parent=1 // pred_check_branch
      %1455 = sbr.rel (0) target = $region37
    $region36: #{tpu_custom_call.1} parent=1 // pred_region
      %s1457 = ssub.s32 256, 256
      %1458 = vsyncadd [#allocation11], %s1457
      %s1460 = sshll.u32 [#allocation10], 4
      %s1461 = int_to_ptr.vmem [resolvable:$true] %s1460
      %1463 = dma.vmem_to_hbm [thread:$0]  %s1461, 256, %s5, [#allocation11]
    $region37: #{tpu_custom_call.1} parent=1 // pred_fallthru
      _
    // Predicated region
    $region38: #{tpu_custom_call.1} parent=1 // pred_check
      _
    $region39: #{tpu_custom_call.1} parent=1 // pred_check_branch
      %1465 = sbr.rel (0) target = $region41
    $region40: #{tpu_custom_call.1} parent=1 // pred_region
      %s1467 = ssub.s32 256, 256
      %1468 = vsyncadd [#allocation11], %s1467
      %s1470 = sshll.u32 [#allocation12], 4
      %s1471 = int_to_ptr.vmem [resolvable:$true] %s1470
      %1473 = dma.vmem_to_hbm [thread:$0]  %s1471, 256, %s6, [#allocation11]
    $region41: #{tpu_custom_call.1} parent=1 // pred_fallthru
      _
    // Predicated region
    $region42: #{tpu_custom_call.1} parent=1 // pred_check
      _
    $region43: #{tpu_custom_call.1} parent=1 // pred_check_branch
      %1475 = sbr.rel (0) target = $region45
    $region44: #{tpu_custom_call.1} parent=1 // pred_region
      %1476 = dma.done [#allocation5], 32
    $region45: #{tpu_custom_call.1} parent=1 // pred_fallthru
      _
    // Predicated region
    $region46: #{tpu_custom_call.1} parent=1 // pred_check
      _
    $region47: #{tpu_custom_call.1} parent=1 // pred_check_branch
      %1478 = sbr.rel (0) target = $region49
    $region48: #{tpu_custom_call.1} parent=1 // pred_region
      %1479 = dma.done [#allocation11], 256
    $region49: #{tpu_custom_call.1} parent=1 // pred_fallthru
      _
    // Predicated region
    $region50: #{tpu_custom_call.1} parent=1 // pred_check
      _
    $region51: #{tpu_custom_call.1} parent=1 // pred_check_branch
      %1481 = sbr.rel (0) target = $region53
    $region52: #{tpu_custom_call.1} parent=1 // pred_region
      %1482 = dma.done [#allocation11], 256
    $region53: #{tpu_custom_call.1} parent=1 // pred_fallthru
      _
    %1483 = vsyncpa [#allocation4], 1
    %1484 = vsyncpa [#allocation7], 1
    %1485 = vsyncpa [#allocation5], 1
    %1486 = vsyncpa [#allocation11], 1

// kernel: tpu_custom_call.1
$region0: #{tpu_custom_call.1}
  #allocation0 [shape = 'u32[]', space=smem, size = 0x4, offset = 0x4, fixed_abs, tag = 'smem constant byte address 0x4 - core index']
  #allocation1 [shape = 'u32[144,128]{1,0:T(1,128)}', space=vmem, size = 0x12000, scoped, tag = 'internal scratch']
  #allocation2 [shape = 'f32[1,1]{1,0:T(1,128)S(1)}', space=vmem, size = 0x200, scoped, tag = 'scoped memory for tpu_custom_call.1']
  %s0 = inlined_call_operand.hbm [shape: s32[2,256], index: 0, kind: input, shape index: {}]
  %s1 = inlined_call_operand.hbm [shape: f32[9,32], index: 1, kind: input, shape index: {}]
  %s2 = inlined_call_operand.hbm [shape: f32[9,48], index: 2, kind: input, shape index: {}]
  %s3 = inlined_call_operand.<no memory space> [shape: f32[1,1], index: 3, kind: input, shape index: {}]
  %s4 = inlined_call_operand.hbm [shape: f32[1,256], index: 4, kind: output, shape index: {0}]
  %s5 = inlined_call_operand.hbm [shape: f32[8,256], index: 5, kind: output, shape index: {1}]
  %s6 = inlined_call_operand.hbm [shape: f32[8,256], index: 6, kind: output, shape index: {2}]
  %7 = xla_tuple %s4, %s5, %s6
  %s8 = sld [smem:[#allocation0]]
  $region54: #{tpu_custom_call.1} parent=0
    _
  %s10 = ssub.s32 1, %s8
  %s11 = scalar_select 0, %s10, %s8
  %v12 = vstv %s3
  %13 = vst [vmem:[#allocation2] sm:$0x1] %v12
  $region1: #{tpu_custom_call.1} parent=0
    #allocation3 [shape = 'u8[2048]{0}', space=vmem, size = 0x800, scoped, tag = 'input window, operand 0, single buffered']
    #allocation4 [shape = 's32[1]{0}', space=sflag, size = 0x4, scoped, tag = 'scoped memory for tpu_custom_call.1']
    #allocation5 [shape = 's32[1]{0}', space=sflag, size = 0x4, scoped, tag = 'scoped memory for tpu_custom_call.1']
    #allocation6 [shape = 'u8[8192]{0}', space=vmem, size = 0x2000, scoped, tag = 'input window, operand 1, single buffered']
    #allocation7 [shape = 's32[1]{0}', space=sflag, size = 0x4, scoped, tag = 'scoped memory for tpu_custom_call.1']
    #allocation8 [shape = 'u8[8192]{0}', space=vmem, size = 0x2000, scoped, tag = 'input window, operand 2, single buffered']
    #allocation9 [shape = 'u8[1024]{0}', space=vmem, size = 0x400, scoped, tag = 'output window, operand 0, single buffered']
    #allocation10 [shape = 'u8[8192]{0}', space=vmem, size = 0x2000, scoped, tag = 'output window, operand 1, single buffered']
    #allocation11 [shape = 's32[1]{0}', space=sflag, size = 0x4, scoped, tag = 'scoped memory for tpu_custom_call.1']
    #allocation12 [shape = 'u8[8192]{0}', space=vmem, size = 0x2000, scoped, tag = 'output window, operand 2, single buffered']
    %14 = vsyncpa [#allocation4], 0
    %15 = vsyncpa [#allocation7], 0
    %16 = vsyncpa [#allocation5], 0
    %17 = vsyncpa [#allocation11], 0
    // Predicated region
    $region2: #{tpu_custom_call.1} parent=1 // pred_check
      _
    $region3: #{tpu_custom_call.1} parent=1 // pred_check_branch
      %19 = sbr.rel (0) target = $region5
    $region4: #{tpu_custom_call.1} parent=1 // pred_region
      %s21 = ssub.s32 64, 64
      %22 = vsyncadd [#allocation4], %s21
      %s24 = sshll.u32 [#allocation3], 4
      %s25 = int_to_ptr.vmem [resolvable:$true] %s24
      %27 = dma.hbm_to_vmem [thread:$0]  %s0, 64, %s25, [#allocation4]
    $region5: #{tpu_custom_call.1} parent=1 // pred_fallthru
      _
    // Predicated region
    $region6: #{tpu_custom_call.1} parent=1 // pred_check
      _
    $region7: #{tpu_custom_call.1} parent=1 // pred_check_branch
      %29 = sbr.rel (0) target = $region9
    $region8: #{tpu_custom_call.1} parent=1 // pred_region
      %s31 = ssub.s32 256, 256
      %32 = vsyncadd [#allocation7], %s31
      %s33 = sshll.u32 [#allocation6], 4
      %s34 = int_to_ptr.vmem [resolvable:$true] %s33
      %39 = dma.hbm_to_vmem [thread:$0]  %s1, 256, %s34, [#allocation7], 128, 128, 8
    $region9: #{tpu_custom_call.1} parent=1 // pred_fallthru
      _
    // Predicated region
    $region10: #{tpu_custom_call.1} parent=1 // pred_check
      _
    $region11: #{tpu_custom_call.1} parent=1 // pred_check_branch
      %41 = sbr.rel (0) target = $region13
    $region12: #{tpu_custom_call.1} parent=1 // pred_region
      %s43 = ssub.s32 256, 256
      %44 = vsyncadd [#allocation7], %s43
      %s45 = sshll.u32 [#allocation8], 4
      %s46 = int_to_ptr.vmem [resolvable:$true] %s45
      %51 = dma.hbm_to_vmem [thread:$0]  %s2, 256, %s46, [#allocation7], 128, 128, 8
    $region13: #{tpu_custom_call.1} parent=1 // pred_fallthru
      _
    // Predicated region
    $region14: #{tpu_custom_call.1} parent=1 // pred_check
      _
    $region15: #{tpu_custom_call.1} parent=1 // pred_check_branch
      %53 = sbr.rel (0) target = $region17
    $region16: #{tpu_custom_call.1} parent=1 // pred_region
      _
    $region17: #{tpu_custom_call.1} parent=1 // pred_fallthru
      _
    // Predicated region
    $region18: #{tpu_custom_call.1} parent=1 // pred_check
      _
    $region19: #{tpu_custom_call.1} parent=1 // pred_check_branch
      %55 = sbr.rel (0) target = $region21
    $region20: #{tpu_custom_call.1} parent=1 // pred_region
      %56 = dma.done [#allocation4], 64
    $region21: #{tpu_custom_call.1} parent=1 // pred_fallthru
      _
    // Predicated region
    $region22: #{tpu_custom_call.1} parent=1 // pred_check
      _
    $region23: #{tpu_custom_call.1} parent=1 // pred_check_branch
      %58 = sbr.rel (0) target = $region25
    $region24: #{tpu_custom_call.1} parent=1 // pred_region
      %59 = dma.done [#allocation7], 256
    $region25: #{tpu_custom_call.1} parent=1 // pred_fallthru
      _
    // Predicated region
    $region26: #{tpu_custom_call.1} parent=1 // pred_check
      _
    $region27: #{tpu_custom_call.1} parent=1 // pred_check_branch
      %61 = sbr.rel (0) target = $region29
    $region28: #{tpu_custom_call.1} parent=1 // pred_region
      %62 = dma.done [#allocation7], 256
    $region29: #{tpu_custom_call.1} parent=1 // pred_fallthru
      _
    %v63 = vld [vmem:[#allocation3] ss:$2 sm:$0x3]
    %s64 = scalar_lea.vmem [#allocation3], 1
    %v65 = vld [vmem:[%s64] ss:$2 sm:$0x3]
    %v66 = vlaneseq
    %v67 = vshrl.u32 %v66, 7
    %v68 = vadd.s32 %v67, 8
    %v69 = vadd.s32 %v67, 16
    %v70 = vadd.s32 %v67, 24
    %v71 = vlaneseq
    %v72 = vshrl.u32 %v71, 7
    %v73 = vsub.s32 0, %v72
    %v74 = vrot.slane %v63, %v73
    %v75 = vlaneseq
    %v76 = vshrl.u32 %v75, 7
    %v77 = vsub.s32 1, %v76
    %v78 = vrot.slane %v63, %v77
    %vm79 = vcmp.eq.s32.totalorder %v67, %v74
    %vm80 = vcmp.eq.s32.totalorder %v67, %v78
    %vm81 = vcmp.eq.s32.totalorder %v68, %v74
    %vm82 = vcmp.eq.s32.totalorder %v68, %v78
    %vm83 = vcmp.eq.s32.totalorder %v69, %v74
    %vm84 = vcmp.eq.s32.totalorder %v69, %v78
    %vm85 = vcmp.eq.s32.totalorder %v70, %v74
    %vm86 = vcmp.eq.s32.totalorder %v70, %v78
    %v87 = vsel %vm79, 1, 0
    %v88 = vsel %vm80, 1, 0
    %v89 = vsel %vm81, 1, 0
    %v90 = vsel %vm82, 1, 0
    %v91 = vsel %vm83, 1, 0
    %v92 = vsel %vm84, 1, 0
    %v93 = vsel %vm85, 1, 0
    %v94 = vsel %vm86, 1, 0
    %v95 = vcvt.s32.f32 %v87
    %v96 = vcvt.s32.f32 %v88
    %v97 = vcvt.s32.f32 %v89
    %v98 = vcvt.s32.f32 %v90
    %v99 = vcvt.s32.f32 %v91
    %v100 = vcvt.s32.f32 %v92
    %v101 = vcvt.s32.f32 %v93
    %v102 = vcvt.s32.f32 %v94
    %v103 = vadd.s32 %v67, 32
    %v104 = vadd.s32 %v67, 40
    %v105 = vlaneseq
    %v106 = vshrl.u32 %v105, 7
    %v107 = vsub.s32 0, %v106
    %v108 = vrot.slane %v65, %v107
    %v109 = vlaneseq
    %v110 = vshrl.u32 %v109, 7
    %v111 = vsub.s32 1, %v110
    %v112 = vrot.slane %v65, %v111
    %vm113 = vcmp.eq.s32.totalorder %v67, %v108
    %vm114 = vcmp.eq.s32.totalorder %v67, %v112
    %vm115 = vcmp.eq.s32.totalorder %v68, %v108
    %vm116 = vcmp.eq.s32.totalorder %v68, %v112
    %vm117 = vcmp.eq.s32.totalorder %v69, %v108
    %vm118 = vcmp.eq.s32.totalorder %v69, %v112
    %vm119 = vcmp.eq.s32.totalorder %v70, %v108
    %vm120 = vcmp.eq.s32.totalorder %v70, %v112
    %vm121 = vcmp.eq.s32.totalorder %v103, %v108
    %vm122 = vcmp.eq.s32.totalorder %v103, %v112
    %vm123 = vcmp.eq.s32.totalorder %v104, %v108
    %vm124 = vcmp.eq.s32.totalorder %v104, %v112
    %v125 = vsel %vm113, 1, 0
    %v126 = vsel %vm114, 1, 0
    %v127 = vsel %vm115, 1, 0
    %v128 = vsel %vm116, 1, 0
    %v129 = vsel %vm117, 1, 0
    %v130 = vsel %vm118, 1, 0
    %v131 = vsel %vm119, 1, 0
    %v132 = vsel %vm120, 1, 0
    %v133 = vsel %vm121, 1, 0
    %v134 = vsel %vm122, 1, 0
    %v135 = vsel %vm123, 1, 0
    %v136 = vsel %vm124, 1, 0
    %v137 = vcvt.s32.f32 %v125
    %v138 = vcvt.s32.f32 %v126
    %v139 = vcvt.s32.f32 %v127
    %v140 = vcvt.s32.f32 %v128
    %v141 = vcvt.s32.f32 %v129
    %v142 = vcvt.s32.f32 %v130
    %v143 = vcvt.s32.f32 %v131
    %v144 = vcvt.s32.f32 %v132
    %v145 = vcvt.s32.f32 %v133
    %v146 = vcvt.s32.f32 %v134
    %v147 = vcvt.s32.f32 %v135
    %v148 = vcvt.s32.f32 %v136
    %v149 = vld [vmem:[#allocation6] sm:$0xff]
    %v150 = vld [vmem:[#allocation6 + $0x8] sm:$0x1]
    %vm151 = vcmask 261120
    %v153 = vsel %vm151, %v149, 0
    %v156 = vsel %vm151, %v150, 0
    %158 = vmatprep.subr.mxu0 %v96
    %159 = vmatpush1.msra.mxu0 %v95
    %160 = vmatprep.subr.mxu0 %v98
    %161 = vmatpush1.msra.mxu0 %v97
    %162 = vmatprep.subr.mxu0 %v100
    %163 = vmatpush1.msra.mxu0 %v99
    %164 = vmatprep.subr.mxu0 %v102
    %165 = vmatpush1.msra.mxu0 %v101
    %166 = vmatprep.subr.mxu0 0.0
    %167 = vmatpush1.msra.mxu0 0.0
    %168 = vmatprep.subr.mxu0 0.0
    %169 = vmatpush1.msra.mxu0 0.0
    %170 = vmatprep.subr.mxu0 0.0
    %171 = vmatpush1.msra.mxu0 0.0
    %172 = vmatprep.subr.mxu0 0.0
    %173 = vmatpush1.msra.mxu0 0.0
    %174 = vmatprep.subr.mxu0 0.0
    %175 = vmatpush1.msra.mxu0 0.0
    %176 = vmatprep.subr.mxu0 0.0
    %177 = vmatpush1.msra.mxu0 0.0
    %178 = vmatprep.subr.mxu0 0.0
    %179 = vmatpush1.msra.mxu0 0.0
    %180 = vmatprep.subr.mxu0 0.0
    %181 = vmatpush1.msra.mxu0 0.0
    %182 = vmatprep.subr.mxu0 0.0
    %183 = vmatpush1.msra.mxu0 0.0
    %184 = vmatprep.subr.mxu0 0.0
    %185 = vmatpush1.msra.mxu0 0.0
    %186 = vmatprep.subr.mxu0 0.0
    %187 = vmatpush1.msra.mxu0 0.0
    %188 = vmatprep.subr.mxu0 0.0
    %189 = vmatpush1.msra.mxu0 0.0
    %190 = vmatprep.subr.mxu0 0.0
    %191 = vmatpush1.msra.mxu0 0.0
    %192 = vmatprep.subr.mxu0 0.0
    %193 = vmatpush1.msra.mxu0 0.0
    %194 = vmatprep.subr.mxu0 0.0
    %195 = vmatpush1.msra.mxu0 0.0
    %196 = vmatprep.subr.mxu0 0.0
    %197 = vmatpush1.msra.mxu0 0.0
    %198 = vmatprep.subr.mxu0 0.0
    %199 = vmatpush1.msra.mxu0 0.0
    %200 = vmatprep.subr.mxu0 0.0
    %201 = vmatpush1.msra.mxu0 0.0
    %202 = vmatprep.subr.mxu0 0.0
    %203 = vmatpush1.msra.mxu0 0.0
    %204 = vmatprep.subr.mxu0 0.0
    %205 = vmatpush1.msra.mxu0 0.0
    %206 = vmatprep.subr.mxu0 0.0
    %207 = vmatpush1.msra.mxu0 0.0
    %208 = vmatprep.subr.mxu0 0.0
    %209 = vmatpush1.msra.mxu0 0.0
    %210 = vmatprep.subr.mxu0 0.0
    %211 = vmatpush1.msra.mxu0 0.0
    %212 = vmatprep.subr.mxu0 0.0
    %213 = vmatpush1.msra.mxu0 0.0
    %214 = vmatprep.subr.mxu0 0.0
    %215 = vmatpush1.msra.mxu0 0.0
    %216 = vmatprep.subr.mxu0 0.0
    %217 = vmatpush1.msra.mxu0 0.0
    %218 = vmatprep.subr.mxu0 0.0
    %219 = vmatpush1.msra.mxu0 0.0
    %220 = vmatprep.subr.mxu0 0.0
    %221 = vmatpush1.msra.mxu0 0.0
    %222 = vmatprep.mubr.f32.mxu0 0.0
    %223 = vmatmul.mubr.f32.gmra.mrb[0].mxu0 %v153
    %v224 = vpop.f32.mrb[0].mxu0
    %v225 = vadd.f32 0.0, %v224
    %v226 = vpop.f32.mrb[0].mxu0
    %v227 = vadd.f32 0.0, %v226
    %228 = vmatprep.mubr.f32.mxu0 0.0
    %229 = vmatmul.mubr.f32.gmra.mrb[0].mxu0 %v156
    %v230 = vpop.f32.mrb[0].mxu0
    %v231 = vadd.f32 0.0, %v230
    %v232 = vpop.f32.mrb[0].mxu0
    %v233 = vadd.f32 0.0, %v232
    %234 = vdwg.mxu0
    %v235 = vld [vmem:[#allocation8] sm:$0xff]
    %v236 = vld [vmem:[#allocation8 + $0x8] sm:$0x1]
    %vm237 = vcmask 392192
    %v239 = vsel %vm237, %v235, 0
    %v242 = vsel %vm237, %v236, 0
    %244 = vmatprep.subr.mxu0 %v138
    %245 = vmatpush1.msra.mxu0 %v137
    %246 = vmatprep.subr.mxu0 %v140
    %247 = vmatpush1.msra.mxu0 %v139
    %248 = vmatprep.subr.mxu0 %v142
    %249 = vmatpush1.msra.mxu0 %v141
    %250 = vmatprep.subr.mxu0 %v144
    %251 = vmatpush1.msra.mxu0 %v143
    %252 = vmatprep.subr.mxu0 %v146
    %253 = vmatpush1.msra.mxu0 %v145
    %254 = vmatprep.subr.mxu0 %v148
    %255 = vmatpush1.msra.mxu0 %v147
    %256 = vmatprep.subr.mxu0 0.0
    %257 = vmatpush1.msra.mxu0 0.0
    %258 = vmatprep.subr.mxu0 0.0
    %259 = vmatpush1.msra.mxu0 0.0
    %260 = vmatprep.subr.mxu0 0.0
    %261 = vmatpush1.msra.mxu0 0.0
    %262 = vmatprep.subr.mxu0 0.0
    %263 = vmatpush1.msra.mxu0 0.0
    %264 = vmatprep.subr.mxu0 0.0
    %265 = vmatpush1.msra.mxu0 0.0
    %266 = vmatprep.subr.mxu0 0.0
    %267 = vmatpush1.msra.mxu0 0.0
    %268 = vmatprep.subr.mxu0 0.0
    %269 = vmatpush1.msra.mxu0 0.0
    %270 = vmatprep.subr.mxu0 0.0
    %271 = vmatpush1.msra.mxu0 0.0
    %272 = vmatprep.subr.mxu0 0.0
    %273 = vmatpush1.msra.mxu0 0.0
    %274 = vmatprep.subr.mxu0 0.0
    %275 = vmatpush1.msra.mxu0 0.0
    %276 = vmatprep.subr.mxu0 0.0
    %277 = vmatpush1.msra.mxu0 0.0
    %278 = vmatprep.subr.mxu0 0.0
    %279 = vmatpush1.msra.mxu0 0.0
    %280 = vmatprep.subr.mxu0 0.0
    %281 = vmatpush1.msra.mxu0 0.0
    %282 = vmatprep.subr.mxu0 0.0
    %283 = vmatpush1.msra.mxu0 0.0
    %284 = vmatprep.subr.mxu0 0.0
    %285 = vmatpush1.msra.mxu0 0.0
    %286 = vmatprep.subr.mxu0 0.0
    %287 = vmatpush1.msra.mxu0 0.0
    %288 = vmatprep.subr.mxu0 0.0
    %289 = vmatpush1.msra.mxu0 0.0
    %290 = vmatprep.subr.mxu0 0.0
    %291 = vmatpush1.msra.mxu0 0.0
    %292 = vmatprep.subr.mxu0 0.0
    %293 = vmatpush1.msra.mxu0 0.0
    %294 = vmatprep.subr.mxu0 0.0
    %295 = vmatpush1.msra.mxu0 0.0
    %296 = vmatprep.subr.mxu0 0.0
    %297 = vmatpush1.msra.mxu0 0.0
    %298 = vmatprep.subr.mxu0 0.0
    %299 = vmatpush1.msra.mxu0 0.0
    %300 = vmatprep.subr.mxu0 0.0
    %301 = vmatpush1.msra.mxu0 0.0
    %302 = vmatprep.subr.mxu0 0.0
    %303 = vmatpush1.msra.mxu0 0.0
    %304 = vmatprep.subr.mxu0 0.0
    %305 = vmatpush1.msra.mxu0 0.0
    %306 = vmatprep.subr.mxu0 0.0
    %307 = vmatpush1.msra.mxu0 0.0
    %308 = vmatprep.mubr.f32.mxu0 0.0
    %309 = vmatmul.mubr.f32.gmra.mrb[0].mxu0 %v239
    %v310 = vpop.f32.mrb[0].mxu0
    %v311 = vadd.f32 0.0, %v310
    %v312 = vpop.f32.mrb[0].mxu0
    %v313 = vadd.f32 0.0, %v312
    %314 = vmatprep.mubr.f32.mxu0 0.0
    %315 = vmatmul.mubr.f32.gmra.mrb[0].mxu0 %v242
    %v316 = vpop.f32.mrb[0].mxu0
    %v317 = vadd.f32 0.0, %v316
    %v318 = vpop.f32.mrb[0].mxu0
    %v319 = vadd.f32 0.0, %v318
    %320 = vdwg.mxu0
    %321 = vst [vmem:[#allocation10] sm:$0xff] %v225
    %322 = vst [vmem:[#allocation10 + $0x8] sm:$0xff] %v227
    %323 = vst [vmem:[#allocation12] sm:$0xff] %v311
    %324 = vst [vmem:[#allocation12 + $0x8] sm:$0xff] %v313
    %v325 = vadd.f32 %v231, %v317
    %v326 = vadd.f32 %v233, %v319
    %v327 = vld [vmem:[#allocation2] sm:$0x1]
    %329 = vset.pattern.permute.xlu0 0
    %330 = vperm.xlu0 %329, %v327
    %v331 = vpop.permute.xlu0 %330
    %v333 = vlaneseq
    %v334 = vshrl.u32 %v333, 7
    %v335 = vsub.s32 0, %v334
    %v336 = vrot.slane %v331, %v335
    %v337 = vadd.f32 %v325, %v336
    %v338 = vadd.f32 %v326, %v336
    %v341 = vcombine.low %v337, %v338
    %v343 = vunpack.c.l.s4 1966171168
    %v344 = vunpack.c.0.s8 %v343
    %v345 = vlaneseq
    %v346 = vshrl.u32 %v345, 7
    %v347 = vsub.s32 %v344, %v346
    %v348 = vrot.slane %v341, %v347
    %v350 = vunpack.c.l.s4 1966171168
    %v351 = vunpack.c.0.s8 %v350
    %v352 = vlaneseq
    %v353 = vshrl.u32 %v352, 7
    %v354 = vsub.s32 %v351, %v353
    %v355 = vrot.slane %v348, %v354
    %v357 = vlaneseq
    %vm358 = vcmp.ge.s32.totalorder %v357, 0
    %vm359 = vcmp.lt.s32.totalorder %v357, 256
    %vm360 = vmand %vm358, %vm359
    %361 = vst.msk [vmem:[#allocation9] sm:$0x3] %vm360, %v355
    // Predicated region
    $region30: #{tpu_custom_call.1} parent=1 // pred_check
      _
    $region31: #{tpu_custom_call.1} parent=1 // pred_check_branch
      %363 = sbr.rel (0) target = $region33
    $region32: #{tpu_custom_call.1} parent=1 // pred_region
      %s365 = ssub.s32 32, 32
      %366 = vsyncadd [#allocation5], %s365
      %s368 = sshll.u32 [#allocation9], 4
      %s369 = int_to_ptr.vmem [resolvable:$true] %s368
      %371 = dma.vmem_to_hbm [thread:$0]  %s369, 32, %s4, [#allocation5]
    $region33: #{tpu_custom_call.1} parent=1 // pred_fallthru
      _
    // Predicated region
    $region34: #{tpu_custom_call.1} parent=1 // pred_check
      _
    $region35: #{tpu_custom_call.1} parent=1 // pred_check_branch
      %373 = sbr.rel (0) target = $region37
    $region36: #{tpu_custom_call.1} parent=1 // pred_region
      %s375 = ssub.s32 256, 256
      %376 = vsyncadd [#allocation11], %s375
      %s378 = sshll.u32 [#allocation10], 4
      %s379 = int_to_ptr.vmem [resolvable:$true] %s378
      %381 = dma.vmem_to_hbm [thread:$0]  %s379, 256, %s5, [#allocation11]
    $region37: #{tpu_custom_call.1} parent=1 // pred_fallthru
      _
    // Predicated region
    $region38: #{tpu_custom_call.1} parent=1 // pred_check
      _
    $region39: #{tpu_custom_call.1} parent=1 // pred_check_branch
      %383 = sbr.rel (0) target = $region41
    $region40: #{tpu_custom_call.1} parent=1 // pred_region
      %s385 = ssub.s32 256, 256
      %386 = vsyncadd [#allocation11], %s385
      %s388 = sshll.u32 [#allocation12], 4
      %s389 = int_to_ptr.vmem [resolvable:$true] %s388
      %391 = dma.vmem_to_hbm [thread:$0]  %s389, 256, %s6, [#allocation11]
    $region41: #{tpu_custom_call.1} parent=1 // pred_fallthru
      _
    // Predicated region
    $region42: #{tpu_custom_call.1} parent=1 // pred_check
      _
    $region43: #{tpu_custom_call.1} parent=1 // pred_check_branch
      %393 = sbr.rel (0) target = $region45
    $region44: #{tpu_custom_call.1} parent=1 // pred_region
      %394 = dma.done [#allocation5], 32
    $region45: #{tpu_custom_call.1} parent=1 // pred_fallthru
      _
    // Predicated region
    $region46: #{tpu_custom_call.1} parent=1 // pred_check
      _
    $region47: #{tpu_custom_call.1} parent=1 // pred_check_branch
      %396 = sbr.rel (0) target = $region49
    $region48: #{tpu_custom_call.1} parent=1 // pred_region
      %397 = dma.done [#allocation11], 256
    $region49: #{tpu_custom_call.1} parent=1 // pred_fallthru
      _
    // Predicated region
    $region50: #{tpu_custom_call.1} parent=1 // pred_check
      _
    $region51: #{tpu_custom_call.1} parent=1 // pred_check_branch
      %399 = sbr.rel (0) target = $region53
    $region52: #{tpu_custom_call.1} parent=1 // pred_region
      %400 = dma.done [#allocation11], 256
    $region53: #{tpu_custom_call.1} parent=1 // pred_fallthru
      _
    %401 = vsyncpa [#allocation4], 1
    %402 = vsyncpa [#allocation7], 1
    %403 = vsyncpa [#allocation5], 1
    %404 = vsyncpa [#allocation11], 1

</llo_original>
